<compile_context>
chip_gen: v7x
topology: tpu7x:2x2x1
jax: 0.10.0
libtpu: 0.0.40
codegen_flags: <defaults>
</compile_context>

<pallas_src>
import jax
import jax.numpy as jnp
from jax.experimental import pallas as pl
from jax.experimental.pallas import tpu as pltpu


# ---------------------------------------------------------------------------
# Fused kernel
# ---------------------------------------------------------------------------
def _conv3x3_relu(x, w9, b):
    """Valid 3x3 conv (stride 1) + bias + ReLU as ONE im2col matmul.

    x : (Bb, H, W, Cin) f32
    w9: (9*Cin, Cout) f32, rows in (kh, kw, cin) order
    b : (1, Cout) f32
    -> (Bb, H-2, W-2, Cout) f32
    """
    Bb, H, W, Cin = x.shape
    Ho, Wo = H - 2, W - 2
    Cout = w9.shape[-1]
    # im2col: concatenate the 9 shifted views along the channel (lane) axis so
    # the conv is one matmul with K = 9*Cin (27 for conv1, 288 for conv2).
    taps = [x[:, kh:kh + Ho, kw:kw + Wo, :]
            for kh in range(3) for kw in range(3)]
    patches = jnp.concatenate(taps, axis=-1).reshape(Bb * Ho * Wo, 9 * Cin)
    acc = jnp.dot(patches, w9, preferred_element_type=jnp.float32) + b
    return jnp.maximum(acc, 0.0).reshape(Bb, Ho, Wo, Cout)


def fused_forward_kernel(x_ref, w1_ref, b1_ref, w2_ref, b2_ref,
                         fw1_ref, fb1_ref, fw2_ref, fb2_ref, o_ref):
    """Entire forward for one block of Bb images; all activations stay in VMEM."""
    x = x_ref[...].astype(jnp.float32)                     # (Bb, H, W, Cin)
    Bb = x.shape[0]

    y = _conv3x3_relu(x, w1_ref[...], b1_ref[...])         # conv1 + relu
    y = _conv3x3_relu(y, w2_ref[...], b2_ref[...])         # conv2 + relu

    # 2x2 max pool, stride 2 (floor division, matching F.max_pool2d).
    # Channel dim C stays on lanes throughout; reshapes only touch major dims.
    _, Hc, Wc, C = y.shape
    Hp, Wp = Hc // 2, Wc // 2
    y = y[:, :2 * Hp, :2 * Wp, :]
    y = y.reshape(Bb, Hp, 2, 2 * Wp, C).max(axis=2)        # pool along H
    y = y.reshape(Bb, Hp, Wp, 2, C).max(axis=3)            # pool along W

    # dropout1 / dropout2: identity at inference.
    # TODO(synk): training-mode dropout RNG masking not implemented.

    # Flatten in (H, W, C) order via lane concatenation (no minor-dim reshape,
    # no activation transpose). fw1's rows were permuted once at param-prep
    # time from torch's (C, H, W) flatten order, so this exactly matches
    # torch.flatten(x, 1) on an NCHW tensor.
    flat = jnp.concatenate(
        [y[:, i, j, :] for i in range(Hp) for j in range(Wp)], axis=-1)

    h = jnp.dot(flat, fw1_ref[...], preferred_element_type=jnp.float32)
    h = jnp.maximum(h + fb1_ref[...], 0.0)                 # fc1 + relu
    logits = jnp.dot(h, fw2_ref[...], preferred_element_type=jnp.float32)
    logits = logits + fb2_ref[...]                         # fc2

    m = jnp.max(logits, axis=-1, keepdims=True)            # log_softmax
    lse = m + jnp.log(jnp.sum(jnp.exp(logits - m), axis=-1, keepdims=True))
    o_ref[...] = (logits - lse)[:, None, :]


# ---------------------------------------------------------------------------
# Wrapper (single pallas_call for the whole forward)
# ---------------------------------------------------------------------------
def _pick_batch_block(B, max_block=16):
    """Largest divisor of B <= max_block, preferring >= 2 grid steps so the
    parallel grid axis can be sharded across TensorCores (v7x megacore)."""
    divisors = [d for d in range(1, min(B, max_block) + 1) if B % d == 0]
    multi = [d for d in divisors if B // d >= 2]
    return max(multi) if multi else max(divisors)


def nn_classifier_forward(x_nchw, kparams, *, batch_block=None):
    """x_nchw: (B, 3, H, W) float32 (PyTorch layout). kparams: see prepare_params."""
    B, Cin, H, W = x_nchw.shape
    x = jnp.transpose(x_nchw, (0, 2, 3, 1)).astype(jnp.float32)   # NCHW -> NHWC

    w1, b1 = kparams["w1"], kparams["b1"]
    w2, b2 = kparams["w2"], kparams["b2"]
    fw1, fb1 = kparams["fw1"], kparams["fb1"]
    fw2, fb2 = kparams["fw2"], kparams["fb2"]

    C1, C2 = w1.shape[-1], w2.shape[-1]
    N1, N2 = fw1.shape[-1], fw2.shape[-1]
    Hp, Wp = (H - 4) // 2, (W - 4) // 2
    assert fw1.shape[0] == Hp * Wp * C2, "fc1 in_features mismatch with input size"

    Bblk = batch_block if batch_block is not None else _pick_batch_block(B)
    assert B % Bblk == 0

    # NOTE: at the reference 224x224 size (fc1 in_features = 774400) fw1 would
    # not fit VMEM untiled; it would need a K-tiled grid axis ("arbitrary") with
    # a VMEM accumulator and bf16 weights. At this demo size it fits easily.
    out = pl.pallas_call(
        fused_forward_kernel,
        out_shape=jax.ShapeDtypeStruct((B, 1, N2), jnp.float32),
        grid=(B // Bblk,),
        in_specs=[
            pl.BlockSpec((Bblk, H, W, Cin), lambda i: (i, 0, 0, 0)),
            pl.BlockSpec((9 * Cin, C1), lambda i: (0, 0)),
            pl.BlockSpec((1, C1), lambda i: (0, 0)),
            pl.BlockSpec((9 * C1, C2), lambda i: (0, 0)),
            pl.BlockSpec((1, C2), lambda i: (0, 0)),
            pl.BlockSpec((Hp * Wp * C2, N1), lambda i: (0, 0)),
            pl.BlockSpec((1, N1), lambda i: (0, 0)),
            pl.BlockSpec((N1, N2), lambda i: (0, 0)),
            pl.BlockSpec((1, N2), lambda i: (0, 0)),
        ],
        out_specs=pl.BlockSpec((Bblk, 1, N2), lambda i: (i, 0, 0)),
        compiler_params=pltpu.CompilerParams(
            dimension_semantics=("parallel",)),
    )(x, w1, b1, w2, b2, fw1, fb1, fw2, fb2)
    return out[:, 0, :]


# ---------------------------------------------------------------------------
# Parameters: PyTorch-style init + one-time conversion to kernel layout
# ---------------------------------------------------------------------------
def init_params(key, output_size, flatten_dim):
    """Uniform +-1/sqrt(fan_in) (PyTorch default style). Conv weights stored
    HWIO; fc1 weight stored (in_features, 128) with rows in torch's (C, H, W)
    flatten order. conv3 is unused in forward() and therefore skipped."""
    ks = jax.random.split(key, 8)

    def uni(k, shape, fan_in):
        bound = 1.0 / float(fan_in) ** 0.5
        return jax.random.uniform(k, shape, jnp.float32, -bound, bound)

    return dict(
        w1=uni(ks[0], (3, 3, 3, 32), 3 * 9),
        b1=uni(ks[1], (32,), 3 * 9),
        w2=uni(ks[2], (3, 3, 32, 64), 32 * 9),
        b2=uni(ks[3], (64,), 32 * 9),
        fw1=uni(ks[4], (flatten_dim, 128), flatten_dim),
        fb1=uni(ks[5], (128,), flatten_dim),
        fw2=uni(ks[6], (128, output_size), 128),
        fb2=uni(ks[7], (output_size,), 128),
    )


def prepare_params(params, *, pooled_h, pooled_w, c2=64):
    """One-time conversion to kernel layout (zero per-forward cost):
      * conv weights (3,3,Cin,Cout) -> (9*Cin, Cout) im2col form,
      * fc1 rows permuted from torch (C,H,W) flatten order to the kernel's
        (H,W,C) order (so the kernel never transposes the activation),
      * biases reshaped to (1, C) for lane broadcast.
    """
    n1 = params["fw1"].shape[-1]
    fw1_hwc = (params["fw1"]
               .reshape(c2, pooled_h, pooled_w, n1)
               .transpose(1, 2, 0, 3)
               .reshape(pooled_h * pooled_w * c2, n1))
    return dict(
        w1=params["w1"].reshape(-1, params["w1"].shape[-1]),
        b1=params["b1"].reshape(1, -1),
        w2=params["w2"].reshape(-1, params["w2"].shape[-1]),
        b2=params["b2"].reshape(1, -1),
        fw1=fw1_hwc,
        fb1=params["fb1"].reshape(1, -1),
        fw2=params["fw2"],
        fb2=params["fb2"].reshape(1, -1),
    )


# ---------------------------------------------------------------------------
# Pure-XLA reference (independent of the Pallas kernel) for correctness check
# ---------------------------------------------------------------------------
def ref_forward(x_nchw, params):
    hp = jax.lax.Precision.HIGHEST
    x = jnp.transpose(x_nchw, (0, 2, 3, 1)).astype(jnp.float32)

    def conv(z, w, b):
        y = jax.lax.conv_general_dilated(
            z, w, (1, 1), "VALID",
            dimension_numbers=("NHWC", "HWIO", "NHWC"), precision=hp)
        return jnp.maximum(y + b, 0.0)

    y = conv(x, params["w1"], params["b1"])
    y = conv(y, params["w2"], params["b2"])
    B, Hc, Wc, C = y.shape
    Hp, Wp = Hc // 2, Wc // 2
    y = y[:, :2 * Hp, :2 * Wp, :].reshape(B, Hp, 2, Wp, 2, C).max(axis=(2, 4))
    flat = jnp.transpose(y, (0, 3, 1, 2)).reshape(B, -1)   # torch (C,H,W) order
    h = jnp.maximum(jnp.dot(flat, params["fw1"], precision=hp) + params["fb1"], 0.0)
    logits = jnp.dot(h, params["fw2"], precision=hp) + params["fb2"]
    return jax.nn.log_softmax(logits, axis=-1)


if __name__ == "__main__":
    key = jax.random.PRNGKey(0)
    k_x, k_p = jax.random.split(key)

    # Small shapes consistent with the forward pass:
    # 12x12 input -> conv1 10x10 -> conv2 8x8 -> pool 4x4 -> flatten 64*4*4=1024
    B, C, H, W = 2, 3, 12, 12
    output_size = 10
    Hp, Wp = (H - 4) // 2, (W - 4) // 2
    flatten_dim = 64 * Hp * Wp

    x = jax.random.normal(k_x, (B, C, H, W), jnp.float32)
    params = init_params(k_p, output_size, flatten_dim)
    kparams = prepare_params(params, pooled_h=Hp, pooled_w=Wp, c2=64)

    fwd = jax.jit(nn_classifier_forward)
    out = jax.block_until_ready(fwd(x, kparams))

    assert out.shape == (B, output_size), out.shape
    # log_softmax rows should (approximately) sum to 1 after exp
    assert jnp.allclose(jnp.sum(jnp.exp(out), axis=-1), 1.0, atol=1e-4)

    # Cross-check against a pure-XLA reference of the same forward pass.
    ref = jax.block_until_ready(jax.jit(ref_forward)(x, params))
    assert jnp.allclose(out, ref, atol=2e-3, rtol=2e-3), (
        float(jnp.max(jnp.abs(out - ref))))

    print("KERNEL_OK")
</pallas_src>

<mosaic_0001>
module attributes {stable_mosaic.version = 11 : i64} {
  func.func @fused_forward_kernel(%arg0: i32, %arg1: memref<1x12x12x3xf32, #tpu.memory_space<vmem>>, %arg2: memref<27x32xf32, #tpu.memory_space<vmem>>, %arg3: memref<1x32xf32, #tpu.memory_space<vmem>>, %arg4: memref<288x64xf32, #tpu.memory_space<vmem>>, %arg5: memref<1x64xf32, #tpu.memory_space<vmem>>, %arg6: memref<1024x128xf32, #tpu.memory_space<vmem>>, %arg7: memref<1x128xf32, #tpu.memory_space<vmem>>, %arg8: memref<128x10xf32, #tpu.memory_space<vmem>>, %arg9: memref<1x10xf32, #tpu.memory_space<vmem>>, %arg10: memref<1x1x10xf32, #tpu.memory_space<vmem>>) attributes {dimension_semantics = [#tpu.dimension_semantics<parallel>], iteration_bounds = array<i64: 2>, scalar_prefetch = 0 : i64, scratch_operands = 0 : i64, tpu.core_type = #tpu.core_type<tc>, window_params = [{transform_indices = @transform_0, window_bounds = array<i64: 1, 12, 12, 3>}, {pipeline_mode = #tpu.pipeline_mode<synchronous>, transform_indices = @transform_1, window_bounds = array<i64: 27, 32>}, {pipeline_mode = #tpu.pipeline_mode<synchronous>, transform_indices = @transform_2, window_bounds = array<i64: 1, 32>}, {pipeline_mode = #tpu.pipeline_mode<synchronous>, transform_indices = @transform_3, window_bounds = array<i64: 288, 64>}, {pipeline_mode = #tpu.pipeline_mode<synchronous>, transform_indices = @transform_4, window_bounds = array<i64: 1, 64>}, {pipeline_mode = #tpu.pipeline_mode<synchronous>, transform_indices = @transform_5, window_bounds = array<i64: 1024, 128>}, {pipeline_mode = #tpu.pipeline_mode<synchronous>, transform_indices = @transform_6, window_bounds = array<i64: 1, 128>}, {pipeline_mode = #tpu.pipeline_mode<synchronous>, transform_indices = @transform_7, window_bounds = array<i64: 128, 10>}, {pipeline_mode = #tpu.pipeline_mode<synchronous>, transform_indices = @transform_8, window_bounds = array<i64: 1, 10>}, {transform_indices = @transform_9, window_bounds = array<i64: 1, 1, 10>}]} {
    %c0 = arith.constant 0 : index
    %c0_0 = arith.constant 0 : index
    %c0_1 = arith.constant 0 : index
    %c0_2 = arith.constant 0 : index
    %0 = vector.load %arg1[%c0, %c0_0, %c0_1, %c0_2] : memref<1x12x12x3xf32, #tpu.memory_space<vmem>>, vector<1x12x12x3xf32>
    %c0_3 = arith.constant 0 : index
    %c0_4 = arith.constant 0 : index
    %1 = vector.load %arg2[%c0_3, %c0_4] : memref<27x32xf32, #tpu.memory_space<vmem>>, vector<27x32xf32>
    %c0_5 = arith.constant 0 : index
    %c0_6 = arith.constant 0 : index
    %2 = vector.load %arg3[%c0_5, %c0_6] : memref<1x32xf32, #tpu.memory_space<vmem>>, vector<1x32xf32>
    %3 = vector.extract_strided_slice %0 {offsets = [0, 0, 0, 0], sizes = [1, 10, 10, 3], strides = [1, 1, 1, 1]} : vector<1x12x12x3xf32> to vector<1x10x10x3xf32>
    %4 = vector.extract_strided_slice %0 {offsets = [0, 0, 1, 0], sizes = [1, 10, 10, 3], strides = [1, 1, 1, 1]} : vector<1x12x12x3xf32> to vector<1x10x10x3xf32>
    %5 = vector.extract_strided_slice %0 {offsets = [0, 0, 2, 0], sizes = [1, 10, 10, 3], strides = [1, 1, 1, 1]} : vector<1x12x12x3xf32> to vector<1x10x10x3xf32>
    %6 = vector.extract_strided_slice %0 {offsets = [0, 1, 0, 0], sizes = [1, 10, 10, 3], strides = [1, 1, 1, 1]} : vector<1x12x12x3xf32> to vector<1x10x10x3xf32>
    %7 = vector.extract_strided_slice %0 {offsets = [0, 1, 1, 0], sizes = [1, 10, 10, 3], strides = [1, 1, 1, 1]} : vector<1x12x12x3xf32> to vector<1x10x10x3xf32>
    %8 = vector.extract_strided_slice %0 {offsets = [0, 1, 2, 0], sizes = [1, 10, 10, 3], strides = [1, 1, 1, 1]} : vector<1x12x12x3xf32> to vector<1x10x10x3xf32>
    %9 = vector.extract_strided_slice %0 {offsets = [0, 2, 0, 0], sizes = [1, 10, 10, 3], strides = [1, 1, 1, 1]} : vector<1x12x12x3xf32> to vector<1x10x10x3xf32>
    %10 = vector.extract_strided_slice %0 {offsets = [0, 2, 1, 0], sizes = [1, 10, 10, 3], strides = [1, 1, 1, 1]} : vector<1x12x12x3xf32> to vector<1x10x10x3xf32>
    %11 = vector.extract_strided_slice %0 {offsets = [0, 2, 2, 0], sizes = [1, 10, 10, 3], strides = [1, 1, 1, 1]} : vector<1x12x12x3xf32> to vector<1x10x10x3xf32>
    %12 = tpu.concatenate %3, %4, %5, %6, %7, %8, %9, %10, %11 in 3 : vector<1x10x10x3xf32>, vector<1x10x10x3xf32>, vector<1x10x10x3xf32>, vector<1x10x10x3xf32>, vector<1x10x10x3xf32>, vector<1x10x10x3xf32>, vector<1x10x10x3xf32>, vector<1x10x10x3xf32>, vector<1x10x10x3xf32> -> vector<1x10x10x27xf32>
    %13 = vector.shape_cast %12 : vector<1x10x10x27xf32> to vector<100x27xf32>
    %cst = arith.constant dense<0.000000e+00> : vector<100x32xf32>
    %14 = tpu.matmul %13, %1, %cst {dimension_numbers = #tpu.dot_dimension_numbers<[1], [0], [0], [1], [0, 0, 1, 1], [], []>} : vector<100x27xf32>, vector<27x32xf32>, vector<100x32xf32> -> vector<100x32xf32>
    %15 = vector.broadcast %2 : vector<1x32xf32> to vector<100x32xf32>
    %16 = arith.addf %14, %15 : vector<100x32xf32>
    %cst_7 = arith.constant 0.000000e+00 : f32
    %17 = vector.broadcast %cst_7 : f32 to vector<100x32xf32>
    %18 = arith.maximumf %16, %17 : vector<100x32xf32>
    %19 = vector.shape_cast %18 : vector<100x32xf32> to vector<1x10x10x32xf32>
    %c0_8 = arith.constant 0 : index
    %c0_9 = arith.constant 0 : index
    %20 = vector.load %arg4[%c0_8, %c0_9] : memref<288x64xf32, #tpu.memory_space<vmem>>, vector<288x64xf32>
    %c0_10 = arith.constant 0 : index
    %c0_11 = arith.constant 0 : index
    %21 = vector.load %arg5[%c0_10, %c0_11] : memref<1x64xf32, #tpu.memory_space<vmem>>, vector<1x64xf32>
    %22 = vector.extract_strided_slice %19 {offsets = [0, 0, 0, 0], sizes = [1, 8, 8, 32], strides = [1, 1, 1, 1]} : vector<1x10x10x32xf32> to vector<1x8x8x32xf32>
    %23 = vector.extract_strided_slice %19 {offsets = [0, 0, 1, 0], sizes = [1, 8, 8, 32], strides = [1, 1, 1, 1]} : vector<1x10x10x32xf32> to vector<1x8x8x32xf32>
    %24 = vector.extract_strided_slice %19 {offsets = [0, 0, 2, 0], sizes = [1, 8, 8, 32], strides = [1, 1, 1, 1]} : vector<1x10x10x32xf32> to vector<1x8x8x32xf32>
    %25 = vector.extract_strided_slice %19 {offsets = [0, 1, 0, 0], sizes = [1, 8, 8, 32], strides = [1, 1, 1, 1]} : vector<1x10x10x32xf32> to vector<1x8x8x32xf32>
    %26 = vector.extract_strided_slice %19 {offsets = [0, 1, 1, 0], sizes = [1, 8, 8, 32], strides = [1, 1, 1, 1]} : vector<1x10x10x32xf32> to vector<1x8x8x32xf32>
    %27 = vector.extract_strided_slice %19 {offsets = [0, 1, 2, 0], sizes = [1, 8, 8, 32], strides = [1, 1, 1, 1]} : vector<1x10x10x32xf32> to vector<1x8x8x32xf32>
    %28 = vector.extract_strided_slice %19 {offsets = [0, 2, 0, 0], sizes = [1, 8, 8, 32], strides = [1, 1, 1, 1]} : vector<1x10x10x32xf32> to vector<1x8x8x32xf32>
    %29 = vector.extract_strided_slice %19 {offsets = [0, 2, 1, 0], sizes = [1, 8, 8, 32], strides = [1, 1, 1, 1]} : vector<1x10x10x32xf32> to vector<1x8x8x32xf32>
    %30 = vector.extract_strided_slice %19 {offsets = [0, 2, 2, 0], sizes = [1, 8, 8, 32], strides = [1, 1, 1, 1]} : vector<1x10x10x32xf32> to vector<1x8x8x32xf32>
    %31 = tpu.concatenate %22, %23, %24, %25, %26, %27, %28, %29, %30 in 3 : vector<1x8x8x32xf32>, vector<1x8x8x32xf32>, vector<1x8x8x32xf32>, vector<1x8x8x32xf32>, vector<1x8x8x32xf32>, vector<1x8x8x32xf32>, vector<1x8x8x32xf32>, vector<1x8x8x32xf32>, vector<1x8x8x32xf32> -> vector<1x8x8x288xf32>
    %32 = vector.shape_cast %31 : vector<1x8x8x288xf32> to vector<64x288xf32>
    %cst_12 = arith.constant dense<0.000000e+00> : vector<64x64xf32>
    %33 = tpu.matmul %32, %20, %cst_12 {dimension_numbers = #tpu.dot_dimension_numbers<[1], [0], [0], [1], [0, 0, 1, 1], [], []>} : vector<64x288xf32>, vector<288x64xf32>, vector<64x64xf32> -> vector<64x64xf32>
    %34 = vector.broadcast %21 : vector<1x64xf32> to vector<64x64xf32>
    %35 = arith.addf %33, %34 : vector<64x64xf32>
    %cst_13 = arith.constant 0.000000e+00 : f32
    %36 = vector.broadcast %cst_13 : f32 to vector<64x64xf32>
    %37 = arith.maximumf %35, %36 : vector<64x64xf32>
    %38 = vector.shape_cast %37 : vector<64x64xf32> to vector<1x8x8x64xf32>
    %39 = vector.shape_cast %38 : vector<1x8x8x64xf32> to vector<1x4x2x8x64xf32>
    %cst_14 = arith.constant dense<0xFF800000> : vector<1x4x8x64xf32>
    %40 = vector.multi_reduction <maximumf>, %39, %cst_14 [2] : vector<1x4x2x8x64xf32> to vector<1x4x8x64xf32>
    %41 = vector.shape_cast %40 : vector<1x4x8x64xf32> to vector<1x4x4x2x64xf32>
    %cst_15 = arith.constant dense<0xFF800000> : vector<1x4x4x64xf32>
    %42 = vector.multi_reduction <maximumf>, %41, %cst_15 [3] : vector<1x4x4x2x64xf32> to vector<1x4x4x64xf32>
    %43 = vector.extract_strided_slice %42 {offsets = [0, 0, 0, 0], sizes = [1, 1, 1, 64], strides = [1, 1, 1, 1]} : vector<1x4x4x64xf32> to vector<1x1x1x64xf32>
    %44 = vector.shape_cast %43 : vector<1x1x1x64xf32> to vector<1x64xf32>
    %45 = vector.extract_strided_slice %42 {offsets = [0, 0, 1, 0], sizes = [1, 1, 1, 64], strides = [1, 1, 1, 1]} : vector<1x4x4x64xf32> to vector<1x1x1x64xf32>
    %46 = vector.shape_cast %45 : vector<1x1x1x64xf32> to vector<1x64xf32>
    %47 = vector.extract_strided_slice %42 {offsets = [0, 0, 2, 0], sizes = [1, 1, 1, 64], strides = [1, 1, 1, 1]} : vector<1x4x4x64xf32> to vector<1x1x1x64xf32>
    %48 = vector.shape_cast %47 : vector<1x1x1x64xf32> to vector<1x64xf32>
    %49 = vector.extract_strided_slice %42 {offsets = [0, 0, 3, 0], sizes = [1, 1, 1, 64], strides = [1, 1, 1, 1]} : vector<1x4x4x64xf32> to vector<1x1x1x64xf32>
    %50 = vector.shape_cast %49 : vector<1x1x1x64xf32> to vector<1x64xf32>
    %51 = vector.extract_strided_slice %42 {offsets = [0, 1, 0, 0], sizes = [1, 1, 1, 64], strides = [1, 1, 1, 1]} : vector<1x4x4x64xf32> to vector<1x1x1x64xf32>
    %52 = vector.shape_cast %51 : vector<1x1x1x64xf32> to vector<1x64xf32>
    %53 = vector.extract_strided_slice %42 {offsets = [0, 1, 1, 0], sizes = [1, 1, 1, 64], strides = [1, 1, 1, 1]} : vector<1x4x4x64xf32> to vector<1x1x1x64xf32>
    %54 = vector.shape_cast %53 : vector<1x1x1x64xf32> to vector<1x64xf32>
    %55 = vector.extract_strided_slice %42 {offsets = [0, 1, 2, 0], sizes = [1, 1, 1, 64], strides = [1, 1, 1, 1]} : vector<1x4x4x64xf32> to vector<1x1x1x64xf32>
    %56 = vector.shape_cast %55 : vector<1x1x1x64xf32> to vector<1x64xf32>
    %57 = vector.extract_strided_slice %42 {offsets = [0, 1, 3, 0], sizes = [1, 1, 1, 64], strides = [1, 1, 1, 1]} : vector<1x4x4x64xf32> to vector<1x1x1x64xf32>
    %58 = vector.shape_cast %57 : vector<1x1x1x64xf32> to vector<1x64xf32>
    %59 = vector.extract_strided_slice %42 {offsets = [0, 2, 0, 0], sizes = [1, 1, 1, 64], strides = [1, 1, 1, 1]} : vector<1x4x4x64xf32> to vector<1x1x1x64xf32>
    %60 = vector.shape_cast %59 : vector<1x1x1x64xf32> to vector<1x64xf32>
    %61 = vector.extract_strided_slice %42 {offsets = [0, 2, 1, 0], sizes = [1, 1, 1, 64], strides = [1, 1, 1, 1]} : vector<1x4x4x64xf32> to vector<1x1x1x64xf32>
    %62 = vector.shape_cast %61 : vector<1x1x1x64xf32> to vector<1x64xf32>
    %63 = vector.extract_strided_slice %42 {offsets = [0, 2, 2, 0], sizes = [1, 1, 1, 64], strides = [1, 1, 1, 1]} : vector<1x4x4x64xf32> to vector<1x1x1x64xf32>
    %64 = vector.shape_cast %63 : vector<1x1x1x64xf32> to vector<1x64xf32>
    %65 = vector.extract_strided_slice %42 {offsets = [0, 2, 3, 0], sizes = [1, 1, 1, 64], strides = [1, 1, 1, 1]} : vector<1x4x4x64xf32> to vector<1x1x1x64xf32>
    %66 = vector.shape_cast %65 : vector<1x1x1x64xf32> to vector<1x64xf32>
    %67 = vector.extract_strided_slice %42 {offsets = [0, 3, 0, 0], sizes = [1, 1, 1, 64], strides = [1, 1, 1, 1]} : vector<1x4x4x64xf32> to vector<1x1x1x64xf32>
    %68 = vector.shape_cast %67 : vector<1x1x1x64xf32> to vector<1x64xf32>
    %69 = vector.extract_strided_slice %42 {offsets = [0, 3, 1, 0], sizes = [1, 1, 1, 64], strides = [1, 1, 1, 1]} : vector<1x4x4x64xf32> to vector<1x1x1x64xf32>
    %70 = vector.shape_cast %69 : vector<1x1x1x64xf32> to vector<1x64xf32>
    %71 = vector.extract_strided_slice %42 {offsets = [0, 3, 2, 0], sizes = [1, 1, 1, 64], strides = [1, 1, 1, 1]} : vector<1x4x4x64xf32> to vector<1x1x1x64xf32>
    %72 = vector.shape_cast %71 : vector<1x1x1x64xf32> to vector<1x64xf32>
    %73 = vector.extract_strided_slice %42 {offsets = [0, 3, 3, 0], sizes = [1, 1, 1, 64], strides = [1, 1, 1, 1]} : vector<1x4x4x64xf32> to vector<1x1x1x64xf32>
    %74 = vector.shape_cast %73 : vector<1x1x1x64xf32> to vector<1x64xf32>
    %75 = tpu.concatenate %44, %46, %48, %50, %52, %54, %56, %58, %60, %62, %64, %66, %68, %70, %72, %74 in 1 : vector<1x64xf32>, vector<1x64xf32>, vector<1x64xf32>, vector<1x64xf32>, vector<1x64xf32>, vector<1x64xf32>, vector<1x64xf32>, vector<1x64xf32>, vector<1x64xf32>, vector<1x64xf32>, vector<1x64xf32>, vector<1x64xf32>, vector<1x64xf32>, vector<1x64xf32>, vector<1x64xf32>, vector<1x64xf32> -> vector<1x1024xf32>
    %c0_16 = arith.constant 0 : index
    %c0_17 = arith.constant 0 : index
    %76 = vector.load %arg6[%c0_16, %c0_17] : memref<1024x128xf32, #tpu.memory_space<vmem>>, vector<1024x128xf32>
    %cst_18 = arith.constant dense<0.000000e+00> : vector<1x128xf32>
    %77 = tpu.matmul %75, %76, %cst_18 {dimension_numbers = #tpu.dot_dimension_numbers<[1], [0], [0], [1], [0, 0, 1, 1], [], []>} : vector<1x1024xf32>, vector<1024x128xf32>, vector<1x128xf32> -> vector<1x128xf32>
    %c0_19 = arith.constant 0 : index
    %c0_20 = arith.constant 0 : index
    %78 = vector.load %arg7[%c0_19, %c0_20] : memref<1x128xf32, #tpu.memory_space<vmem>>, vector<1x128xf32>
    %79 = arith.addf %77, %78 : vector<1x128xf32>
    %cst_21 = arith.constant 0.000000e+00 : f32
    %80 = vector.broadcast %cst_21 : f32 to vector<1x128xf32>
    %81 = arith.maximumf %79, %80 : vector<1x128xf32>
    %c0_22 = arith.constant 0 : index
    %c0_23 = arith.constant 0 : index
    %82 = vector.load %arg8[%c0_22, %c0_23] : memref<128x10xf32, #tpu.memory_space<vmem>>, vector<128x10xf32>
    %cst_24 = arith.constant dense<0.000000e+00> : vector<1x10xf32>
    %83 = tpu.matmul %81, %82, %cst_24 {dimension_numbers = #tpu.dot_dimension_numbers<[1], [0], [0], [1], [0, 0, 1, 1], [], []>} : vector<1x128xf32>, vector<128x10xf32>, vector<1x10xf32> -> vector<1x10xf32>
    %c0_25 = arith.constant 0 : index
    %c0_26 = arith.constant 0 : index
    %84 = vector.load %arg9[%c0_25, %c0_26] : memref<1x10xf32, #tpu.memory_space<vmem>>, vector<1x10xf32>
    %85 = arith.addf %83, %84 : vector<1x10xf32>
    %cst_27 = arith.constant dense<0xFF800000> : vector<1xf32>
    %86 = vector.multi_reduction <maximumf>, %85, %cst_27 [1] : vector<1x10xf32> to vector<1xf32>
    %87 = vector.shape_cast %86 : vector<1xf32> to vector<1x1xf32>
    %88 = vector.broadcast %87 : vector<1x1xf32> to vector<1x10xf32>
    %89 = arith.subf %85, %88 : vector<1x10xf32>
    %90 = math.exp %89 : vector<1x10xf32>
    %cst_28 = arith.constant dense<0.000000e+00> : vector<1xf32>
    %91 = vector.multi_reduction <add>, %90, %cst_28 [1] : vector<1x10xf32> to vector<1xf32>
    %92 = vector.shape_cast %91 : vector<1xf32> to vector<1x1xf32>
    %93 = math.log %92 : vector<1x1xf32>
    %94 = arith.addf %87, %93 : vector<1x1xf32>
    %95 = vector.broadcast %94 : vector<1x1xf32> to vector<1x10xf32>
    %96 = arith.subf %85, %95 : vector<1x10xf32>
    %97 = vector.shape_cast %96 : vector<1x10xf32> to vector<1x1x10xf32>
    %c0_29 = arith.constant 0 : index
    %c0_30 = arith.constant 0 : index
    %c0_31 = arith.constant 0 : index
    %98 = vector.load %arg10[%c0_29, %c0_30, %c0_31] : memref<1x1x10xf32, #tpu.memory_space<vmem>>, vector<1x1x10xf32>
    tpu.vector_store %arg10[%c0_29, %c0_30, %c0_31], %97 {strides = array<i32>} : memref<1x1x10xf32, #tpu.memory_space<vmem>>, vector<1x1x10xf32>,
    return
  }
  func.func @transform_0(%arg0: i32) -> (i32, i32, i32, i32) {
    %c0_i32 = arith.constant 0 : i32
    %c0_i32_0 = arith.constant 0 : i32
    %c0_i32_1 = arith.constant 0 : i32
    %c0_i32_2 = arith.constant 0 : i32
    return %arg0, %c0_i32, %c0_i32_0, %c0_i32_1 : i32, i32, i32, i32
  }
  func.func @transform_1(%arg0: i32) -> (i32, i32) {
    %c0_i32 = arith.constant 0 : i32
    %c0_i32_0 = arith.constant 0 : i32
    %c0_i32_1 = arith.constant 0 : i32
    return %c0_i32, %c0_i32_0 : i32, i32
  }
  func.func @transform_2(%arg0: i32) -> (i32, i32) {
    %c0_i32 = arith.constant 0 : i32
    %c0_i32_0 = arith.constant 0 : i32
    %c0_i32_1 = arith.constant 0 : i32
    return %c0_i32, %c0_i32_0 : i32, i32
  }
  func.func @transform_3(%arg0: i32) -> (i32, i32) {
    %c0_i32 = arith.constant 0 : i32
    %c0_i32_0 = arith.constant 0 : i32
    %c0_i32_1 = arith.constant 0 : i32
    return %c0_i32, %c0_i32_0 : i32, i32
  }
  func.func @transform_4(%arg0: i32) -> (i32, i32) {
    %c0_i32 = arith.constant 0 : i32
    %c0_i32_0 = arith.constant 0 : i32
    %c0_i32_1 = arith.constant 0 : i32
    return %c0_i32, %c0_i32_0 : i32, i32
  }
  func.func @transform_5(%arg0: i32) -> (i32, i32) {
    %c0_i32 = arith.constant 0 : i32
    %c0_i32_0 = arith.constant 0 : i32
    %c0_i32_1 = arith.constant 0 : i32
    return %c0_i32, %c0_i32_0 : i32, i32
  }
  func.func @transform_6(%arg0: i32) -> (i32, i32) {
    %c0_i32 = arith.constant 0 : i32
    %c0_i32_0 = arith.constant 0 : i32
    %c0_i32_1 = arith.constant 0 : i32
    return %c0_i32, %c0_i32_0 : i32, i32
  }
  func.func @transform_7(%arg0: i32) -> (i32, i32) {
    %c0_i32 = arith.constant 0 : i32
    %c0_i32_0 = arith.constant 0 : i32
    %c0_i32_1 = arith.constant 0 : i32
    return %c0_i32, %c0_i32_0 : i32, i32
  }
  func.func @transform_8(%arg0: i32) -> (i32, i32) {
    %c0_i32 = arith.constant 0 : i32
    %c0_i32_0 = arith.constant 0 : i32
    %c0_i32_1 = arith.constant 0 : i32
    return %c0_i32, %c0_i32_0 : i32, i32
  }
  func.func @transform_9(%arg0: i32) -> (i32, i32, i32) {
    %c0_i32 = arith.constant 0 : i32
    %c0_i32_0 = arith.constant 0 : i32
    %c0_i32_1 = arith.constant 0 : i32
    return %arg0, %c0_i32, %c0_i32_0 : i32, i32, i32
  }
}

</mosaic_0001>

<llo_original>
// kernel: nn_classifier_forward.1
$region0: #{nn_classifier_forward.1}
  #allocation0 [shape = 'u32[]', space=smem, size = 0x4, offset = 0x4, fixed_abs, tag = 'smem constant byte address 0x4 - core index']
  #allocation1 [shape = 'u32[144,128]{1,0:T(1,128)}', space=vmem, size = 0x12000, scoped, tag = 'internal scratch']
  %s0 = inlined_call_operand.vmem [shape: f32[2,12,12,3], index: 0, kind: input, shape index: {}]
  %s1 = inlined_call_operand.vmem [shape: f32[27,32], index: 1, kind: input, shape index: {}]
  %s2 = inlined_call_operand.vmem [shape: f32[1,32], index: 2, kind: input, shape index: {}]
  %s3 = inlined_call_operand.vmem [shape: f32[288,64], index: 3, kind: input, shape index: {}]
  %s4 = inlined_call_operand.vmem [shape: f32[1,64], index: 4, kind: input, shape index: {}]
  %s5 = inlined_call_operand.vmem [shape: f32[1024,128], index: 5, kind: input, shape index: {}]
  %s6 = inlined_call_operand.vmem [shape: f32[1,128], index: 6, kind: input, shape index: {}]
  %s7 = inlined_call_operand.vmem [shape: f32[128,10], index: 7, kind: input, shape index: {}]
  %s8 = inlined_call_operand.vmem [shape: f32[1,10], index: 8, kind: input, shape index: {}]
  %s9 = inlined_call_operand.hbm [shape: f32[2,1,10], index: 9, kind: output, shape index: {}]
  %s10 = sld [smem:[#allocation0]]
  $region69: #{nn_classifier_forward.1} parent=0
    _
  %s12 = ssub.s32 1, %s10
  %s13 = scalar_select 0, %s12, %s10
  $region1: #{nn_classifier_forward.1} parent=0
    #allocation2 [shape = 'u8[1024]{0}', space=vmem, size = 0x400, scoped, tag = 'output window, operand 0']
    #allocation3 [shape = 's32[2]{0}', space=sflag, size = 0x8, scoped, tag = 'scoped memory for nn_classifier_forward.1']
    %14 = vsyncpa [#allocation3], 0
    %s15 = scalar_lea.sflag [#allocation3], 1
    %16 = vsyncpa %s15, 0
    loop: start=0, step=1, limit=4
    $region2: #{nn_classifier_forward.1} parent=1 // loop_pre_header
      _
    $region3: #{nn_classifier_forward.1} parent=1 // loop_header
      %s18 = sphi 0, %s22
      %p19 = scmp.ge.s32.totalorder %s18, 4
      %s28 = sphi 0, %s30
      %s31 = sphi 0, %s28
      %s32 = sphi 0, %s31
      %s48 = sphi 0, %s32
      %s52 = sphi 0, %s52
      %s54 = sphi 0, %s52
      %s55 = sphi 0, %s54
      %s69 = sphi 0, %s55
      %s73 = sphi 0, %s73
      %s75 = sphi 0, %s73
      %s76 = sphi 0, %s75
      %s90 = sphi 0, %s76
      %s94 = sphi 0, %s94
      %s96 = sphi 0, %s94
      %s97 = sphi 0, %s96
      %s111 = sphi 0, %s97
      %s115 = sphi 0, %s115
      %s117 = sphi 0, %s115
      %s118 = sphi 0, %s117
      %s132 = sphi 0, %s118
      %s136 = sphi 0, %s136
      %s138 = sphi 0, %s136
      %s139 = sphi 0, %s138
      %s153 = sphi 0, %s139
      %s157 = sphi 0, %s157
      %s159 = sphi 0, %s157
      %s160 = sphi 0, %s159
      %s174 = sphi 0, %s160
      %s178 = sphi 0, %s178
      %s180 = sphi 0, %s178
      %s181 = sphi 0, %s180
      %s195 = sphi 0, %s181
      %s199 = sphi 0, %s199
      %s201 = sphi 0, %s199
      %s202 = sphi 0, %s201
      %s216 = sphi 0, %s202
      %s222 = sphi 0, %s224
      %s225 = sphi 0, %s222
      %s226 = sphi 0, %s225
      %s242 = sphi 0, %s226
    $region4: #{nn_classifier_forward.1} parent=1 // loop_header_branch
      %21 = sbr.rel (%p19) target = $region8
    $region5: #{nn_classifier_forward.1} parent=1 // loop_body
      %s23 = ssub.s32 %s18, 1
      %s24 = ssub.s32 %s18, 2
      %s25 = sadd.s32 %s18, 1
      %s26 = ssub.s32 %s18, %s25
      %p27 = scmp.eq.s32.totalorder %s26, 0
      %s29 = sadd.s32 %s28, 1
      %s30 = scalar_select %p27, %s28, %s29
      %p33 = pneg %p27
      %p34 = scmp.eq.s32.totalorder %s18, 1
      %p35 = por %p33, %p34
      %p36 = scmp.ne.s32.totalorder %s28, %s31
      %p37 = scmp.eq.s32.totalorder %s18, 0
      %p38 = por %p36, %p37
      %p39 = scmp.ne.s32.totalorder %s28, %s31
      %p40 = scmp.eq.s32.totalorder %s23, 1
      %p41 = por %p39, %p40
      %p42 = scmp.ne.s32.totalorder %s31, %s32
      %p43 = scmp.eq.s32.totalorder %s23, 0
      %p44 = por %p42, %p43
      %p45 = scmp.ne.s32.totalorder %s31, %s32
      %p46 = scmp.eq.s32.totalorder %s24, 1
      %p47 = por %p45, %p46
      %p49 = scmp.ne.s32.totalorder %s32, %s48
      %p50 = scmp.eq.s32.totalorder %s24, 0
      %p51 = por %p49, %p50
      %s53 = sadd.s32 %s52, 1
      %p56 = scmp.eq.s32.totalorder %s18, 1
      %p57 = scmp.ne.s32.totalorder %s52, %s54
      %p58 = scmp.eq.s32.totalorder %s18, 0
      %p59 = por %p57, %p58
      %p60 = scmp.ne.s32.totalorder %s52, %s54
      %p61 = scmp.eq.s32.totalorder %s23, 1
      %p62 = por %p60, %p61
      %p63 = scmp.ne.s32.totalorder %s54, %s55
      %p64 = scmp.eq.s32.totalorder %s23, 0
      %p65 = por %p63, %p64
      %p66 = scmp.ne.s32.totalorder %s54, %s55
      %p67 = scmp.eq.s32.totalorder %s24, 1
      %p68 = por %p66, %p67
      %p70 = scmp.ne.s32.totalorder %s55, %s69
      %p71 = scmp.eq.s32.totalorder %s24, 0
      %p72 = por %p70, %p71
      %s74 = sadd.s32 %s73, 1
      %p77 = scmp.eq.s32.totalorder %s18, 1
      %p78 = scmp.ne.s32.totalorder %s73, %s75
      %p79 = scmp.eq.s32.totalorder %s18, 0
      %p80 = por %p78, %p79
      %p81 = scmp.ne.s32.totalorder %s73, %s75
      %p82 = scmp.eq.s32.totalorder %s23, 1
      %p83 = por %p81, %p82
      %p84 = scmp.ne.s32.totalorder %s75, %s76
      %p85 = scmp.eq.s32.totalorder %s23, 0
      %p86 = por %p84, %p85
      %p87 = scmp.ne.s32.totalorder %s75, %s76
      %p88 = scmp.eq.s32.totalorder %s24, 1
      %p89 = por %p87, %p88
      %p91 = scmp.ne.s32.totalorder %s76, %s90
      %p92 = scmp.eq.s32.totalorder %s24, 0
      %p93 = por %p91, %p92
      %s95 = sadd.s32 %s94, 1
      %p98 = scmp.eq.s32.totalorder %s18, 1
      %p99 = scmp.ne.s32.totalorder %s94, %s96
      %p100 = scmp.eq.s32.totalorder %s18, 0
      %p101 = por %p99, %p100
      %p102 = scmp.ne.s32.totalorder %s94, %s96
      %p103 = scmp.eq.s32.totalorder %s23, 1
      %p104 = por %p102, %p103
      %p105 = scmp.ne.s32.totalorder %s96, %s97
      %p106 = scmp.eq.s32.totalorder %s23, 0
      %p107 = por %p105, %p106
      %p108 = scmp.ne.s32.totalorder %s96, %s97
      %p109 = scmp.eq.s32.totalorder %s24, 1
      %p110 = por %p108, %p109
      %p112 = scmp.ne.s32.totalorder %s97, %s111
      %p113 = scmp.eq.s32.totalorder %s24, 0
      %p114 = por %p112, %p113
      %s116 = sadd.s32 %s115, 1
      %p119 = scmp.eq.s32.totalorder %s18, 1
      %p120 = scmp.ne.s32.totalorder %s115, %s117
      %p121 = scmp.eq.s32.totalorder %s18, 0
      %p122 = por %p120, %p121
      %p123 = scmp.ne.s32.totalorder %s115, %s117
      %p124 = scmp.eq.s32.totalorder %s23, 1
      %p125 = por %p123, %p124
      %p126 = scmp.ne.s32.totalorder %s117, %s118
      %p127 = scmp.eq.s32.totalorder %s23, 0
      %p128 = por %p126, %p127
      %p129 = scmp.ne.s32.totalorder %s117, %s118
      %p130 = scmp.eq.s32.totalorder %s24, 1
      %p131 = por %p129, %p130
      %p133 = scmp.ne.s32.totalorder %s118, %s132
      %p134 = scmp.eq.s32.totalorder %s24, 0
      %p135 = por %p133, %p134
      %s137 = sadd.s32 %s136, 1
      %p140 = scmp.eq.s32.totalorder %s18, 1
      %p141 = scmp.ne.s32.totalorder %s136, %s138
      %p142 = scmp.eq.s32.totalorder %s18, 0
      %p143 = por %p141, %p142
      %p144 = scmp.ne.s32.totalorder %s136, %s138
      %p145 = scmp.eq.s32.totalorder %s23, 1
      %p146 = por %p144, %p145
      %p147 = scmp.ne.s32.totalorder %s138, %s139
      %p148 = scmp.eq.s32.totalorder %s23, 0
      %p149 = por %p147, %p148
      %p150 = scmp.ne.s32.totalorder %s138, %s139
      %p151 = scmp.eq.s32.totalorder %s24, 1
      %p152 = por %p150, %p151
      %p154 = scmp.ne.s32.totalorder %s139, %s153
      %p155 = scmp.eq.s32.totalorder %s24, 0
      %p156 = por %p154, %p155
      %s158 = sadd.s32 %s157, 1
      %p161 = scmp.eq.s32.totalorder %s18, 1
      %p162 = scmp.ne.s32.totalorder %s157, %s159
      %p163 = scmp.eq.s32.totalorder %s18, 0
      %p164 = por %p162, %p163
      %p165 = scmp.ne.s32.totalorder %s157, %s159
      %p166 = scmp.eq.s32.totalorder %s23, 1
      %p167 = por %p165, %p166
      %p168 = scmp.ne.s32.totalorder %s159, %s160
      %p169 = scmp.eq.s32.totalorder %s23, 0
      %p170 = por %p168, %p169
      %p171 = scmp.ne.s32.totalorder %s159, %s160
      %p172 = scmp.eq.s32.totalorder %s24, 1
      %p173 = por %p171, %p172
      %p175 = scmp.ne.s32.totalorder %s160, %s174
      %p176 = scmp.eq.s32.totalorder %s24, 0
      %p177 = por %p175, %p176
      %s179 = sadd.s32 %s178, 1
      %p182 = scmp.eq.s32.totalorder %s18, 1
      %p183 = scmp.ne.s32.totalorder %s178, %s180
      %p184 = scmp.eq.s32.totalorder %s18, 0
      %p185 = por %p183, %p184
      %p186 = scmp.ne.s32.totalorder %s178, %s180
      %p187 = scmp.eq.s32.totalorder %s23, 1
      %p188 = por %p186, %p187
      %p189 = scmp.ne.s32.totalorder %s180, %s181
      %p190 = scmp.eq.s32.totalorder %s23, 0
      %p191 = por %p189, %p190
      %p192 = scmp.ne.s32.totalorder %s180, %s181
      %p193 = scmp.eq.s32.totalorder %s24, 1
      %p194 = por %p192, %p193
      %p196 = scmp.ne.s32.totalorder %s181, %s195
      %p197 = scmp.eq.s32.totalorder %s24, 0
      %p198 = por %p196, %p197
      %s200 = sadd.s32 %s199, 1
      %p203 = scmp.eq.s32.totalorder %s18, 1
      %p204 = scmp.ne.s32.totalorder %s199, %s201
      %p205 = scmp.eq.s32.totalorder %s18, 0
      %p206 = por %p204, %p205
      %p207 = scmp.ne.s32.totalorder %s199, %s201
      %p208 = scmp.eq.s32.totalorder %s23, 1
      %p209 = por %p207, %p208
      %p210 = scmp.ne.s32.totalorder %s201, %s202
      %p211 = scmp.eq.s32.totalorder %s23, 0
      %p212 = por %p210, %p211
      %p213 = scmp.ne.s32.totalorder %s201, %s202
      %p214 = scmp.eq.s32.totalorder %s24, 1
      %p215 = por %p213, %p214
      %p217 = scmp.ne.s32.totalorder %s202, %s216
      %p218 = scmp.eq.s32.totalorder %s24, 0
      %p219 = por %p217, %p218
      %s220 = ssub.s32 %s18, %s25
      %p221 = scmp.eq.s32.totalorder %s220, 0
      %s223 = sadd.s32 %s222, 1
      %s224 = scalar_select %p221, %s222, %s223
      %p227 = pneg %p221
      %p228 = scmp.eq.s32.totalorder %s18, 1
      %p229 = por %p227, %p228
      %p230 = scmp.ne.s32.totalorder %s222, %s225
      %p231 = scmp.eq.s32.totalorder %s18, 0
      %p232 = por %p230, %p231
      %p233 = scmp.ne.s32.totalorder %s222, %s225
      %p234 = scmp.eq.s32.totalorder %s23, 1
      %p235 = por %p233, %p234
      %p236 = scmp.ne.s32.totalorder %s225, %s226
      %p237 = scmp.eq.s32.totalorder %s23, 0
      %p238 = por %p236, %p237
      %p239 = scmp.ne.s32.totalorder %s225, %s226
      %p240 = scmp.eq.s32.totalorder %s24, 1
      %p241 = por %p239, %p240
      %p243 = scmp.ne.s32.totalorder %s226, %s242
      %p244 = scmp.eq.s32.totalorder %s24, 0
      %p245 = por %p243, %p244
      %p246 = scmp.le.s32.totalorder 1, %s18
      %p247 = scmp.lt.s32.totalorder %s18, 3
      %p248 = pnand %p246, %p247
      %p249 = pneg %p248
      // Predicated region
      $region9: #{nn_classifier_forward.1} parent=5 // pred_check
        _
      $region10: #{nn_classifier_forward.1} parent=5 // pred_check_branch
        %251 = sbr.rel (%p248) target = $region12
      $region11: #{nn_classifier_forward.1} parent=5 // pred_region
        %s252 = ssub.s32 %s18, 1
        // Predicated region
        $region13: #{nn_classifier_forward.1} parent=11 // pred_check
          %p253 = pneg %p65
        $region14: #{nn_classifier_forward.1} parent=11 // pred_check_branch
          %255 = sbr.rel (%p253) target = $region16
        $region15: #{nn_classifier_forward.1} parent=11 // pred_region
          _
        $region16: #{nn_classifier_forward.1} parent=11 // pred_fallthru
          _
        // Predicated region
        $region17: #{nn_classifier_forward.1} parent=11 // pred_check
          %p256 = pneg %p86
        $region18: #{nn_classifier_forward.1} parent=11 // pred_check_branch
          %258 = sbr.rel (%p256) target = $region20
        $region19: #{nn_classifier_forward.1} parent=11 // pred_region
          _
        $region20: #{nn_classifier_forward.1} parent=11 // pred_fallthru
          _
        // Predicated region
        $region21: #{nn_classifier_forward.1} parent=11 // pred_check
          %p259 = pneg %p107
        $region22: #{nn_classifier_forward.1} parent=11 // pred_check_branch
          %261 = sbr.rel (%p259) target = $region24
        $region23: #{nn_classifier_forward.1} parent=11 // pred_region
          _
        $region24: #{nn_classifier_forward.1} parent=11 // pred_fallthru
          _
        // Predicated region
        $region25: #{nn_classifier_forward.1} parent=11 // pred_check
          %p262 = pneg %p128
        $region26: #{nn_classifier_forward.1} parent=11 // pred_check_branch
          %264 = sbr.rel (%p262) target = $region28
        $region27: #{nn_classifier_forward.1} parent=11 // pred_region
          _
        $region28: #{nn_classifier_forward.1} parent=11 // pred_fallthru
          _
        // Predicated region
        $region29: #{nn_classifier_forward.1} parent=11 // pred_check
          %p265 = pneg %p149
        $region30: #{nn_classifier_forward.1} parent=11 // pred_check_branch
          %267 = sbr.rel (%p265) target = $region32
        $region31: #{nn_classifier_forward.1} parent=11 // pred_region
          _
        $region32: #{nn_classifier_forward.1} parent=11 // pred_fallthru
          _
        // Predicated region
        $region33: #{nn_classifier_forward.1} parent=11 // pred_check
          %p268 = pneg %p170
        $region34: #{nn_classifier_forward.1} parent=11 // pred_check_branch
          %270 = sbr.rel (%p268) target = $region36
        $region35: #{nn_classifier_forward.1} parent=11 // pred_region
          _
        $region36: #{nn_classifier_forward.1} parent=11 // pred_fallthru
          _
        // Predicated region
        $region37: #{nn_classifier_forward.1} parent=11 // pred_check
          %p271 = pneg %p191
        $region38: #{nn_classifier_forward.1} parent=11 // pred_check_branch
          %273 = sbr.rel (%p271) target = $region40
        $region39: #{nn_classifier_forward.1} parent=11 // pred_region
          _
        $region40: #{nn_classifier_forward.1} parent=11 // pred_fallthru
          _
        // Predicated region
        $region41: #{nn_classifier_forward.1} parent=11 // pred_check
          %p274 = pneg %p212
        $region42: #{nn_classifier_forward.1} parent=11 // pred_check_branch
          %276 = sbr.rel (%p274) target = $region44
        $region43: #{nn_classifier_forward.1} parent=11 // pred_region
          _
        $region44: #{nn_classifier_forward.1} parent=11 // pred_fallthru
          _
      $region12: #{nn_classifier_forward.1} parent=5 // pred_fallthru
        _
      %p277 = scmp.lt.s32.totalorder %s18, 2
      // Predicated region
      $region45: #{nn_classifier_forward.1} parent=5 // pred_check
        %p278 = pneg %p277
      $region46: #{nn_classifier_forward.1} parent=5 // pred_check_branch
        %280 = sbr.rel (%p278) target = $region48
      $region47: #{nn_classifier_forward.1} parent=5 // pred_region
        // Predicated region
        $region49: #{nn_classifier_forward.1} parent=47 // pred_check
          %p281 = pneg %p38
        $region50: #{nn_classifier_forward.1} parent=47 // pred_check_branch
          %283 = sbr.rel (%p281) target = $region52
        $region51: #{nn_classifier_forward.1} parent=47 // pred_region
          %p284 = scmp.lt.s32.totalorder %s18, 1
          %s285 = scalar_select %p284, %s18, 1
          %s286 = smul.addr %s285, 24
          %s287 = smul.addr %s286, 8
          %s288 = scalar_lea.vmem %s0, %s287
        $region52: #{nn_classifier_forward.1} parent=47 // pred_fallthru
          _
      $region48: #{nn_classifier_forward.1} parent=5 // pred_fallthru
        _
      %p289 = scmp.le.s32.totalorder 1, %s18
      %p290 = scmp.lt.s32.totalorder %s18, 3
      %p291 = pnand %p289, %p290
      %p292 = pneg %p291
      // Predicated region
      $region53: #{nn_classifier_forward.1} parent=5 // pred_check
        _
      $region54: #{nn_classifier_forward.1} parent=5 // pred_check_branch
        %294 = sbr.rel (%p291) target = $region56
      $region55: #{nn_classifier_forward.1} parent=5 // pred_region
        %s295 = ssub.s32 %s18, 1
        %p296 = scmp.lt.s32.totalorder %s23, 1
        %s297 = scalar_select %p296, %s23, 1
        %s298 = smul.addr %s297, 24
        %s299 = smul.addr %s298, 8
        %s300 = scalar_lea.vmem %s0, %s299
        %p301 = pneg %p44
        %p302 = pneg %p41
        %p303 = pneg %p65
        %p304 = pneg %p62
        %p305 = pneg %p86
        %p306 = pneg %p83
        %p307 = pneg %p107
        %p308 = pneg %p104
        %p309 = pneg %p128
        %p310 = pneg %p125
        %p311 = pneg %p149
        %p312 = pneg %p146
        %p313 = pneg %p170
        %p314 = pneg %p167
        %p315 = pneg %p191
        %p316 = pneg %p188
        %p317 = pneg %p212
        %p318 = pneg %p209
        %p319 = pneg %p238
        %p320 = pneg %p235
        %s321 = sand.u32 %s225, 1
        %s322 = scalar_lea.sflag [#allocation3], %s321
        %s323 = sand.u32 %s225, 1
        %s324 = scalar_lea.vmem [#allocation2], %s323
        %p325 = scmp.lt.s32.totalorder %s23, 1
        %s326 = scalar_select %p325, %s23, 1
        %s327 = smul.addr %s326, 24
        %s328 = smul.addr %s327, 8
        %s329 = scalar_lea.vmem %s0, %s328
        %v330 = vld [vmem:[%s329] sm:$0xff]
        %v331 = vld [vmem:[%s329 + $0x8] sm:$0xf]
        %v332 = vld [vmem:[%s329 + $0x10] sm:$0xff]
        %v333 = vld [vmem:[%s329 + $0x18] sm:$0xf]
        %v334 = vld [vmem:[%s329 + $0x20] sm:$0xff]
        %v335 = vld [vmem:[%s329 + $0x28] sm:$0xf]
        %v336 = vld [vmem:[%s329 + $0x30] sm:$0xff]
        %v337 = vld [vmem:[%s329 + $0x38] sm:$0xf]
        %v338 = vld [vmem:[%s329 + $0x40] sm:$0xff]
        %v339 = vld [vmem:[%s329 + $0x48] sm:$0xf]
        %v340 = vld [vmem:[%s329 + $0x50] sm:$0xff]
        %v341 = vld [vmem:[%s329 + $0x58] sm:$0xf]
        %v342 = vld [vmem:[%s329 + $0x60] sm:$0xff]
        %v343 = vld [vmem:[%s329 + $0x68] sm:$0xf]
        %v344 = vld [vmem:[%s329 + $0x70] sm:$0xff]
        %v345 = vld [vmem:[%s329 + $0x78] sm:$0xf]
        %v346 = vld [vmem:[%s329 + $0x80] sm:$0xff]
        %v347 = vld [vmem:[%s329 + $0x88] sm:$0xf]
        %v348 = vld [vmem:[%s329 + $0x90] sm:$0xff]
        %v349 = vld [vmem:[%s329 + $0x98] sm:$0xf]
        %v350 = vld [vmem:[%s329 + $0xa0] sm:$0xff]
        %v351 = vld [vmem:[%s329 + $0xa8] sm:$0xf]
        %v352 = vld [vmem:[%s329 + $0xb0] sm:$0xff]
        %v353 = vld [vmem:[%s329 + $0xb8] sm:$0xf]
        %v354 = vld [vmem:[%s1] sm:$0xff]
        %v355 = vld [vmem:[%s1 + $0x8] sm:$0xff]
        %v356 = vld [vmem:[%s1 + $0x10] sm:$0xff]
        %v357 = vld [vmem:[%s1 + $0x18] sm:$0x7]
        %v358 = vld [vmem:[%s2] sm:$0x1]
        %vm379 = vcmask 1046528
        %v380 = vrot.slane %v330, 1
        %v381 = vrot.slane %v331, 1
        %v382 = vsel %vm379, %v380, %v381
        %v383 = vrot.slane %v332, 1
        %v384 = vrot.slane %v333, 1
        %v385 = vsel %vm379, %v383, %v384
        %v386 = vrot.slane %v334, 1
        %v387 = vrot.slane %v335, 1
        %v388 = vsel %vm379, %v386, %v387
        %v389 = vrot.slane %v336, 1
        %v390 = vrot.slane %v337, 1
        %v391 = vsel %vm379, %v389, %v390
        %v392 = vrot.slane %v338, 1
        %v393 = vrot.slane %v339, 1
        %v394 = vsel %vm379, %v392, %v393
        %v395 = vrot.slane %v340, 1
        %v396 = vrot.slane %v341, 1
        %v397 = vsel %vm379, %v395, %v396
        %v398 = vrot.slane %v342, 1
        %v399 = vrot.slane %v343, 1
        %v400 = vsel %vm379, %v398, %v399
        %v401 = vrot.slane %v344, 1
        %v402 = vrot.slane %v345, 1
        %v403 = vsel %vm379, %v401, %v402
        %v404 = vrot.slane %v346, 1
        %v405 = vrot.slane %v347, 1
        %v406 = vsel %vm379, %v404, %v405
        %v407 = vrot.slane %v348, 1
        %v408 = vrot.slane %v349, 1
        %v409 = vsel %vm379, %v407, %v408
        %410 = vrot.lane.b32.xlu0 %v382, 3
        %v411 = vpop.permute.xlu0 %410
        %412 = vrot.lane.b32.xlu0 %v381, 3
        %v413 = vpop.permute.xlu0 %412
        %414 = vrot.lane.b32.xlu0 %v385, 3
        %v415 = vpop.permute.xlu0 %414
        %416 = vrot.lane.b32.xlu0 %v384, 3
        %v417 = vpop.permute.xlu0 %416
        %418 = vrot.lane.b32.xlu0 %v388, 3
        %v419 = vpop.permute.xlu0 %418
        %420 = vrot.lane.b32.xlu0 %v387, 3
        %v421 = vpop.permute.xlu0 %420
        %422 = vrot.lane.b32.xlu0 %v391, 3
        %v423 = vpop.permute.xlu0 %422
        %424 = vrot.lane.b32.xlu0 %v390, 3
        %v425 = vpop.permute.xlu0 %424
        %426 = vrot.lane.b32.xlu0 %v394, 3
        %v427 = vpop.permute.xlu0 %426
        %428 = vrot.lane.b32.xlu0 %v393, 3
        %v429 = vpop.permute.xlu0 %428
        %430 = vrot.lane.b32.xlu0 %v397, 3
        %v431 = vpop.permute.xlu0 %430
        %432 = vrot.lane.b32.xlu0 %v396, 3
        %v433 = vpop.permute.xlu0 %432
        %434 = vrot.lane.b32.xlu0 %v400, 3
        %v435 = vpop.permute.xlu0 %434
        %436 = vrot.lane.b32.xlu0 %v399, 3
        %v437 = vpop.permute.xlu0 %436
        %438 = vrot.lane.b32.xlu0 %v403, 3
        %v439 = vpop.permute.xlu0 %438
        %440 = vrot.lane.b32.xlu0 %v402, 3
        %v441 = vpop.permute.xlu0 %440
        %442 = vrot.lane.b32.xlu0 %v406, 3
        %v443 = vpop.permute.xlu0 %442
        %444 = vrot.lane.b32.xlu0 %v405, 3
        %v445 = vpop.permute.xlu0 %444
        %446 = vrot.lane.b32.xlu0 %v409, 3
        %v447 = vpop.permute.xlu0 %446
        %448 = vrot.lane.b32.xlu0 %v408, 3
        %v449 = vpop.permute.xlu0 %448
        %vm470 = vcmask 1045504
        %v471 = vrot.slane %v330, 2
        %v472 = vrot.slane %v331, 2
        %v473 = vsel %vm470, %v471, %v472
        %v474 = vrot.slane %v332, 2
        %v475 = vrot.slane %v333, 2
        %v476 = vsel %vm470, %v474, %v475
        %v477 = vrot.slane %v334, 2
        %v478 = vrot.slane %v335, 2
        %v479 = vsel %vm470, %v477, %v478
        %v480 = vrot.slane %v336, 2
        %v481 = vrot.slane %v337, 2
        %v482 = vsel %vm470, %v480, %v481
        %v483 = vrot.slane %v338, 2
        %v484 = vrot.slane %v339, 2
        %v485 = vsel %vm470, %v483, %v484
        %v486 = vrot.slane %v340, 2
        %v487 = vrot.slane %v341, 2
        %v488 = vsel %vm470, %v486, %v487
        %v489 = vrot.slane %v342, 2
        %v490 = vrot.slane %v343, 2
        %v491 = vsel %vm470, %v489, %v490
        %v492 = vrot.slane %v344, 2
        %v493 = vrot.slane %v345, 2
        %v494 = vsel %vm470, %v492, %v493
        %v495 = vrot.slane %v346, 2
        %v496 = vrot.slane %v347, 2
        %v497 = vsel %vm470, %v495, %v496
        %v498 = vrot.slane %v348, 2
        %v499 = vrot.slane %v349, 2
        %v500 = vsel %vm470, %v498, %v499
        %501 = vrot.lane.b32.xlu0 %v473, 6
        %v502 = vpop.permute.xlu0 %501
        %503 = vrot.lane.b32.xlu0 %v472, 6
        %v504 = vpop.permute.xlu0 %503
        %505 = vrot.lane.b32.xlu0 %v476, 6
        %v506 = vpop.permute.xlu0 %505
        %507 = vrot.lane.b32.xlu0 %v475, 6
        %v508 = vpop.permute.xlu0 %507
        %509 = vrot.lane.b32.xlu0 %v479, 6
        %v510 = vpop.permute.xlu0 %509
        %511 = vrot.lane.b32.xlu0 %v478, 6
        %v512 = vpop.permute.xlu0 %511
        %513 = vrot.lane.b32.xlu0 %v482, 6
        %v514 = vpop.permute.xlu0 %513
        %515 = vrot.lane.b32.xlu0 %v481, 6
        %v516 = vpop.permute.xlu0 %515
        %517 = vrot.lane.b32.xlu0 %v485, 6
        %v518 = vpop.permute.xlu0 %517
        %519 = vrot.lane.b32.xlu0 %v484, 6
        %v520 = vpop.permute.xlu0 %519
        %521 = vrot.lane.b32.xlu0 %v488, 6
        %v522 = vpop.permute.xlu0 %521
        %523 = vrot.lane.b32.xlu0 %v487, 6
        %v524 = vpop.permute.xlu0 %523
        %525 = vrot.lane.b32.xlu0 %v491, 6
        %v526 = vpop.permute.xlu0 %525
        %527 = vrot.lane.b32.xlu0 %v490, 6
        %v528 = vpop.permute.xlu0 %527
        %529 = vrot.lane.b32.xlu0 %v494, 6
        %v530 = vpop.permute.xlu0 %529
        %531 = vrot.lane.b32.xlu0 %v493, 6
        %v532 = vpop.permute.xlu0 %531
        %533 = vrot.lane.b32.xlu0 %v497, 6
        %v534 = vpop.permute.xlu0 %533
        %535 = vrot.lane.b32.xlu0 %v496, 6
        %v536 = vpop.permute.xlu0 %535
        %537 = vrot.lane.b32.xlu0 %v500, 6
        %v538 = vpop.permute.xlu0 %537
        %539 = vrot.lane.b32.xlu0 %v499, 6
        %v540 = vpop.permute.xlu0 %539
        %563 = vrot.lane.b32.xlu0 %v332, 9
        %v564 = vpop.permute.xlu0 %563
        %565 = vrot.lane.b32.xlu0 %v333, 9
        %v566 = vpop.permute.xlu0 %565
        %567 = vrot.lane.b32.xlu0 %v334, 9
        %v568 = vpop.permute.xlu0 %567
        %569 = vrot.lane.b32.xlu0 %v335, 9
        %v570 = vpop.permute.xlu0 %569
        %571 = vrot.lane.b32.xlu0 %v336, 9
        %v572 = vpop.permute.xlu0 %571
        %573 = vrot.lane.b32.xlu0 %v337, 9
        %v574 = vpop.permute.xlu0 %573
        %575 = vrot.lane.b32.xlu0 %v338, 9
        %v576 = vpop.permute.xlu0 %575
        %577 = vrot.lane.b32.xlu0 %v339, 9
        %v578 = vpop.permute.xlu0 %577
        %579 = vrot.lane.b32.xlu0 %v340, 9
        %v580 = vpop.permute.xlu0 %579
        %581 = vrot.lane.b32.xlu0 %v341, 9
        %v582 = vpop.permute.xlu0 %581
        %583 = vrot.lane.b32.xlu0 %v342, 9
        %v584 = vpop.permute.xlu0 %583
        %585 = vrot.lane.b32.xlu0 %v343, 9
        %v586 = vpop.permute.xlu0 %585
        %587 = vrot.lane.b32.xlu0 %v344, 9
        %v588 = vpop.permute.xlu0 %587
        %589 = vrot.lane.b32.xlu0 %v345, 9
        %v590 = vpop.permute.xlu0 %589
        %591 = vrot.lane.b32.xlu0 %v346, 9
        %v592 = vpop.permute.xlu0 %591
        %593 = vrot.lane.b32.xlu0 %v347, 9
        %v594 = vpop.permute.xlu0 %593
        %595 = vrot.lane.b32.xlu0 %v348, 9
        %v596 = vpop.permute.xlu0 %595
        %597 = vrot.lane.b32.xlu0 %v349, 9
        %v598 = vpop.permute.xlu0 %597
        %599 = vrot.lane.b32.xlu0 %v350, 9
        %v600 = vpop.permute.xlu0 %599
        %601 = vrot.lane.b32.xlu0 %v351, 9
        %v602 = vpop.permute.xlu0 %601
        %v623 = vrot.slane %v350, 1
        %v624 = vrot.slane %v351, 1
        %v625 = vsel %vm379, %v623, %v624
        %626 = vrot.lane.b32.xlu0 %v385, 12
        %v627 = vpop.permute.xlu0 %626
        %628 = vrot.lane.b32.xlu0 %v384, 12
        %v629 = vpop.permute.xlu0 %628
        %630 = vrot.lane.b32.xlu0 %v388, 12
        %v631 = vpop.permute.xlu0 %630
        %632 = vrot.lane.b32.xlu0 %v387, 12
        %v633 = vpop.permute.xlu0 %632
        %634 = vrot.lane.b32.xlu0 %v391, 12
        %v635 = vpop.permute.xlu0 %634
        %636 = vrot.lane.b32.xlu0 %v390, 12
        %v637 = vpop.permute.xlu0 %636
        %638 = vrot.lane.b32.xlu0 %v394, 12
        %v639 = vpop.permute.xlu0 %638
        %640 = vrot.lane.b32.xlu0 %v393, 12
        %v641 = vpop.permute.xlu0 %640
        %642 = vrot.lane.b32.xlu0 %v397, 12
        %v643 = vpop.permute.xlu0 %642
        %644 = vrot.lane.b32.xlu0 %v396, 12
        %v645 = vpop.permute.xlu0 %644
        %646 = vrot.lane.b32.xlu0 %v400, 12
        %v647 = vpop.permute.xlu0 %646
        %648 = vrot.lane.b32.xlu0 %v399, 12
        %v649 = vpop.permute.xlu0 %648
        %650 = vrot.lane.b32.xlu0 %v403, 12
        %v651 = vpop.permute.xlu0 %650
        %652 = vrot.lane.b32.xlu0 %v402, 12
        %v653 = vpop.permute.xlu0 %652
        %654 = vrot.lane.b32.xlu0 %v406, 12
        %v655 = vpop.permute.xlu0 %654
        %656 = vrot.lane.b32.xlu0 %v405, 12
        %v657 = vpop.permute.xlu0 %656
        %658 = vrot.lane.b32.xlu0 %v409, 12
        %v659 = vpop.permute.xlu0 %658
        %660 = vrot.lane.b32.xlu0 %v408, 12
        %v661 = vpop.permute.xlu0 %660
        %662 = vrot.lane.b32.xlu0 %v625, 12
        %v663 = vpop.permute.xlu0 %662
        %664 = vrot.lane.b32.xlu0 %v624, 12
        %v665 = vpop.permute.xlu0 %664
        %v686 = vrot.slane %v350, 2
        %v687 = vrot.slane %v351, 2
        %v688 = vsel %vm470, %v686, %v687
        %689 = vrot.lane.b32.xlu0 %v476, 15
        %v690 = vpop.permute.xlu0 %689
        %691 = vrot.lane.b32.xlu0 %v475, 15
        %v692 = vpop.permute.xlu0 %691
        %693 = vrot.lane.b32.xlu0 %v479, 15
        %v694 = vpop.permute.xlu0 %693
        %695 = vrot.lane.b32.xlu0 %v478, 15
        %v696 = vpop.permute.xlu0 %695
        %697 = vrot.lane.b32.xlu0 %v482, 15
        %v698 = vpop.permute.xlu0 %697
        %699 = vrot.lane.b32.xlu0 %v481, 15
        %v700 = vpop.permute.xlu0 %699
        %701 = vrot.lane.b32.xlu0 %v485, 15
        %v702 = vpop.permute.xlu0 %701
        %703 = vrot.lane.b32.xlu0 %v484, 15
        %v704 = vpop.permute.xlu0 %703
        %705 = vrot.lane.b32.xlu0 %v488, 15
        %v706 = vpop.permute.xlu0 %705
        %707 = vrot.lane.b32.xlu0 %v487, 15
        %v708 = vpop.permute.xlu0 %707
        %709 = vrot.lane.b32.xlu0 %v491, 15
        %v710 = vpop.permute.xlu0 %709
        %711 = vrot.lane.b32.xlu0 %v490, 15
        %v712 = vpop.permute.xlu0 %711
        %713 = vrot.lane.b32.xlu0 %v494, 15
        %v714 = vpop.permute.xlu0 %713
        %715 = vrot.lane.b32.xlu0 %v493, 15
        %v716 = vpop.permute.xlu0 %715
        %717 = vrot.lane.b32.xlu0 %v497, 15
        %v718 = vpop.permute.xlu0 %717
        %719 = vrot.lane.b32.xlu0 %v496, 15
        %v720 = vpop.permute.xlu0 %719
        %721 = vrot.lane.b32.xlu0 %v500, 15
        %v722 = vpop.permute.xlu0 %721
        %723 = vrot.lane.b32.xlu0 %v499, 15
        %v724 = vpop.permute.xlu0 %723
        %725 = vrot.lane.b32.xlu0 %v688, 15
        %v726 = vpop.permute.xlu0 %725
        %727 = vrot.lane.b32.xlu0 %v687, 15
        %v728 = vpop.permute.xlu0 %727
        %751 = vrot.lane.b32.xlu0 %v334, 18
        %v752 = vpop.permute.xlu0 %751
        %753 = vrot.lane.b32.xlu0 %v335, 18
        %v754 = vpop.permute.xlu0 %753
        %755 = vrot.lane.b32.xlu0 %v336, 18
        %v756 = vpop.permute.xlu0 %755
        %757 = vrot.lane.b32.xlu0 %v337, 18
        %v758 = vpop.permute.xlu0 %757
        %759 = vrot.lane.b32.xlu0 %v338, 18
        %v760 = vpop.permute.xlu0 %759
        %761 = vrot.lane.b32.xlu0 %v339, 18
        %v762 = vpop.permute.xlu0 %761
        %763 = vrot.lane.b32.xlu0 %v340, 18
        %v764 = vpop.permute.xlu0 %763
        %765 = vrot.lane.b32.xlu0 %v341, 18
        %v766 = vpop.permute.xlu0 %765
        %767 = vrot.lane.b32.xlu0 %v342, 18
        %v768 = vpop.permute.xlu0 %767
        %769 = vrot.lane.b32.xlu0 %v343, 18
        %v770 = vpop.permute.xlu0 %769
        %771 = vrot.lane.b32.xlu0 %v344, 18
        %v772 = vpop.permute.xlu0 %771
        %773 = vrot.lane.b32.xlu0 %v345, 18
        %v774 = vpop.permute.xlu0 %773
        %775 = vrot.lane.b32.xlu0 %v346, 18
        %v776 = vpop.permute.xlu0 %775
        %777 = vrot.lane.b32.xlu0 %v347, 18
        %v778 = vpop.permute.xlu0 %777
        %779 = vrot.lane.b32.xlu0 %v348, 18
        %v780 = vpop.permute.xlu0 %779
        %781 = vrot.lane.b32.xlu0 %v349, 18
        %v782 = vpop.permute.xlu0 %781
        %783 = vrot.lane.b32.xlu0 %v350, 18
        %v784 = vpop.permute.xlu0 %783
        %785 = vrot.lane.b32.xlu0 %v351, 18
        %v786 = vpop.permute.xlu0 %785
        %787 = vrot.lane.b32.xlu0 %v352, 18
        %v788 = vpop.permute.xlu0 %787
        %789 = vrot.lane.b32.xlu0 %v353, 18
        %v790 = vpop.permute.xlu0 %789
        %v811 = vrot.slane %v352, 1
        %v812 = vrot.slane %v353, 1
        %v813 = vsel %vm379, %v811, %v812
        %814 = vrot.lane.b32.xlu0 %v388, 21
        %v815 = vpop.permute.xlu0 %814
        %816 = vrot.lane.b32.xlu0 %v387, 21
        %v817 = vpop.permute.xlu0 %816
        %818 = vrot.lane.b32.xlu0 %v391, 21
        %v819 = vpop.permute.xlu0 %818
        %820 = vrot.lane.b32.xlu0 %v390, 21
        %v821 = vpop.permute.xlu0 %820
        %822 = vrot.lane.b32.xlu0 %v394, 21
        %v823 = vpop.permute.xlu0 %822
        %824 = vrot.lane.b32.xlu0 %v393, 21
        %v825 = vpop.permute.xlu0 %824
        %826 = vrot.lane.b32.xlu0 %v397, 21
        %v827 = vpop.permute.xlu0 %826
        %828 = vrot.lane.b32.xlu0 %v396, 21
        %v829 = vpop.permute.xlu0 %828
        %830 = vrot.lane.b32.xlu0 %v400, 21
        %v831 = vpop.permute.xlu0 %830
        %832 = vrot.lane.b32.xlu0 %v399, 21
        %v833 = vpop.permute.xlu0 %832
        %834 = vrot.lane.b32.xlu0 %v403, 21
        %v835 = vpop.permute.xlu0 %834
        %836 = vrot.lane.b32.xlu0 %v402, 21
        %v837 = vpop.permute.xlu0 %836
        %838 = vrot.lane.b32.xlu0 %v406, 21
        %v839 = vpop.permute.xlu0 %838
        %840 = vrot.lane.b32.xlu0 %v405, 21
        %v841 = vpop.permute.xlu0 %840
        %842 = vrot.lane.b32.xlu0 %v409, 21
        %v843 = vpop.permute.xlu0 %842
        %844 = vrot.lane.b32.xlu0 %v408, 21
        %v845 = vpop.permute.xlu0 %844
        %846 = vrot.lane.b32.xlu0 %v625, 21
        %v847 = vpop.permute.xlu0 %846
        %848 = vrot.lane.b32.xlu0 %v624, 21
        %v849 = vpop.permute.xlu0 %848
        %850 = vrot.lane.b32.xlu0 %v813, 21
        %v851 = vpop.permute.xlu0 %850
        %852 = vrot.lane.b32.xlu0 %v812, 21
        %v853 = vpop.permute.xlu0 %852
        %v874 = vrot.slane %v352, 2
        %v875 = vrot.slane %v353, 2
        %v876 = vsel %vm470, %v874, %v875
        %877 = vrot.lane.b32.xlu0 %v479, 24
        %v878 = vpop.permute.xlu0 %877
        %879 = vrot.lane.b32.xlu0 %v478, 24
        %v880 = vpop.permute.xlu0 %879
        %881 = vrot.lane.b32.xlu0 %v482, 24
        %v882 = vpop.permute.xlu0 %881
        %883 = vrot.lane.b32.xlu0 %v481, 24
        %v884 = vpop.permute.xlu0 %883
        %885 = vrot.lane.b32.xlu0 %v485, 24
        %v886 = vpop.permute.xlu0 %885
        %887 = vrot.lane.b32.xlu0 %v484, 24
        %v888 = vpop.permute.xlu0 %887
        %889 = vrot.lane.b32.xlu0 %v488, 24
        %v890 = vpop.permute.xlu0 %889
        %891 = vrot.lane.b32.xlu0 %v487, 24
        %v892 = vpop.permute.xlu0 %891
        %893 = vrot.lane.b32.xlu0 %v491, 24
        %v894 = vpop.permute.xlu0 %893
        %895 = vrot.lane.b32.xlu0 %v490, 24
        %v896 = vpop.permute.xlu0 %895
        %897 = vrot.lane.b32.xlu0 %v494, 24
        %v898 = vpop.permute.xlu0 %897
        %899 = vrot.lane.b32.xlu0 %v493, 24
        %v900 = vpop.permute.xlu0 %899
        %901 = vrot.lane.b32.xlu0 %v497, 24
        %v902 = vpop.permute.xlu0 %901
        %903 = vrot.lane.b32.xlu0 %v496, 24
        %v904 = vpop.permute.xlu0 %903
        %905 = vrot.lane.b32.xlu0 %v500, 24
        %v906 = vpop.permute.xlu0 %905
        %907 = vrot.lane.b32.xlu0 %v499, 24
        %v908 = vpop.permute.xlu0 %907
        %909 = vrot.lane.b32.xlu0 %v688, 24
        %v910 = vpop.permute.xlu0 %909
        %911 = vrot.lane.b32.xlu0 %v687, 24
        %v912 = vpop.permute.xlu0 %911
        %913 = vrot.lane.b32.xlu0 %v876, 24
        %v914 = vpop.permute.xlu0 %913
        %915 = vrot.lane.b32.xlu0 %v875, 24
        %v916 = vpop.permute.xlu0 %915
        %vm937 = vcmask 23552
        %v938 = vsel %vm937, %v330, %v411
        %v939 = vsel %vm937, %v331, %v413
        %v940 = vsel %vm937, %v332, %v415
        %v941 = vsel %vm937, %v333, %v417
        %v942 = vsel %vm937, %v334, %v419
        %v943 = vsel %vm937, %v335, %v421
        %v944 = vsel %vm937, %v336, %v423
        %v945 = vsel %vm937, %v337, %v425
        %v946 = vsel %vm937, %v338, %v427
        %v947 = vsel %vm937, %v339, %v429
        %v948 = vsel %vm937, %v340, %v431
        %v949 = vsel %vm937, %v341, %v433
        %v950 = vsel %vm937, %v342, %v435
        %v951 = vsel %vm937, %v343, %v437
        %v952 = vsel %vm937, %v344, %v439
        %v953 = vsel %vm937, %v345, %v441
        %v954 = vsel %vm937, %v346, %v443
        %v955 = vsel %vm937, %v347, %v445
        %v956 = vsel %vm937, %v348, %v447
        %v957 = vsel %vm937, %v349, %v449
        %vm958 = vcmask 48128
        %v959 = vsel %vm958, %v938, %v502
        %v960 = vsel %vm958, %v939, %v504
        %v961 = vsel %vm958, %v940, %v506
        %v962 = vsel %vm958, %v941, %v508
        %v963 = vsel %vm958, %v942, %v510
        %v964 = vsel %vm958, %v943, %v512
        %v965 = vsel %vm958, %v944, %v514
        %v966 = vsel %vm958, %v945, %v516
        %v967 = vsel %vm958, %v946, %v518
        %v968 = vsel %vm958, %v947, %v520
        %v969 = vsel %vm958, %v948, %v522
        %v970 = vsel %vm958, %v949, %v524
        %v971 = vsel %vm958, %v950, %v526
        %v972 = vsel %vm958, %v951, %v528
        %v973 = vsel %vm958, %v952, %v530
        %v974 = vsel %vm958, %v953, %v532
        %v975 = vsel %vm958, %v954, %v534
        %v976 = vsel %vm958, %v955, %v536
        %v977 = vsel %vm958, %v956, %v538
        %v978 = vsel %vm958, %v957, %v540
        %vm979 = vcmask 72704
        %v980 = vsel %vm979, %v959, %v564
        %v981 = vsel %vm979, %v960, %v566
        %v982 = vsel %vm979, %v961, %v568
        %v983 = vsel %vm979, %v962, %v570
        %v984 = vsel %vm979, %v963, %v572
        %v985 = vsel %vm979, %v964, %v574
        %v986 = vsel %vm979, %v965, %v576
        %v987 = vsel %vm979, %v966, %v578
        %v988 = vsel %vm979, %v967, %v580
        %v989 = vsel %vm979, %v968, %v582
        %v990 = vsel %vm979, %v969, %v584
        %v991 = vsel %vm979, %v970, %v586
        %v992 = vsel %vm979, %v971, %v588
        %v993 = vsel %vm979, %v972, %v590
        %v994 = vsel %vm979, %v973, %v592
        %v995 = vsel %vm979, %v974, %v594
        %v996 = vsel %vm979, %v975, %v596
        %v997 = vsel %vm979, %v976, %v598
        %v998 = vsel %vm979, %v977, %v600
        %v999 = vsel %vm979, %v978, %v602
        %vm1000 = vcmask 97280
        %v1001 = vsel %vm1000, %v980, %v627
        %v1002 = vsel %vm1000, %v981, %v629
        %v1003 = vsel %vm1000, %v982, %v631
        %v1004 = vsel %vm1000, %v983, %v633
        %v1005 = vsel %vm1000, %v984, %v635
        %v1006 = vsel %vm1000, %v985, %v637
        %v1007 = vsel %vm1000, %v986, %v639
        %v1008 = vsel %vm1000, %v987, %v641
        %v1009 = vsel %vm1000, %v988, %v643
        %v1010 = vsel %vm1000, %v989, %v645
        %v1011 = vsel %vm1000, %v990, %v647
        %v1012 = vsel %vm1000, %v991, %v649
        %v1013 = vsel %vm1000, %v992, %v651
        %v1014 = vsel %vm1000, %v993, %v653
        %v1015 = vsel %vm1000, %v994, %v655
        %v1016 = vsel %vm1000, %v995, %v657
        %v1017 = vsel %vm1000, %v996, %v659
        %v1018 = vsel %vm1000, %v997, %v661
        %v1019 = vsel %vm1000, %v998, %v663
        %v1020 = vsel %vm1000, %v999, %v665
        %vm1021 = vcmask 121856
        %v1022 = vsel %vm1021, %v1001, %v690
        %v1023 = vsel %vm1021, %v1002, %v692
        %v1024 = vsel %vm1021, %v1003, %v694
        %v1025 = vsel %vm1021, %v1004, %v696
        %v1026 = vsel %vm1021, %v1005, %v698
        %v1027 = vsel %vm1021, %v1006, %v700
        %v1028 = vsel %vm1021, %v1007, %v702
        %v1029 = vsel %vm1021, %v1008, %v704
        %v1030 = vsel %vm1021, %v1009, %v706
        %v1031 = vsel %vm1021, %v1010, %v708
        %v1032 = vsel %vm1021, %v1011, %v710
        %v1033 = vsel %vm1021, %v1012, %v712
        %v1034 = vsel %vm1021, %v1013, %v714
        %v1035 = vsel %vm1021, %v1014, %v716
        %v1036 = vsel %vm1021, %v1015, %v718
        %v1037 = vsel %vm1021, %v1016, %v720
        %v1038 = vsel %vm1021, %v1017, %v722
        %v1039 = vsel %vm1021, %v1018, %v724
        %v1040 = vsel %vm1021, %v1019, %v726
        %v1041 = vsel %vm1021, %v1020, %v728
        %vm1042 = vcmask 146432
        %v1043 = vsel %vm1042, %v1022, %v752
        %v1044 = vsel %vm1042, %v1023, %v754
        %v1045 = vsel %vm1042, %v1024, %v756
        %v1046 = vsel %vm1042, %v1025, %v758
        %v1047 = vsel %vm1042, %v1026, %v760
        %v1048 = vsel %vm1042, %v1027, %v762
        %v1049 = vsel %vm1042, %v1028, %v764
        %v1050 = vsel %vm1042, %v1029, %v766
        %v1051 = vsel %vm1042, %v1030, %v768
        %v1052 = vsel %vm1042, %v1031, %v770
        %v1053 = vsel %vm1042, %v1032, %v772
        %v1054 = vsel %vm1042, %v1033, %v774
        %v1055 = vsel %vm1042, %v1034, %v776
        %v1056 = vsel %vm1042, %v1035, %v778
        %v1057 = vsel %vm1042, %v1036, %v780
        %v1058 = vsel %vm1042, %v1037, %v782
        %v1059 = vsel %vm1042, %v1038, %v784
        %v1060 = vsel %vm1042, %v1039, %v786
        %v1061 = vsel %vm1042, %v1040, %v788
        %v1062 = vsel %vm1042, %v1041, %v790
        %vm1063 = vcmask 171008
        %v1064 = vsel %vm1063, %v1043, %v815
        %v1065 = vsel %vm1063, %v1044, %v817
        %v1066 = vsel %vm1063, %v1045, %v819
        %v1067 = vsel %vm1063, %v1046, %v821
        %v1068 = vsel %vm1063, %v1047, %v823
        %v1069 = vsel %vm1063, %v1048, %v825
        %v1070 = vsel %vm1063, %v1049, %v827
        %v1071 = vsel %vm1063, %v1050, %v829
        %v1072 = vsel %vm1063, %v1051, %v831
        %v1073 = vsel %vm1063, %v1052, %v833
        %v1074 = vsel %vm1063, %v1053, %v835
        %v1075 = vsel %vm1063, %v1054, %v837
        %v1076 = vsel %vm1063, %v1055, %v839
        %v1077 = vsel %vm1063, %v1056, %v841
        %v1078 = vsel %vm1063, %v1057, %v843
        %v1079 = vsel %vm1063, %v1058, %v845
        %v1080 = vsel %vm1063, %v1059, %v847
        %v1081 = vsel %vm1063, %v1060, %v849
        %v1082 = vsel %vm1063, %v1061, %v851
        %v1083 = vsel %vm1063, %v1062, %v853
        %vm1084 = vcmask 195584
        %v1085 = vsel %vm1084, %v1064, %v878
        %v1086 = vsel %vm1084, %v1065, %v880
        %v1087 = vsel %vm1084, %v1066, %v882
        %v1088 = vsel %vm1084, %v1067, %v884
        %v1089 = vsel %vm1084, %v1068, %v886
        %v1090 = vsel %vm1084, %v1069, %v888
        %v1091 = vsel %vm1084, %v1070, %v890
        %v1092 = vsel %vm1084, %v1071, %v892
        %v1093 = vsel %vm1084, %v1072, %v894
        %v1094 = vsel %vm1084, %v1073, %v896
        %v1095 = vsel %vm1084, %v1074, %v898
        %v1096 = vsel %vm1084, %v1075, %v900
        %v1097 = vsel %vm1084, %v1076, %v902
        %v1098 = vsel %vm1084, %v1077, %v904
        %v1099 = vsel %vm1084, %v1078, %v906
        %v1100 = vsel %vm1084, %v1079, %v908
        %v1101 = vsel %vm1084, %v1080, %v910
        %v1102 = vsel %vm1084, %v1081, %v912
        %v1103 = vsel %vm1084, %v1082, %v914
        %v1104 = vsel %vm1084, %v1083, %v916
        %v1125 = vcombine.high %v1085, %v1085
        %v1127 = vunpack.c.l.s4 1983009808
        %v1128 = vunpack.c.0.s8 %v1127
        %v1129 = vlaneseq
        %v1130 = vshrl.u32 %v1129, 7
        %v1131 = vsub.s32 %v1128, %v1130
        %v1132 = vrot.slane %v1085, %v1131
        %v1134 = vunpack.c.l.s4 1983009808
        %v1135 = vunpack.c.0.s8 %v1134
        %v1136 = vlaneseq
        %v1137 = vshrl.u32 %v1136, 7
        %v1138 = vsub.s32 %v1135, %v1137
        %v1139 = vrot.slane %v1125, %v1138
        %v1140 = vcombine.high %v1132, %v1132
        %v1141 = vcombine.high %v1139, %v1139
        %v1143 = vunpack.c.l.s4 1983009808
        %v1144 = vunpack.c.0.s8 %v1143
        %v1145 = vlaneseq
        %v1146 = vshrl.u32 %v1145, 7
        %v1147 = vsub.s32 %v1144, %v1146
        %v1148 = vrot.slane %v1086, %v1147
        %v1149 = vcombine.high %v1087, %v1087
        %v1151 = vunpack.c.l.s4 1983009808
        %v1152 = vunpack.c.0.s8 %v1151
        %v1153 = vlaneseq
        %v1154 = vshrl.u32 %v1153, 7
        %v1155 = vsub.s32 %v1152, %v1154
        %v1156 = vrot.slane %v1087, %v1155
        %v1158 = vunpack.c.l.s4 1983009808
        %v1159 = vunpack.c.0.s8 %v1158
        %v1160 = vlaneseq
        %v1161 = vshrl.u32 %v1160, 7
        %v1162 = vsub.s32 %v1159, %v1161
        %v1163 = vrot.slane %v1149, %v1162
        %v1164 = vcombine.high %v1156, %v1156
        %v1165 = vcombine.high %v1163, %v1163
        %v1167 = vunpack.c.l.s4 1983009808
        %v1168 = vunpack.c.0.s8 %v1167
        %v1169 = vlaneseq
        %v1170 = vshrl.u32 %v1169, 7
        %v1171 = vsub.s32 %v1168, %v1170
        %v1172 = vrot.slane %v1088, %v1171
        %v1173 = vcombine.high %v1089, %v1089
        %v1175 = vunpack.c.l.s4 1983009808
        %v1176 = vunpack.c.0.s8 %v1175
        %v1177 = vlaneseq
        %v1178 = vshrl.u32 %v1177, 7
        %v1179 = vsub.s32 %v1176, %v1178
        %v1180 = vrot.slane %v1089, %v1179
        %v1182 = vunpack.c.l.s4 1983009808
        %v1183 = vunpack.c.0.s8 %v1182
        %v1184 = vlaneseq
        %v1185 = vshrl.u32 %v1184, 7
        %v1186 = vsub.s32 %v1183, %v1185
        %v1187 = vrot.slane %v1173, %v1186
        %v1188 = vcombine.high %v1180, %v1180
        %v1189 = vcombine.high %v1187, %v1187
        %v1191 = vunpack.c.l.s4 1983009808
        %v1192 = vunpack.c.0.s8 %v1191
        %v1193 = vlaneseq
        %v1194 = vshrl.u32 %v1193, 7
        %v1195 = vsub.s32 %v1192, %v1194
        %v1196 = vrot.slane %v1090, %v1195
        %v1197 = vcombine.high %v1091, %v1091
        %v1199 = vunpack.c.l.s4 1983009808
        %v1200 = vunpack.c.0.s8 %v1199
        %v1201 = vlaneseq
        %v1202 = vshrl.u32 %v1201, 7
        %v1203 = vsub.s32 %v1200, %v1202
        %v1204 = vrot.slane %v1091, %v1203
        %v1206 = vunpack.c.l.s4 1983009808
        %v1207 = vunpack.c.0.s8 %v1206
        %v1208 = vlaneseq
        %v1209 = vshrl.u32 %v1208, 7
        %v1210 = vsub.s32 %v1207, %v1209
        %v1211 = vrot.slane %v1197, %v1210
        %v1212 = vcombine.high %v1204, %v1204
        %v1213 = vcombine.high %v1211, %v1211
        %v1215 = vunpack.c.l.s4 1983009808
        %v1216 = vunpack.c.0.s8 %v1215
        %v1217 = vlaneseq
        %v1218 = vshrl.u32 %v1217, 7
        %v1219 = vsub.s32 %v1216, %v1218
        %v1220 = vrot.slane %v1092, %v1219
        %v1221 = vcombine.high %v1093, %v1093
        %v1223 = vunpack.c.l.s4 1983009808
        %v1224 = vunpack.c.0.s8 %v1223
        %v1225 = vlaneseq
        %v1226 = vshrl.u32 %v1225, 7
        %v1227 = vsub.s32 %v1224, %v1226
        %v1228 = vrot.slane %v1093, %v1227
        %v1230 = vunpack.c.l.s4 1983009808
        %v1231 = vunpack.c.0.s8 %v1230
        %v1232 = vlaneseq
        %v1233 = vshrl.u32 %v1232, 7
        %v1234 = vsub.s32 %v1231, %v1233
        %v1235 = vrot.slane %v1221, %v1234
        %v1236 = vcombine.high %v1228, %v1228
        %v1237 = vcombine.high %v1235, %v1235
        %v1239 = vunpack.c.l.s4 1983009808
        %v1240 = vunpack.c.0.s8 %v1239
        %v1241 = vlaneseq
        %v1242 = vshrl.u32 %v1241, 7
        %v1243 = vsub.s32 %v1240, %v1242
        %v1244 = vrot.slane %v1094, %v1243
        %v1245 = vcombine.high %v1095, %v1095
        %v1247 = vunpack.c.l.s4 1983009808
        %v1248 = vunpack.c.0.s8 %v1247
        %v1249 = vlaneseq
        %v1250 = vshrl.u32 %v1249, 7
        %v1251 = vsub.s32 %v1248, %v1250
        %v1252 = vrot.slane %v1095, %v1251
        %v1254 = vunpack.c.l.s4 1983009808
        %v1255 = vunpack.c.0.s8 %v1254
        %v1256 = vlaneseq
        %v1257 = vshrl.u32 %v1256, 7
        %v1258 = vsub.s32 %v1255, %v1257
        %v1259 = vrot.slane %v1245, %v1258
        %v1260 = vcombine.high %v1252, %v1252
        %v1261 = vcombine.high %v1259, %v1259
        %v1263 = vunpack.c.l.s4 1983009808
        %v1264 = vunpack.c.0.s8 %v1263
        %v1265 = vlaneseq
        %v1266 = vshrl.u32 %v1265, 7
        %v1267 = vsub.s32 %v1264, %v1266
        %v1268 = vrot.slane %v1096, %v1267
        %v1269 = vcombine.high %v1097, %v1097
        %v1271 = vunpack.c.l.s4 1983009808
        %v1272 = vunpack.c.0.s8 %v1271
        %v1273 = vlaneseq
        %v1274 = vshrl.u32 %v1273, 7
        %v1275 = vsub.s32 %v1272, %v1274
        %v1276 = vrot.slane %v1097, %v1275
        %v1278 = vunpack.c.l.s4 1983009808
        %v1279 = vunpack.c.0.s8 %v1278
        %v1280 = vlaneseq
        %v1281 = vshrl.u32 %v1280, 7
        %v1282 = vsub.s32 %v1279, %v1281
        %v1283 = vrot.slane %v1269, %v1282
        %v1284 = vcombine.high %v1276, %v1276
        %v1285 = vcombine.high %v1283, %v1283
        %v1287 = vunpack.c.l.s4 1983009808
        %v1288 = vunpack.c.0.s8 %v1287
        %v1289 = vlaneseq
        %v1290 = vshrl.u32 %v1289, 7
        %v1291 = vsub.s32 %v1288, %v1290
        %v1292 = vrot.slane %v1098, %v1291
        %v1293 = vcombine.high %v1099, %v1099
        %v1295 = vunpack.c.l.s4 1983009808
        %v1296 = vunpack.c.0.s8 %v1295
        %v1297 = vlaneseq
        %v1298 = vshrl.u32 %v1297, 7
        %v1299 = vsub.s32 %v1296, %v1298
        %v1300 = vrot.slane %v1099, %v1299
        %v1302 = vunpack.c.l.s4 1983009808
        %v1303 = vunpack.c.0.s8 %v1302
        %v1304 = vlaneseq
        %v1305 = vshrl.u32 %v1304, 7
        %v1306 = vsub.s32 %v1303, %v1305
        %v1307 = vrot.slane %v1293, %v1306
        %v1308 = vcombine.high %v1300, %v1300
        %v1309 = vcombine.high %v1307, %v1307
        %v1311 = vunpack.c.l.s4 1983009808
        %v1312 = vunpack.c.0.s8 %v1311
        %v1313 = vlaneseq
        %v1314 = vshrl.u32 %v1313, 7
        %v1315 = vsub.s32 %v1312, %v1314
        %v1316 = vrot.slane %v1100, %v1315
        %v1317 = vcombine.high %v1101, %v1101
        %v1319 = vunpack.c.l.s4 1983009808
        %v1320 = vunpack.c.0.s8 %v1319
        %v1321 = vlaneseq
        %v1322 = vshrl.u32 %v1321, 7
        %v1323 = vsub.s32 %v1320, %v1322
        %v1324 = vrot.slane %v1101, %v1323
        %v1326 = vunpack.c.l.s4 1983009808
        %v1327 = vunpack.c.0.s8 %v1326
        %v1328 = vlaneseq
        %v1329 = vshrl.u32 %v1328, 7
        %v1330 = vsub.s32 %v1327, %v1329
        %v1331 = vrot.slane %v1317, %v1330
        %v1332 = vcombine.high %v1324, %v1324
        %v1333 = vcombine.high %v1331, %v1331
        %v1335 = vunpack.c.l.s4 1983009808
        %v1336 = vunpack.c.0.s8 %v1335
        %v1337 = vlaneseq
        %v1338 = vshrl.u32 %v1337, 7
        %v1339 = vsub.s32 %v1336, %v1338
        %v1340 = vrot.slane %v1102, %v1339
        %v1341 = vcombine.high %v1103, %v1103
        %v1343 = vunpack.c.l.s4 1983009808
        %v1344 = vunpack.c.0.s8 %v1343
        %v1345 = vlaneseq
        %v1346 = vshrl.u32 %v1345, 7
        %v1347 = vsub.s32 %v1344, %v1346
        %v1348 = vrot.slane %v1103, %v1347
        %v1350 = vunpack.c.l.s4 1983009808
        %v1351 = vunpack.c.0.s8 %v1350
        %v1352 = vlaneseq
        %v1353 = vshrl.u32 %v1352, 7
        %v1354 = vsub.s32 %v1351, %v1353
        %v1355 = vrot.slane %v1341, %v1354
        %v1356 = vcombine.high %v1348, %v1348
        %v1357 = vcombine.high %v1355, %v1355
        %v1359 = vunpack.c.l.s4 1983009808
        %v1360 = vunpack.c.0.s8 %v1359
        %v1361 = vlaneseq
        %v1362 = vshrl.u32 %v1361, 7
        %v1363 = vsub.s32 %v1360, %v1362
        %v1364 = vrot.slane %v1104, %v1363
        %v1366 = vlaneseq
        %v1367 = vshrl.u32 %v1366, 7
        %v1368 = vsub.s32 0, %v1367
        %v1369 = vrot.slane %v358, %v1368
        %v1371 = vcombine.low %v1132, %v1140
        %v1372 = vcombine.low %v1139, %v1141
        %v1374 = vunpack.c.l.s4 1983009808
        %v1375 = vunpack.c.0.s8 %v1374
        %v1376 = vlaneseq
        %v1377 = vshrl.u32 %v1376, 7
        %v1378 = vsub.s32 %v1375, %v1377
        %v1379 = vrot.slane %v1371, %v1378
        %v1381 = vunpack.c.l.s4 1983009808
        %v1382 = vunpack.c.0.s8 %v1381
        %v1383 = vlaneseq
        %v1384 = vshrl.u32 %v1383, 7
        %v1385 = vsub.s32 %v1382, %v1384
        %v1386 = vrot.slane %v1372, %v1385
        %v1387 = vcombine.low %v1379, %v1386
        %v1388 = vcombine.low %v1148, %v1156
        %v1389 = vcombine.low %v1164, %v1163
        %v1391 = vunpack.c.l.s4 1983009808
        %v1392 = vunpack.c.0.s8 %v1391
        %v1393 = vlaneseq
        %v1394 = vshrl.u32 %v1393, 7
        %v1395 = vsub.s32 %v1392, %v1394
        %v1396 = vrot.slane %v1388, %v1395
        %v1398 = vunpack.c.l.s4 1983009808
        %v1399 = vunpack.c.0.s8 %v1398
        %v1400 = vlaneseq
        %v1401 = vshrl.u32 %v1400, 7
        %v1402 = vsub.s32 %v1399, %v1401
        %v1403 = vrot.slane %v1389, %v1402
        %v1404 = vcombine.low %v1396, %v1403
        %v1405 = vcombine.low %v1165, %v1172
        %v1406 = vcombine.low %v1180, %v1188
        %v1408 = vunpack.c.l.s4 1983009808
        %v1409 = vunpack.c.0.s8 %v1408
        %v1410 = vlaneseq
        %v1411 = vshrl.u32 %v1410, 7
        %v1412 = vsub.s32 %v1409, %v1411
        %v1413 = vrot.slane %v1405, %v1412
        %v1415 = vunpack.c.l.s4 1983009808
        %v1416 = vunpack.c.0.s8 %v1415
        %v1417 = vlaneseq
        %v1418 = vshrl.u32 %v1417, 7
        %v1419 = vsub.s32 %v1416, %v1418
        %v1420 = vrot.slane %v1406, %v1419
        %v1421 = vcombine.low %v1413, %v1420
        %v1422 = vcombine.low %v1187, %v1189
        %v1423 = vcombine.low %v1196, %v1204
        %v1425 = vunpack.c.l.s4 1983009808
        %v1426 = vunpack.c.0.s8 %v1425
        %v1427 = vlaneseq
        %v1428 = vshrl.u32 %v1427, 7
        %v1429 = vsub.s32 %v1426, %v1428
        %v1430 = vrot.slane %v1422, %v1429
        %v1432 = vunpack.c.l.s4 1983009808
        %v1433 = vunpack.c.0.s8 %v1432
        %v1434 = vlaneseq
        %v1435 = vshrl.u32 %v1434, 7
        %v1436 = vsub.s32 %v1433, %v1435
        %v1437 = vrot.slane %v1423, %v1436
        %v1438 = vcombine.low %v1430, %v1437
        %v1439 = vcombine.low %v1212, %v1211
        %v1440 = vcombine.low %v1213, %v1220
        %v1442 = vunpack.c.l.s4 1983009808
        %v1443 = vunpack.c.0.s8 %v1442
        %v1444 = vlaneseq
        %v1445 = vshrl.u32 %v1444, 7
        %v1446 = vsub.s32 %v1443, %v1445
        %v1447 = vrot.slane %v1439, %v1446
        %v1449 = vunpack.c.l.s4 1983009808
        %v1450 = vunpack.c.0.s8 %v1449
        %v1451 = vlaneseq
        %v1452 = vshrl.u32 %v1451, 7
        %v1453 = vsub.s32 %v1450, %v1452
        %v1454 = vrot.slane %v1440, %v1453
        %v1455 = vcombine.low %v1447, %v1454
        %v1456 = vcombine.low %v1228, %v1236
        %v1457 = vcombine.low %v1235, %v1237
        %v1459 = vunpack.c.l.s4 1983009808
        %v1460 = vunpack.c.0.s8 %v1459
        %v1461 = vlaneseq
        %v1462 = vshrl.u32 %v1461, 7
        %v1463 = vsub.s32 %v1460, %v1462
        %v1464 = vrot.slane %v1456, %v1463
        %v1466 = vunpack.c.l.s4 1983009808
        %v1467 = vunpack.c.0.s8 %v1466
        %v1468 = vlaneseq
        %v1469 = vshrl.u32 %v1468, 7
        %v1470 = vsub.s32 %v1467, %v1469
        %v1471 = vrot.slane %v1457, %v1470
        %v1472 = vcombine.low %v1464, %v1471
        %v1473 = vcombine.low %v1244, %v1252
        %v1474 = vcombine.low %v1260, %v1259
        %v1476 = vunpack.c.l.s4 1983009808
        %v1477 = vunpack.c.0.s8 %v1476
        %v1478 = vlaneseq
        %v1479 = vshrl.u32 %v1478, 7
        %v1480 = vsub.s32 %v1477, %v1479
        %v1481 = vrot.slane %v1473, %v1480
        %v1483 = vunpack.c.l.s4 1983009808
        %v1484 = vunpack.c.0.s8 %v1483
        %v1485 = vlaneseq
        %v1486 = vshrl.u32 %v1485, 7
        %v1487 = vsub.s32 %v1484, %v1486
        %v1488 = vrot.slane %v1474, %v1487
        %v1489 = vcombine.low %v1481, %v1488
        %v1490 = vcombine.low %v1261, %v1268
        %v1491 = vcombine.low %v1276, %v1284
        %v1493 = vunpack.c.l.s4 1983009808
        %v1494 = vunpack.c.0.s8 %v1493
        %v1495 = vlaneseq
        %v1496 = vshrl.u32 %v1495, 7
        %v1497 = vsub.s32 %v1494, %v1496
        %v1498 = vrot.slane %v1490, %v1497
        %v1500 = vunpack.c.l.s4 1983009808
        %v1501 = vunpack.c.0.s8 %v1500
        %v1502 = vlaneseq
        %v1503 = vshrl.u32 %v1502, 7
        %v1504 = vsub.s32 %v1501, %v1503
        %v1505 = vrot.slane %v1491, %v1504
        %v1506 = vcombine.low %v1498, %v1505
        %v1507 = vcombine.low %v1283, %v1285
        %v1508 = vcombine.low %v1292, %v1300
        %v1510 = vunpack.c.l.s4 1983009808
        %v1511 = vunpack.c.0.s8 %v1510
        %v1512 = vlaneseq
        %v1513 = vshrl.u32 %v1512, 7
        %v1514 = vsub.s32 %v1511, %v1513
        %v1515 = vrot.slane %v1507, %v1514
        %v1517 = vunpack.c.l.s4 1983009808
        %v1518 = vunpack.c.0.s8 %v1517
        %v1519 = vlaneseq
        %v1520 = vshrl.u32 %v1519, 7
        %v1521 = vsub.s32 %v1518, %v1520
        %v1522 = vrot.slane %v1508, %v1521
        %v1523 = vcombine.low %v1515, %v1522
        %v1524 = vcombine.low %v1308, %v1307
        %v1525 = vcombine.low %v1309, %v1316
        %v1527 = vunpack.c.l.s4 1983009808
        %v1528 = vunpack.c.0.s8 %v1527
        %v1529 = vlaneseq
        %v1530 = vshrl.u32 %v1529, 7
        %v1531 = vsub.s32 %v1528, %v1530
        %v1532 = vrot.slane %v1524, %v1531
        %v1534 = vunpack.c.l.s4 1983009808
        %v1535 = vunpack.c.0.s8 %v1534
        %v1536 = vlaneseq
        %v1537 = vshrl.u32 %v1536, 7
        %v1538 = vsub.s32 %v1535, %v1537
        %v1539 = vrot.slane %v1525, %v1538
        %v1540 = vcombine.low %v1532, %v1539
        %v1541 = vcombine.low %v1324, %v1332
        %v1542 = vcombine.low %v1331, %v1333
        %v1544 = vunpack.c.l.s4 1983009808
        %v1545 = vunpack.c.0.s8 %v1544
        %v1546 = vlaneseq
        %v1547 = vshrl.u32 %v1546, 7
        %v1548 = vsub.s32 %v1545, %v1547
        %v1549 = vrot.slane %v1541, %v1548
        %v1551 = vunpack.c.l.s4 1983009808
        %v1552 = vunpack.c.0.s8 %v1551
        %v1553 = vlaneseq
        %v1554 = vshrl.u32 %v1553, 7
        %v1555 = vsub.s32 %v1552, %v1554
        %v1556 = vrot.slane %v1542, %v1555
        %v1557 = vcombine.low %v1549, %v1556
        %v1558 = vcombine.low %v1340, %v1348
        %v1559 = vcombine.low %v1356, %v1355
        %v1561 = vunpack.c.l.s4 1983009808
        %v1562 = vunpack.c.0.s8 %v1561
        %v1563 = vlaneseq
        %v1564 = vshrl.u32 %v1563, 7
        %v1565 = vsub.s32 %v1562, %v1564
        %v1566 = vrot.slane %v1558, %v1565
        %v1568 = vunpack.c.l.s4 1983009808
        %v1569 = vunpack.c.0.s8 %v1568
        %v1570 = vlaneseq
        %v1571 = vshrl.u32 %v1570, 7
        %v1572 = vsub.s32 %v1569, %v1571
        %v1573 = vrot.slane %v1559, %v1572
        %v1574 = vcombine.low %v1566, %v1573
        %v1575 = vcombine.low %v1357, %v1364
        %v1577 = vunpack.c.l.s4 1983009808
        %v1578 = vunpack.c.0.s8 %v1577
        %v1579 = vlaneseq
        %v1580 = vshrl.u32 %v1579, 7
        %v1581 = vsub.s32 %v1578, %v1580
        %v1582 = vrot.slane %v1575, %v1581
        %vm1583 = vcmask 220160
        %v1584 = vsel %vm1583, %v1387, 0
        %v1586 = vsel %vm1583, %v1404, 0
        %v1588 = vsel %vm1583, %v1421, 0
        %v1590 = vsel %vm1583, %v1438, 0
        %v1592 = vsel %vm1583, %v1455, 0
        %v1594 = vsel %vm1583, %v1472, 0
        %v1596 = vsel %vm1583, %v1489, 0
        %v1598 = vsel %vm1583, %v1506, 0
        %v1600 = vsel %vm1583, %v1523, 0
        %v1602 = vsel %vm1583, %v1540, 0
        %v1604 = vsel %vm1583, %v1557, 0
        %v1606 = vsel %vm1583, %v1574, 0
        %v1608 = vsel %vm1583, %v1582, 0
        %vm1610 = vcmask 1042432
        %v1612 = vsel %vm1610, %v357, 0
        %1614 = vmatprep.subr.mxu0 0.0
        %1615 = vmatpush1.msra.mxu0 %v354
        %1616 = vmatprep.subr.mxu0 0.0
        %1617 = vmatpush1.msra.mxu0 %v355
        %1618 = vmatprep.subr.mxu0 0.0
        %1619 = vmatpush1.msra.mxu0 %v356
        %1620 = vmatprep.subr.mxu0 0.0
        %1621 = vmatpush1.msra.mxu0 %v1612
        %1622 = vmatprep.subr.mxu0 0.0
        %1623 = vmatpush1.msra.mxu0 0.0
        %1624 = vmatprep.subr.mxu0 0.0
        %1625 = vmatpush1.msra.mxu0 0.0
        %1626 = vmatprep.subr.mxu0 0.0
        %1627 = vmatpush1.msra.mxu0 0.0
        %1628 = vmatprep.subr.mxu0 0.0
        %1629 = vmatpush1.msra.mxu0 0.0
        %1630 = vmatprep.subr.mxu0 0.0
        %1631 = vmatpush1.msra.mxu0 0.0
        %1632 = vmatprep.subr.mxu0 0.0
        %1633 = vmatpush1.msra.mxu0 0.0
        %1634 = vmatprep.subr.mxu0 0.0
        %1635 = vmatpush1.msra.mxu0 0.0
        %1636 = vmatprep.subr.mxu0 0.0
        %1637 = vmatpush1.msra.mxu0 0.0
        %1638 = vmatprep.subr.mxu0 0.0
        %1639 = vmatpush1.msra.mxu0 0.0
        %1640 = vmatprep.subr.mxu0 0.0
        %1641 = vmatpush1.msra.mxu0 0.0
        %1642 = vmatprep.subr.mxu0 0.0
        %1643 = vmatpush1.msra.mxu0 0.0
        %1644 = vmatprep.subr.mxu0 0.0
        %1645 = vmatpush1.msra.mxu0 0.0
        %1646 = vmatprep.subr.mxu0 0.0
        %1647 = vmatpush1.msra.mxu0 0.0
        %1648 = vmatprep.subr.mxu0 0.0
        %1649 = vmatpush1.msra.mxu0 0.0
        %1650 = vmatprep.subr.mxu0 0.0
        %1651 = vmatpush1.msra.mxu0 0.0
        %1652 = vmatprep.subr.mxu0 0.0
        %1653 = vmatpush1.msra.mxu0 0.0
        %1654 = vmatprep.subr.mxu0 0.0
        %1655 = vmatpush1.msra.mxu0 0.0
        %1656 = vmatprep.subr.mxu0 0.0
        %1657 = vmatpush1.msra.mxu0 0.0
        %1658 = vmatprep.subr.mxu0 0.0
        %1659 = vmatpush1.msra.mxu0 0.0
        %1660 = vmatprep.subr.mxu0 0.0
        %1661 = vmatpush1.msra.mxu0 0.0
        %1662 = vmatprep.subr.mxu0 0.0
        %1663 = vmatpush1.msra.mxu0 0.0
        %1664 = vmatprep.subr.mxu0 0.0
        %1665 = vmatpush1.msra.mxu0 0.0
        %1666 = vmatprep.subr.mxu0 0.0
        %1667 = vmatpush1.msra.mxu0 0.0
        %1668 = vmatprep.subr.mxu0 0.0
        %1669 = vmatpush1.msra.mxu0 0.0
        %1670 = vmatprep.subr.mxu0 0.0
        %1671 = vmatpush1.msra.mxu0 0.0
        %1672 = vmatprep.subr.mxu0 0.0
        %1673 = vmatpush1.msra.mxu0 0.0
        %1674 = vmatprep.subr.mxu0 0.0
        %1675 = vmatpush1.msra.mxu0 0.0
        %1676 = vmatprep.subr.mxu0 0.0
        %1677 = vmatpush1.msra.mxu0 0.0
        %1678 = vmatprep.mubr.f32.mxu0 0.0
        %1679 = vmatmul.mubr.f32.gmra.mrb[0].mxu0 %v1584
        %v1680 = vpop.f32.mrb[0].mxu0
        %v1681 = vadd.f32 %v1369, %v1680
        %v1682 = vpop.f32.mrb[0].mxu0
        %1683 = vmatprep.mubr.f32.mxu0 0.0
        %1684 = vmatmul.mubr.f32.gmra.mrb[0].mxu0 %v1586
        %v1685 = vpop.f32.mrb[0].mxu0
        %v1686 = vadd.f32 %v1369, %v1685
        %v1687 = vpop.f32.mrb[0].mxu0
        %1688 = vmatprep.mubr.f32.mxu0 0.0
        %1689 = vmatmul.mubr.f32.gmra.mrb[0].mxu0 %v1588
        %v1690 = vpop.f32.mrb[0].mxu0
        %v1691 = vadd.f32 %v1369, %v1690
        %v1692 = vpop.f32.mrb[0].mxu0
        %1693 = vmatprep.mubr.f32.mxu0 0.0
        %1694 = vmatmul.mubr.f32.gmra.mrb[0].mxu0 %v1590
        %v1695 = vpop.f32.mrb[0].mxu0
        %v1696 = vadd.f32 %v1369, %v1695
        %v1697 = vpop.f32.mrb[0].mxu0
        %1698 = vmatprep.mubr.f32.mxu0 0.0
        %1699 = vmatmul.mubr.f32.gmra.mrb[0].mxu0 %v1592
        %v1700 = vpop.f32.mrb[0].mxu0
        %v1701 = vadd.f32 %v1369, %v1700
        %v1702 = vpop.f32.mrb[0].mxu0
        %1703 = vmatprep.mubr.f32.mxu0 0.0
        %1704 = vmatmul.mubr.f32.gmra.mrb[0].mxu0 %v1594
        %v1705 = vpop.f32.mrb[0].mxu0
        %v1706 = vadd.f32 %v1369, %v1705
        %v1707 = vpop.f32.mrb[0].mxu0
        %1708 = vmatprep.mubr.f32.mxu0 0.0
        %1709 = vmatmul.mubr.f32.gmra.mrb[0].mxu0 %v1596
        %v1710 = vpop.f32.mrb[0].mxu0
        %v1711 = vadd.f32 %v1369, %v1710
        %v1712 = vpop.f32.mrb[0].mxu0
        %1713 = vmatprep.mubr.f32.mxu0 0.0
        %1714 = vmatmul.mubr.f32.gmra.mrb[0].mxu0 %v1598
        %v1715 = vpop.f32.mrb[0].mxu0
        %v1716 = vadd.f32 %v1369, %v1715
        %v1717 = vpop.f32.mrb[0].mxu0
        %1718 = vmatprep.mubr.f32.mxu0 0.0
        %1719 = vmatmul.mubr.f32.gmra.mrb[0].mxu0 %v1600
        %v1720 = vpop.f32.mrb[0].mxu0
        %v1721 = vadd.f32 %v1369, %v1720
        %v1722 = vpop.f32.mrb[0].mxu0
        %1723 = vmatprep.mubr.f32.mxu0 0.0
        %1724 = vmatmul.mubr.f32.gmra.mrb[0].mxu0 %v1602
        %v1725 = vpop.f32.mrb[0].mxu0
        %v1726 = vadd.f32 %v1369, %v1725
        %v1727 = vpop.f32.mrb[0].mxu0
        %1728 = vmatprep.mubr.f32.mxu0 0.0
        %1729 = vmatmul.mubr.f32.gmra.mrb[0].mxu0 %v1604
        %v1730 = vpop.f32.mrb[0].mxu0
        %v1731 = vadd.f32 %v1369, %v1730
        %v1732 = vpop.f32.mrb[0].mxu0
        %1733 = vmatprep.mubr.f32.mxu0 0.0
        %1734 = vmatmul.mubr.f32.gmra.mrb[0].mxu0 %v1606
        %v1735 = vpop.f32.mrb[0].mxu0
        %v1736 = vadd.f32 %v1369, %v1735
        %v1737 = vpop.f32.mrb[0].mxu0
        %1738 = vmatprep.mubr.f32.mxu0 0.0
        %1739 = vmatmul.mubr.f32.gmra.mrb[0].mxu0 %v1608
        %v1740 = vpop.f32.mrb[0].mxu0
        %v1741 = vadd.f32 %v1369, %v1740
        %v1742 = vpop.f32.mrb[0].mxu0
        %1743 = vdwg.mxu0
        %v1744 = vmax.f32 %v1681, 0.0
        %v1745 = vmax.f32 %v1686, 0.0
        %v1746 = vmax.f32 %v1691, 0.0
        %v1747 = vmax.f32 %v1696, 0.0
        %v1748 = vmax.f32 %v1701, 0.0
        %v1749 = vmax.f32 %v1706, 0.0
        %v1750 = vmax.f32 %v1711, 0.0
        %v1751 = vmax.f32 %v1716, 0.0
        %v1752 = vmax.f32 %v1721, 0.0
        %v1753 = vmax.f32 %v1726, 0.0
        %v1754 = vmax.f32 %v1731, 0.0
        %v1755 = vmax.f32 %v1736, 0.0
        %v1756 = vmax.f32 %v1741, 0.0
        %v1770 = vcombine.high %v1744, %v1744
        %v1772 = vunpack.c.l.s4 1983009808
        %v1773 = vunpack.c.0.s8 %v1772
        %v1774 = vlaneseq
        %v1775 = vshrl.u32 %v1774, 7
        %v1776 = vsub.s32 %v1773, %v1775
        %v1777 = vrot.slane %v1744, %v1776
        %v1779 = vunpack.c.l.s4 1983009808
        %v1780 = vunpack.c.0.s8 %v1779
        %v1781 = vlaneseq
        %v1782 = vshrl.u32 %v1781, 7
        %v1783 = vsub.s32 %v1780, %v1782
        %v1784 = vrot.slane %v1770, %v1783
        %v1785 = vcombine.high %v1777, %v1777
        %v1786 = vcombine.high %v1784, %v1784
        %v1787 = vcombine.high %v1745, %v1745
        %v1789 = vunpack.c.l.s4 1983009808
        %v1790 = vunpack.c.0.s8 %v1789
        %v1791 = vlaneseq
        %v1792 = vshrl.u32 %v1791, 7
        %v1793 = vsub.s32 %v1790, %v1792
        %v1794 = vrot.slane %v1745, %v1793
        %v1796 = vunpack.c.l.s4 1983009808
        %v1797 = vunpack.c.0.s8 %v1796
        %v1798 = vlaneseq
        %v1799 = vshrl.u32 %v1798, 7
        %v1800 = vsub.s32 %v1797, %v1799
        %v1801 = vrot.slane %v1787, %v1800
        %v1802 = vcombine.high %v1794, %v1794
        %v1803 = vcombine.high %v1801, %v1801
        %v1804 = vcombine.high %v1746, %v1746
        %v1806 = vunpack.c.l.s4 1983009808
        %v1807 = vunpack.c.0.s8 %v1806
        %v1808 = vlaneseq
        %v1809 = vshrl.u32 %v1808, 7
        %v1810 = vsub.s32 %v1807, %v1809
        %v1811 = vrot.slane %v1746, %v1810
        %v1813 = vunpack.c.l.s4 1983009808
        %v1814 = vunpack.c.0.s8 %v1813
        %v1815 = vlaneseq
        %v1816 = vshrl.u32 %v1815, 7
        %v1817 = vsub.s32 %v1814, %v1816
        %v1818 = vrot.slane %v1804, %v1817
        %v1819 = vcombine.high %v1811, %v1811
        %v1820 = vcombine.high %v1818, %v1818
        %v1821 = vcombine.high %v1747, %v1747
        %v1823 = vunpack.c.l.s4 1983009808
        %v1824 = vunpack.c.0.s8 %v1823
        %v1825 = vlaneseq
        %v1826 = vshrl.u32 %v1825, 7
        %v1827 = vsub.s32 %v1824, %v1826
        %v1828 = vrot.slane %v1747, %v1827
        %v1830 = vunpack.c.l.s4 1983009808
        %v1831 = vunpack.c.0.s8 %v1830
        %v1832 = vlaneseq
        %v1833 = vshrl.u32 %v1832, 7
        %v1834 = vsub.s32 %v1831, %v1833
        %v1835 = vrot.slane %v1821, %v1834
        %v1836 = vcombine.high %v1828, %v1828
        %v1837 = vcombine.high %v1835, %v1835
        %v1838 = vcombine.high %v1748, %v1748
        %v1840 = vunpack.c.l.s4 1983009808
        %v1841 = vunpack.c.0.s8 %v1840
        %v1842 = vlaneseq
        %v1843 = vshrl.u32 %v1842, 7
        %v1844 = vsub.s32 %v1841, %v1843
        %v1845 = vrot.slane %v1748, %v1844
        %v1847 = vunpack.c.l.s4 1983009808
        %v1848 = vunpack.c.0.s8 %v1847
        %v1849 = vlaneseq
        %v1850 = vshrl.u32 %v1849, 7
        %v1851 = vsub.s32 %v1848, %v1850
        %v1852 = vrot.slane %v1838, %v1851
        %v1853 = vcombine.high %v1845, %v1845
        %v1854 = vcombine.high %v1852, %v1852
        %v1855 = vcombine.high %v1749, %v1749
        %v1857 = vunpack.c.l.s4 1983009808
        %v1858 = vunpack.c.0.s8 %v1857
        %v1859 = vlaneseq
        %v1860 = vshrl.u32 %v1859, 7
        %v1861 = vsub.s32 %v1858, %v1860
        %v1862 = vrot.slane %v1749, %v1861
        %v1864 = vunpack.c.l.s4 1983009808
        %v1865 = vunpack.c.0.s8 %v1864
        %v1866 = vlaneseq
        %v1867 = vshrl.u32 %v1866, 7
        %v1868 = vsub.s32 %v1865, %v1867
        %v1869 = vrot.slane %v1855, %v1868
        %v1870 = vcombine.high %v1862, %v1862
        %v1871 = vcombine.high %v1869, %v1869
        %v1872 = vcombine.high %v1750, %v1750
        %v1874 = vunpack.c.l.s4 1983009808
        %v1875 = vunpack.c.0.s8 %v1874
        %v1876 = vlaneseq
        %v1877 = vshrl.u32 %v1876, 7
        %v1878 = vsub.s32 %v1875, %v1877
        %v1879 = vrot.slane %v1750, %v1878
        %v1881 = vunpack.c.l.s4 1983009808
        %v1882 = vunpack.c.0.s8 %v1881
        %v1883 = vlaneseq
        %v1884 = vshrl.u32 %v1883, 7
        %v1885 = vsub.s32 %v1882, %v1884
        %v1886 = vrot.slane %v1872, %v1885
        %v1887 = vcombine.high %v1879, %v1879
        %v1888 = vcombine.high %v1886, %v1886
        %v1889 = vcombine.high %v1751, %v1751
        %v1891 = vunpack.c.l.s4 1983009808
        %v1892 = vunpack.c.0.s8 %v1891
        %v1893 = vlaneseq
        %v1894 = vshrl.u32 %v1893, 7
        %v1895 = vsub.s32 %v1892, %v1894
        %v1896 = vrot.slane %v1751, %v1895
        %v1898 = vunpack.c.l.s4 1983009808
        %v1899 = vunpack.c.0.s8 %v1898
        %v1900 = vlaneseq
        %v1901 = vshrl.u32 %v1900, 7
        %v1902 = vsub.s32 %v1899, %v1901
        %v1903 = vrot.slane %v1889, %v1902
        %v1904 = vcombine.high %v1896, %v1896
        %v1905 = vcombine.high %v1903, %v1903
        %v1906 = vcombine.high %v1752, %v1752
        %v1908 = vunpack.c.l.s4 1983009808
        %v1909 = vunpack.c.0.s8 %v1908
        %v1910 = vlaneseq
        %v1911 = vshrl.u32 %v1910, 7
        %v1912 = vsub.s32 %v1909, %v1911
        %v1913 = vrot.slane %v1752, %v1912
        %v1915 = vunpack.c.l.s4 1983009808
        %v1916 = vunpack.c.0.s8 %v1915
        %v1917 = vlaneseq
        %v1918 = vshrl.u32 %v1917, 7
        %v1919 = vsub.s32 %v1916, %v1918
        %v1920 = vrot.slane %v1906, %v1919
        %v1921 = vcombine.high %v1913, %v1913
        %v1922 = vcombine.high %v1920, %v1920
        %v1923 = vcombine.high %v1753, %v1753
        %v1925 = vunpack.c.l.s4 1983009808
        %v1926 = vunpack.c.0.s8 %v1925
        %v1927 = vlaneseq
        %v1928 = vshrl.u32 %v1927, 7
        %v1929 = vsub.s32 %v1926, %v1928
        %v1930 = vrot.slane %v1753, %v1929
        %v1932 = vunpack.c.l.s4 1983009808
        %v1933 = vunpack.c.0.s8 %v1932
        %v1934 = vlaneseq
        %v1935 = vshrl.u32 %v1934, 7
        %v1936 = vsub.s32 %v1933, %v1935
        %v1937 = vrot.slane %v1923, %v1936
        %v1938 = vcombine.high %v1930, %v1930
        %v1939 = vcombine.high %v1937, %v1937
        %v1940 = vcombine.high %v1754, %v1754
        %v1942 = vunpack.c.l.s4 1983009808
        %v1943 = vunpack.c.0.s8 %v1942
        %v1944 = vlaneseq
        %v1945 = vshrl.u32 %v1944, 7
        %v1946 = vsub.s32 %v1943, %v1945
        %v1947 = vrot.slane %v1754, %v1946
        %v1949 = vunpack.c.l.s4 1983009808
        %v1950 = vunpack.c.0.s8 %v1949
        %v1951 = vlaneseq
        %v1952 = vshrl.u32 %v1951, 7
        %v1953 = vsub.s32 %v1950, %v1952
        %v1954 = vrot.slane %v1940, %v1953
        %v1955 = vcombine.high %v1947, %v1947
        %v1956 = vcombine.high %v1954, %v1954
        %v1957 = vcombine.high %v1755, %v1755
        %v1959 = vunpack.c.l.s4 1983009808
        %v1960 = vunpack.c.0.s8 %v1959
        %v1961 = vlaneseq
        %v1962 = vshrl.u32 %v1961, 7
        %v1963 = vsub.s32 %v1960, %v1962
        %v1964 = vrot.slane %v1755, %v1963
        %v1966 = vunpack.c.l.s4 1983009808
        %v1967 = vunpack.c.0.s8 %v1966
        %v1968 = vlaneseq
        %v1969 = vshrl.u32 %v1968, 7
        %v1970 = vsub.s32 %v1967, %v1969
        %v1971 = vrot.slane %v1957, %v1970
        %v1972 = vcombine.high %v1964, %v1964
        %v1973 = vcombine.high %v1971, %v1971
        %v1975 = vunpack.c.l.s4 1983009808
        %v1976 = vunpack.c.0.s8 %v1975
        %v1977 = vlaneseq
        %v1978 = vshrl.u32 %v1977, 7
        %v1979 = vsub.s32 %v1976, %v1978
        %v1980 = vrot.slane %v1756, %v1979
        %v1981 = vcombine.high %v1980, %v1980
        %v1982 = vld [vmem:[%s3] sm:$0xff]
        %v1983 = vld [vmem:[%s3 + $0x8] sm:$0xff]
        %v1984 = vld [vmem:[%s3 + $0x10] sm:$0xff]
        %v1985 = vld [vmem:[%s3 + $0x18] sm:$0xff]
        %v1986 = vld [vmem:[%s3 + $0x20] sm:$0xff]
        %v1987 = vld [vmem:[%s3 + $0x28] sm:$0xff]
        %v1988 = vld [vmem:[%s3 + $0x30] sm:$0xff]
        %v1989 = vld [vmem:[%s3 + $0x38] sm:$0xff]
        %v1990 = vld [vmem:[%s3 + $0x40] sm:$0xff]
        %v1991 = vld [vmem:[%s3 + $0x48] sm:$0xff]
        %v1992 = vld [vmem:[%s3 + $0x50] sm:$0xff]
        %v1993 = vld [vmem:[%s3 + $0x58] sm:$0xff]
        %v1994 = vld [vmem:[%s3 + $0x60] sm:$0xff]
        %v1995 = vld [vmem:[%s3 + $0x68] sm:$0xff]
        %v1996 = vld [vmem:[%s3 + $0x70] sm:$0xff]
        %v1997 = vld [vmem:[%s3 + $0x78] sm:$0xff]
        %v1998 = vld [vmem:[%s3 + $0x80] sm:$0xff]
        %v1999 = vld [vmem:[%s3 + $0x88] sm:$0xff]
        %v2000 = vld [vmem:[%s3 + $0x90] sm:$0xff]
        %v2001 = vld [vmem:[%s3 + $0x98] sm:$0xff]
        %v2002 = vld [vmem:[%s3 + $0xa0] sm:$0xff]
        %v2003 = vld [vmem:[%s3 + $0xa8] sm:$0xff]
        %v2004 = vld [vmem:[%s3 + $0xb0] sm:$0xff]
        %v2005 = vld [vmem:[%s3 + $0xb8] sm:$0xff]
        %v2006 = vld [vmem:[%s3 + $0xc0] sm:$0xff]
        %v2007 = vld [vmem:[%s3 + $0xc8] sm:$0xff]
        %v2008 = vld [vmem:[%s3 + $0xd0] sm:$0xff]
        %v2009 = vld [vmem:[%s3 + $0xd8] sm:$0xff]
        %v2010 = vld [vmem:[%s3 + $0xe0] sm:$0xff]
        %v2011 = vld [vmem:[%s3 + $0xe8] sm:$0xff]
        %v2012 = vld [vmem:[%s3 + $0xf0] sm:$0xff]
        %v2013 = vld [vmem:[%s3 + $0xf8] sm:$0xff]
        %v2014 = vld [vmem:[%s3 + $0x100] sm:$0xff]
        %v2015 = vld [vmem:[%s3 + $0x108] sm:$0xff]
        %v2016 = vld [vmem:[%s3 + $0x110] sm:$0xff]
        %v2017 = vld [vmem:[%s3 + $0x118] sm:$0xff]
        %v2018 = vld [vmem:[%s4] sm:$0x1]
        %v2019 = vcombine.low %v1777, %v1785
        %v2020 = vcombine.low %v1784, %v1786
        %v2022 = vunpack.c.l.s4 1983009808
        %v2023 = vunpack.c.0.s8 %v2022
        %v2024 = vlaneseq
        %v2025 = vshrl.u32 %v2024, 7
        %v2026 = vsub.s32 %v2023, %v2025
        %v2027 = vrot.slane %v2019, %v2026
        %v2029 = vunpack.c.l.s4 1983009808
        %v2030 = vunpack.c.0.s8 %v2029
        %v2031 = vlaneseq
        %v2032 = vshrl.u32 %v2031, 7
        %v2033 = vsub.s32 %v2030, %v2032
        %v2034 = vrot.slane %v2020, %v2033
        %v2035 = vcombine.low %v2027, %v2034
        %v2036 = vcombine.low %v1802, %v1801
        %v2037 = vcombine.low %v1803, %v1811
        %v2039 = vunpack.c.l.s4 1983009808
        %v2040 = vunpack.c.0.s8 %v2039
        %v2041 = vlaneseq
        %v2042 = vshrl.u32 %v2041, 7
        %v2043 = vsub.s32 %v2040, %v2042
        %v2044 = vrot.slane %v2036, %v2043
        %v2046 = vunpack.c.l.s4 1983009808
        %v2047 = vunpack.c.0.s8 %v2046
        %v2048 = vlaneseq
        %v2049 = vshrl.u32 %v2048, 7
        %v2050 = vsub.s32 %v2047, %v2049
        %v2051 = vrot.slane %v2037, %v2050
        %v2052 = vcombine.low %v2044, %v2051
        %v2053 = vcombine.low %v1818, %v1820
        %v2054 = vcombine.low %v1828, %v1836
        %v2056 = vunpack.c.l.s4 1983009808
        %v2057 = vunpack.c.0.s8 %v2056
        %v2058 = vlaneseq
        %v2059 = vshrl.u32 %v2058, 7
        %v2060 = vsub.s32 %v2057, %v2059
        %v2061 = vrot.slane %v2053, %v2060
        %v2063 = vunpack.c.l.s4 1983009808
        %v2064 = vunpack.c.0.s8 %v2063
        %v2065 = vlaneseq
        %v2066 = vshrl.u32 %v2065, 7
        %v2067 = vsub.s32 %v2064, %v2066
        %v2068 = vrot.slane %v2054, %v2067
        %v2069 = vcombine.low %v2061, %v2068
        %v2070 = vcombine.low %v1837, %v1845
        %v2071 = vcombine.low %v1853, %v1852
        %v2073 = vunpack.c.l.s4 1983009808
        %v2074 = vunpack.c.0.s8 %v2073
        %v2075 = vlaneseq
        %v2076 = vshrl.u32 %v2075, 7
        %v2077 = vsub.s32 %v2074, %v2076
        %v2078 = vrot.slane %v2070, %v2077
        %v2080 = vunpack.c.l.s4 1983009808
        %v2081 = vunpack.c.0.s8 %v2080
        %v2082 = vlaneseq
        %v2083 = vshrl.u32 %v2082, 7
        %v2084 = vsub.s32 %v2081, %v2083
        %v2085 = vrot.slane %v2071, %v2084
        %v2086 = vcombine.low %v2078, %v2085
        %v2087 = vcombine.low %v1862, %v1870
        %v2088 = vcombine.low %v1869, %v1871
        %v2090 = vunpack.c.l.s4 1983009808
        %v2091 = vunpack.c.0.s8 %v2090
        %v2092 = vlaneseq
        %v2093 = vshrl.u32 %v2092, 7
        %v2094 = vsub.s32 %v2091, %v2093
        %v2095 = vrot.slane %v2087, %v2094
        %v2097 = vunpack.c.l.s4 1983009808
        %v2098 = vunpack.c.0.s8 %v2097
        %v2099 = vlaneseq
        %v2100 = vshrl.u32 %v2099, 7
        %v2101 = vsub.s32 %v2098, %v2100
        %v2102 = vrot.slane %v2088, %v2101
        %v2103 = vcombine.low %v2095, %v2102
        %v2104 = vcombine.low %v1887, %v1886
        %v2105 = vcombine.low %v1888, %v1896
        %v2107 = vunpack.c.l.s4 1983009808
        %v2108 = vunpack.c.0.s8 %v2107
        %v2109 = vlaneseq
        %v2110 = vshrl.u32 %v2109, 7
        %v2111 = vsub.s32 %v2108, %v2110
        %v2112 = vrot.slane %v2104, %v2111
        %v2114 = vunpack.c.l.s4 1983009808
        %v2115 = vunpack.c.0.s8 %v2114
        %v2116 = vlaneseq
        %v2117 = vshrl.u32 %v2116, 7
        %v2118 = vsub.s32 %v2115, %v2117
        %v2119 = vrot.slane %v2105, %v2118
        %v2120 = vcombine.low %v2112, %v2119
        %v2121 = vcombine.low %v1903, %v1905
        %v2122 = vcombine.low %v1913, %v1921
        %v2124 = vunpack.c.l.s4 1983009808
        %v2125 = vunpack.c.0.s8 %v2124
        %v2126 = vlaneseq
        %v2127 = vshrl.u32 %v2126, 7
        %v2128 = vsub.s32 %v2125, %v2127
        %v2129 = vrot.slane %v2121, %v2128
        %v2131 = vunpack.c.l.s4 1983009808
        %v2132 = vunpack.c.0.s8 %v2131
        %v2133 = vlaneseq
        %v2134 = vshrl.u32 %v2133, 7
        %v2135 = vsub.s32 %v2132, %v2134
        %v2136 = vrot.slane %v2122, %v2135
        %v2137 = vcombine.low %v2129, %v2136
        %v2138 = vcombine.low %v1922, %v1930
        %v2139 = vcombine.low %v1938, %v1937
        %v2141 = vunpack.c.l.s4 1983009808
        %v2142 = vunpack.c.0.s8 %v2141
        %v2143 = vlaneseq
        %v2144 = vshrl.u32 %v2143, 7
        %v2145 = vsub.s32 %v2142, %v2144
        %v2146 = vrot.slane %v2138, %v2145
        %v2148 = vunpack.c.l.s4 1983009808
        %v2149 = vunpack.c.0.s8 %v2148
        %v2150 = vlaneseq
        %v2151 = vshrl.u32 %v2150, 7
        %v2152 = vsub.s32 %v2149, %v2151
        %v2153 = vrot.slane %v2139, %v2152
        %v2154 = vcombine.low %v2146, %v2153
        %v2164 = vunpack.c.l.s4 1983009808
        %v2165 = vunpack.c.0.s8 %v2164
        %v2166 = vlaneseq
        %v2167 = vshrl.u32 %v2166, 7
        %v2168 = vsub.s32 %v2165, %v2167
        %v2169 = vrot.slane %v1794, %v2168
        %v2171 = vunpack.c.l.s4 1983009808
        %v2172 = vunpack.c.0.s8 %v2171
        %v2173 = vlaneseq
        %v2174 = vshrl.u32 %v2173, 7
        %v2175 = vsub.s32 %v2172, %v2174
        %v2176 = vrot.slane %v1819, %v2175
        %v2178 = vunpack.c.l.s4 1983009808
        %v2179 = vunpack.c.0.s8 %v2178
        %v2180 = vlaneseq
        %v2181 = vshrl.u32 %v2180, 7
        %v2182 = vsub.s32 %v2179, %v2181
        %v2183 = vrot.slane %v1835, %v2182
        %v2185 = vunpack.c.l.s4 1983009808
        %v2186 = vunpack.c.0.s8 %v2185
        %v2187 = vlaneseq
        %v2188 = vshrl.u32 %v2187, 7
        %v2189 = vsub.s32 %v2186, %v2188
        %v2190 = vrot.slane %v1854, %v2189
        %v2192 = vunpack.c.l.s4 1983009808
        %v2193 = vunpack.c.0.s8 %v2192
        %v2194 = vlaneseq
        %v2195 = vshrl.u32 %v2194, 7
        %v2196 = vsub.s32 %v2193, %v2195
        %v2197 = vrot.slane %v1879, %v2196
        %v2199 = vunpack.c.l.s4 1983009808
        %v2200 = vunpack.c.0.s8 %v2199
        %v2201 = vlaneseq
        %v2202 = vshrl.u32 %v2201, 7
        %v2203 = vsub.s32 %v2200, %v2202
        %v2204 = vrot.slane %v1904, %v2203
        %v2206 = vunpack.c.l.s4 1983009808
        %v2207 = vunpack.c.0.s8 %v2206
        %v2208 = vlaneseq
        %v2209 = vshrl.u32 %v2208, 7
        %v2210 = vsub.s32 %v2207, %v2209
        %v2211 = vrot.slane %v1920, %v2210
        %v2213 = vunpack.c.l.s4 1983009808
        %v2214 = vunpack.c.0.s8 %v2213
        %v2215 = vlaneseq
        %v2216 = vshrl.u32 %v2215, 7
        %v2217 = vsub.s32 %v2214, %v2216
        %v2218 = vrot.slane %v1939, %v2217
        %v2219 = vrot.slane %v2035, 1
        %v2220 = vrot.slane %v2169, 1
        %v2221 = vsel %vm379, %v2219, %v2220
        %v2222 = vrot.slane %v2052, 1
        %v2223 = vrot.slane %v2176, 1
        %v2224 = vsel %vm379, %v2222, %v2223
        %v2225 = vrot.slane %v2069, 1
        %v2226 = vrot.slane %v2183, 1
        %v2227 = vsel %vm379, %v2225, %v2226
        %v2228 = vrot.slane %v2086, 1
        %v2229 = vrot.slane %v2190, 1
        %v2230 = vsel %vm379, %v2228, %v2229
        %v2231 = vrot.slane %v2103, 1
        %v2232 = vrot.slane %v2197, 1
        %v2233 = vsel %vm379, %v2231, %v2232
        %v2234 = vrot.slane %v2120, 1
        %v2235 = vrot.slane %v2204, 1
        %v2236 = vsel %vm379, %v2234, %v2235
        %v2237 = vrot.slane %v2137, 1
        %v2238 = vrot.slane %v2211, 1
        %v2239 = vsel %vm379, %v2237, %v2238
        %v2240 = vrot.slane %v2154, 1
        %v2241 = vrot.slane %v2218, 1
        %v2242 = vsel %vm379, %v2240, %v2241
        %2243 = vrot.lane.b32.xlu0 %v2221, 32
        %v2244 = vpop.permute.xlu0 %2243
        %2245 = vrot.lane.b32.xlu0 %v2224, 32
        %v2246 = vpop.permute.xlu0 %2245
        %2247 = vrot.lane.b32.xlu0 %v2227, 32
        %v2248 = vpop.permute.xlu0 %2247
        %2249 = vrot.lane.b32.xlu0 %v2230, 32
        %v2250 = vpop.permute.xlu0 %2249
        %2251 = vrot.lane.b32.xlu0 %v2233, 32
        %v2252 = vpop.permute.xlu0 %2251
        %2253 = vrot.lane.b32.xlu0 %v2236, 32
        %v2254 = vpop.permute.xlu0 %2253
        %2255 = vrot.lane.b32.xlu0 %v2239, 32
        %v2256 = vpop.permute.xlu0 %2255
        %2257 = vrot.lane.b32.xlu0 %v2242, 32
        %v2258 = vpop.permute.xlu0 %2257
        %v2267 = vcombine.low %v1785, %v1784
        %v2268 = vcombine.low %v1786, %v1794
        %v2270 = vunpack.c.l.s4 1983009808
        %v2271 = vunpack.c.0.s8 %v2270
        %v2272 = vlaneseq
        %v2273 = vshrl.u32 %v2272, 7
        %v2274 = vsub.s32 %v2271, %v2273
        %v2275 = vrot.slane %v2267, %v2274
        %v2277 = vunpack.c.l.s4 1983009808
        %v2278 = vunpack.c.0.s8 %v2277
        %v2279 = vlaneseq
        %v2280 = vshrl.u32 %v2279, 7
        %v2281 = vsub.s32 %v2278, %v2280
        %v2282 = vrot.slane %v2268, %v2281
        %v2283 = vcombine.low %v2275, %v2282
        %v2284 = vcombine.low %v1801, %v1803
        %v2285 = vcombine.low %v1811, %v1819
        %v2287 = vunpack.c.l.s4 1983009808
        %v2288 = vunpack.c.0.s8 %v2287
        %v2289 = vlaneseq
        %v2290 = vshrl.u32 %v2289, 7
        %v2291 = vsub.s32 %v2288, %v2290
        %v2292 = vrot.slane %v2284, %v2291
        %v2294 = vunpack.c.l.s4 1983009808
        %v2295 = vunpack.c.0.s8 %v2294
        %v2296 = vlaneseq
        %v2297 = vshrl.u32 %v2296, 7
        %v2298 = vsub.s32 %v2295, %v2297
        %v2299 = vrot.slane %v2285, %v2298
        %v2300 = vcombine.low %v2292, %v2299
        %v2301 = vcombine.low %v1820, %v1828
        %v2302 = vcombine.low %v1836, %v1835
        %v2304 = vunpack.c.l.s4 1983009808
        %v2305 = vunpack.c.0.s8 %v2304
        %v2306 = vlaneseq
        %v2307 = vshrl.u32 %v2306, 7
        %v2308 = vsub.s32 %v2305, %v2307
        %v2309 = vrot.slane %v2301, %v2308
        %v2311 = vunpack.c.l.s4 1983009808
        %v2312 = vunpack.c.0.s8 %v2311
        %v2313 = vlaneseq
        %v2314 = vshrl.u32 %v2313, 7
        %v2315 = vsub.s32 %v2312, %v2314
        %v2316 = vrot.slane %v2302, %v2315
        %v2317 = vcombine.low %v2309, %v2316
        %v2318 = vcombine.low %v1845, %v1853
        %v2319 = vcombine.low %v1852, %v1854
        %v2321 = vunpack.c.l.s4 1983009808
        %v2322 = vunpack.c.0.s8 %v2321
        %v2323 = vlaneseq
        %v2324 = vshrl.u32 %v2323, 7
        %v2325 = vsub.s32 %v2322, %v2324
        %v2326 = vrot.slane %v2318, %v2325
        %v2328 = vunpack.c.l.s4 1983009808
        %v2329 = vunpack.c.0.s8 %v2328
        %v2330 = vlaneseq
        %v2331 = vshrl.u32 %v2330, 7
        %v2332 = vsub.s32 %v2329, %v2331
        %v2333 = vrot.slane %v2319, %v2332
        %v2334 = vcombine.low %v2326, %v2333
        %v2335 = vcombine.low %v1870, %v1869
        %v2336 = vcombine.low %v1871, %v1879
        %v2338 = vunpack.c.l.s4 1983009808
        %v2339 = vunpack.c.0.s8 %v2338
        %v2340 = vlaneseq
        %v2341 = vshrl.u32 %v2340, 7
        %v2342 = vsub.s32 %v2339, %v2341
        %v2343 = vrot.slane %v2335, %v2342
        %v2345 = vunpack.c.l.s4 1983009808
        %v2346 = vunpack.c.0.s8 %v2345
        %v2347 = vlaneseq
        %v2348 = vshrl.u32 %v2347, 7
        %v2349 = vsub.s32 %v2346, %v2348
        %v2350 = vrot.slane %v2336, %v2349
        %v2351 = vcombine.low %v2343, %v2350
        %v2352 = vcombine.low %v1886, %v1888
        %v2353 = vcombine.low %v1896, %v1904
        %v2355 = vunpack.c.l.s4 1983009808
        %v2356 = vunpack.c.0.s8 %v2355
        %v2357 = vlaneseq
        %v2358 = vshrl.u32 %v2357, 7
        %v2359 = vsub.s32 %v2356, %v2358
        %v2360 = vrot.slane %v2352, %v2359
        %v2362 = vunpack.c.l.s4 1983009808
        %v2363 = vunpack.c.0.s8 %v2362
        %v2364 = vlaneseq
        %v2365 = vshrl.u32 %v2364, 7
        %v2366 = vsub.s32 %v2363, %v2365
        %v2367 = vrot.slane %v2353, %v2366
        %v2368 = vcombine.low %v2360, %v2367
        %v2369 = vcombine.low %v1905, %v1913
        %v2370 = vcombine.low %v1921, %v1920
        %v2372 = vunpack.c.l.s4 1983009808
        %v2373 = vunpack.c.0.s8 %v2372
        %v2374 = vlaneseq
        %v2375 = vshrl.u32 %v2374, 7
        %v2376 = vsub.s32 %v2373, %v2375
        %v2377 = vrot.slane %v2369, %v2376
        %v2379 = vunpack.c.l.s4 1983009808
        %v2380 = vunpack.c.0.s8 %v2379
        %v2381 = vlaneseq
        %v2382 = vshrl.u32 %v2381, 7
        %v2383 = vsub.s32 %v2380, %v2382
        %v2384 = vrot.slane %v2370, %v2383
        %v2385 = vcombine.low %v2377, %v2384
        %v2386 = vcombine.low %v1930, %v1938
        %v2387 = vcombine.low %v1937, %v1939
        %v2389 = vunpack.c.l.s4 1983009808
        %v2390 = vunpack.c.0.s8 %v2389
        %v2391 = vlaneseq
        %v2392 = vshrl.u32 %v2391, 7
        %v2393 = vsub.s32 %v2390, %v2392
        %v2394 = vrot.slane %v2386, %v2393
        %v2396 = vunpack.c.l.s4 1983009808
        %v2397 = vunpack.c.0.s8 %v2396
        %v2398 = vlaneseq
        %v2399 = vshrl.u32 %v2398, 7
        %v2400 = vsub.s32 %v2397, %v2399
        %v2401 = vrot.slane %v2387, %v2400
        %v2402 = vcombine.low %v2394, %v2401
        %2403 = vrot.lane.b32.xlu0 %v2283, 64
        %v2404 = vpop.permute.xlu0 %2403
        %2405 = vrot.lane.b32.xlu0 %v2300, 64
        %v2406 = vpop.permute.xlu0 %2405
        %2407 = vrot.lane.b32.xlu0 %v2317, 64
        %v2408 = vpop.permute.xlu0 %2407
        %2409 = vrot.lane.b32.xlu0 %v2334, 64
        %v2410 = vpop.permute.xlu0 %2409
        %2411 = vrot.lane.b32.xlu0 %v2351, 64
        %v2412 = vpop.permute.xlu0 %2411
        %2413 = vrot.lane.b32.xlu0 %v2368, 64
        %v2414 = vpop.permute.xlu0 %2413
        %2415 = vrot.lane.b32.xlu0 %v2385, 64
        %v2416 = vpop.permute.xlu0 %2415
        %2417 = vrot.lane.b32.xlu0 %v2402, 64
        %v2418 = vpop.permute.xlu0 %2417
        %v2427 = vcombine.low %v1947, %v1955
        %v2428 = vcombine.low %v1954, %v1956
        %v2430 = vunpack.c.l.s4 1983009808
        %v2431 = vunpack.c.0.s8 %v2430
        %v2432 = vlaneseq
        %v2433 = vshrl.u32 %v2432, 7
        %v2434 = vsub.s32 %v2431, %v2433
        %v2435 = vrot.slane %v2427, %v2434
        %v2437 = vunpack.c.l.s4 1983009808
        %v2438 = vunpack.c.0.s8 %v2437
        %v2439 = vlaneseq
        %v2440 = vshrl.u32 %v2439, 7
        %v2441 = vsub.s32 %v2438, %v2440
        %v2442 = vrot.slane %v2428, %v2441
        %v2443 = vcombine.low %v2435, %v2442
        %2444 = vrot.lane.b32.xlu0 %v2052, 96
        %v2445 = vpop.permute.xlu0 %2444
        %2446 = vrot.lane.b32.xlu0 %v2069, 96
        %v2447 = vpop.permute.xlu0 %2446
        %2448 = vrot.lane.b32.xlu0 %v2086, 96
        %v2449 = vpop.permute.xlu0 %2448
        %2450 = vrot.lane.b32.xlu0 %v2103, 96
        %v2451 = vpop.permute.xlu0 %2450
        %2452 = vrot.lane.b32.xlu0 %v2120, 96
        %v2453 = vpop.permute.xlu0 %2452
        %2454 = vrot.lane.b32.xlu0 %v2137, 96
        %v2455 = vpop.permute.xlu0 %2454
        %2456 = vrot.lane.b32.xlu0 %v2154, 96
        %v2457 = vpop.permute.xlu0 %2456
        %2458 = vrot.lane.b32.xlu0 %v2443, 96
        %v2459 = vpop.permute.xlu0 %2458
        %v2469 = vunpack.c.l.s4 1983009808
        %v2470 = vunpack.c.0.s8 %v2469
        %v2471 = vlaneseq
        %v2472 = vshrl.u32 %v2471, 7
        %v2473 = vsub.s32 %v2470, %v2472
        %v2474 = vrot.slane %v1964, %v2473
        %v2475 = vrot.slane %v2443, 1
        %v2476 = vrot.slane %v2474, 1
        %v2477 = vsel %vm379, %v2475, %v2476
        %v2486 = vcombine.low %v1955, %v1954
        %v2487 = vcombine.low %v1956, %v1964
        %v2489 = vunpack.c.l.s4 1983009808
        %v2490 = vunpack.c.0.s8 %v2489
        %v2491 = vlaneseq
        %v2492 = vshrl.u32 %v2491, 7
        %v2493 = vsub.s32 %v2490, %v2492
        %v2494 = vrot.slane %v2486, %v2493
        %v2496 = vunpack.c.l.s4 1983009808
        %v2497 = vunpack.c.0.s8 %v2496
        %v2498 = vlaneseq
        %v2499 = vshrl.u32 %v2498, 7
        %v2500 = vsub.s32 %v2497, %v2499
        %v2501 = vrot.slane %v2487, %v2500
        %v2502 = vcombine.low %v2494, %v2501
        %2503 = vrot.lane.b32.xlu0 %v2300, 32
        %v2504 = vpop.permute.xlu0 %2503
        %2505 = vrot.lane.b32.xlu0 %v2317, 32
        %v2506 = vpop.permute.xlu0 %2505
        %2507 = vrot.lane.b32.xlu0 %v2334, 32
        %v2508 = vpop.permute.xlu0 %2507
        %2509 = vrot.lane.b32.xlu0 %v2351, 32
        %v2510 = vpop.permute.xlu0 %2509
        %2511 = vrot.lane.b32.xlu0 %v2368, 32
        %v2512 = vpop.permute.xlu0 %2511
        %2513 = vrot.lane.b32.xlu0 %v2385, 32
        %v2514 = vpop.permute.xlu0 %2513
        %2515 = vrot.lane.b32.xlu0 %v2402, 32
        %v2516 = vpop.permute.xlu0 %2515
        %2517 = vrot.lane.b32.xlu0 %v2502, 32
        %v2518 = vpop.permute.xlu0 %2517
        %v2527 = vcombine.low %v1972, %v1971
        %v2528 = vcombine.low %v1973, %v1980
        %v2530 = vunpack.c.l.s4 1983009808
        %v2531 = vunpack.c.0.s8 %v2530
        %v2532 = vlaneseq
        %v2533 = vshrl.u32 %v2532, 7
        %v2534 = vsub.s32 %v2531, %v2533
        %v2535 = vrot.slane %v2527, %v2534
        %v2537 = vunpack.c.l.s4 1983009808
        %v2538 = vunpack.c.0.s8 %v2537
        %v2539 = vlaneseq
        %v2540 = vshrl.u32 %v2539, 7
        %v2541 = vsub.s32 %v2538, %v2540
        %v2542 = vrot.slane %v2528, %v2541
        %v2543 = vcombine.low %v2535, %v2542
        %2544 = vrot.lane.b32.xlu0 %v2069, 64
        %v2545 = vpop.permute.xlu0 %2544
        %2546 = vrot.lane.b32.xlu0 %v2086, 64
        %v2547 = vpop.permute.xlu0 %2546
        %2548 = vrot.lane.b32.xlu0 %v2103, 64
        %v2549 = vpop.permute.xlu0 %2548
        %2550 = vrot.lane.b32.xlu0 %v2120, 64
        %v2551 = vpop.permute.xlu0 %2550
        %2552 = vrot.lane.b32.xlu0 %v2137, 64
        %v2553 = vpop.permute.xlu0 %2552
        %2554 = vrot.lane.b32.xlu0 %v2154, 64
        %v2555 = vpop.permute.xlu0 %2554
        %2556 = vrot.lane.b32.xlu0 %v2443, 64
        %v2557 = vpop.permute.xlu0 %2556
        %2558 = vrot.lane.b32.xlu0 %v2543, 64
        %v2559 = vpop.permute.xlu0 %2558
        %v2569 = vunpack.c.l.s4 1983009808
        %v2570 = vunpack.c.0.s8 %v2569
        %v2571 = vlaneseq
        %v2572 = vshrl.u32 %v2571, 7
        %v2573 = vsub.s32 %v2570, %v2572
        %v2574 = vrot.slane %v1981, %v2573
        %v2575 = vrot.slane %v2543, 1
        %v2576 = vrot.slane %v2574, 1
        %v2577 = vsel %vm379, %v2575, %v2576
        %2578 = vrot.lane.b32.xlu0 %v2227, 96
        %v2579 = vpop.permute.xlu0 %2578
        %2580 = vrot.lane.b32.xlu0 %v2230, 96
        %v2581 = vpop.permute.xlu0 %2580
        %2582 = vrot.lane.b32.xlu0 %v2233, 96
        %v2583 = vpop.permute.xlu0 %2582
        %2584 = vrot.lane.b32.xlu0 %v2236, 96
        %v2585 = vpop.permute.xlu0 %2584
        %2586 = vrot.lane.b32.xlu0 %v2239, 96
        %v2587 = vpop.permute.xlu0 %2586
        %2588 = vrot.lane.b32.xlu0 %v2242, 96
        %v2589 = vpop.permute.xlu0 %2588
        %2590 = vrot.lane.b32.xlu0 %v2477, 96
        %v2591 = vpop.permute.xlu0 %2590
        %2592 = vrot.lane.b32.xlu0 %v2577, 96
        %v2593 = vpop.permute.xlu0 %2592
        %v2602 = vcombine.low %v1971, %v1973
        %v2603 = vcombine.low %v1980, %v1981
        %v2605 = vunpack.c.l.s4 1983009808
        %v2606 = vunpack.c.0.s8 %v2605
        %v2607 = vlaneseq
        %v2608 = vshrl.u32 %v2607, 7
        %v2609 = vsub.s32 %v2606, %v2608
        %v2610 = vrot.slane %v2602, %v2609
        %v2612 = vunpack.c.l.s4 1983009808
        %v2613 = vunpack.c.0.s8 %v2612
        %v2614 = vlaneseq
        %v2615 = vshrl.u32 %v2614, 7
        %v2616 = vsub.s32 %v2613, %v2615
        %v2617 = vrot.slane %v2603, %v2616
        %v2618 = vcombine.low %v2610, %v2617
        %vm2619 = vcmask 261120
        %v2620 = vsel %vm2619, %v2035, %v2244
        %v2621 = vsel %vm2619, %v2052, %v2246
        %v2622 = vsel %vm2619, %v2069, %v2248
        %v2623 = vsel %vm2619, %v2086, %v2250
        %v2624 = vsel %vm2619, %v2103, %v2252
        %v2625 = vsel %vm2619, %v2120, %v2254
        %v2626 = vsel %vm2619, %v2137, %v2256
        %v2627 = vsel %vm2619, %v2154, %v2258
        %vm2628 = vcmask 523264
        %v2629 = vsel %vm2628, %v2620, %v2404
        %v2630 = vsel %vm2628, %v2621, %v2406
        %v2631 = vsel %vm2628, %v2622, %v2408
        %v2632 = vsel %vm2628, %v2623, %v2410
        %v2633 = vsel %vm2628, %v2624, %v2412
        %v2634 = vsel %vm2628, %v2625, %v2414
        %v2635 = vsel %vm2628, %v2626, %v2416
        %v2636 = vsel %vm2628, %v2627, %v2418
        %vm2637 = vcmask 785408
        %v2638 = vsel %vm2637, %v2629, %v2445
        %v2639 = vsel %vm2637, %v2630, %v2447
        %v2640 = vsel %vm2637, %v2631, %v2449
        %v2641 = vsel %vm2637, %v2632, %v2451
        %v2642 = vsel %vm2637, %v2633, %v2453
        %v2643 = vsel %vm2637, %v2634, %v2455
        %v2644 = vsel %vm2637, %v2635, %v2457
        %v2645 = vsel %vm2637, %v2636, %v2459
        %v2646 = vsel %vm2619, %v2224, %v2504
        %v2647 = vsel %vm2619, %v2227, %v2506
        %v2648 = vsel %vm2619, %v2230, %v2508
        %v2649 = vsel %vm2619, %v2233, %v2510
        %v2650 = vsel %vm2619, %v2236, %v2512
        %v2651 = vsel %vm2619, %v2239, %v2514
        %v2652 = vsel %vm2619, %v2242, %v2516
        %v2653 = vsel %vm2619, %v2477, %v2518
        %v2654 = vsel %vm2628, %v2646, %v2545
        %v2655 = vsel %vm2628, %v2647, %v2547
        %v2656 = vsel %vm2628, %v2648, %v2549
        %v2657 = vsel %vm2628, %v2649, %v2551
        %v2658 = vsel %vm2628, %v2650, %v2553
        %v2659 = vsel %vm2628, %v2651, %v2555
        %v2660 = vsel %vm2628, %v2652, %v2557
        %v2661 = vsel %vm2628, %v2653, %v2559
        %v2662 = vsel %vm2637, %v2654, %v2579
        %v2663 = vsel %vm2637, %v2655, %v2581
        %v2664 = vsel %vm2637, %v2656, %v2583
        %v2665 = vsel %vm2637, %v2657, %v2585
        %v2666 = vsel %vm2637, %v2658, %v2587
        %v2667 = vsel %vm2637, %v2659, %v2589
        %v2668 = vsel %vm2637, %v2660, %v2591
        %v2669 = vsel %vm2637, %v2661, %v2593
        %v2671 = vlaneseq
        %v2672 = vshrl.u32 %v2671, 7
        %v2673 = vsub.s32 0, %v2672
        %v2674 = vrot.slane %v2018, %v2673
        %v2676 = vsel %vm2619, %v2317, 0
        %v2678 = vsel %vm2619, %v2334, 0
        %v2680 = vsel %vm2619, %v2351, 0
        %v2682 = vsel %vm2619, %v2368, 0
        %v2684 = vsel %vm2619, %v2385, 0
        %v2686 = vsel %vm2619, %v2402, 0
        %v2688 = vsel %vm2619, %v2502, 0
        %v2690 = vsel %vm2619, %v2618, 0
        %2692 = vmatprep.subr.mxu0 0.0
        %2693 = vmatpush1.msra.mxu0 %v1982
        %2694 = vmatprep.subr.mxu0 0.0
        %2695 = vmatpush1.msra.mxu0 %v1983
        %2696 = vmatprep.subr.mxu0 0.0
        %2697 = vmatpush1.msra.mxu0 %v1984
        %2698 = vmatprep.subr.mxu0 0.0
        %2699 = vmatpush1.msra.mxu0 %v1985
        %2700 = vmatprep.subr.mxu0 0.0
        %2701 = vmatpush1.msra.mxu0 %v1986
        %2702 = vmatprep.subr.mxu0 0.0
        %2703 = vmatpush1.msra.mxu0 %v1987
        %2704 = vmatprep.subr.mxu0 0.0
        %2705 = vmatpush1.msra.mxu0 %v1988
        %2706 = vmatprep.subr.mxu0 0.0
        %2707 = vmatpush1.msra.mxu0 %v1989
        %2708 = vmatprep.subr.mxu0 0.0
        %2709 = vmatpush1.msra.mxu0 %v1990
        %2710 = vmatprep.subr.mxu0 0.0
        %2711 = vmatpush1.msra.mxu0 %v1991
        %2712 = vmatprep.subr.mxu0 0.0
        %2713 = vmatpush1.msra.mxu0 %v1992
        %2714 = vmatprep.subr.mxu0 0.0
        %2715 = vmatpush1.msra.mxu0 %v1993
        %2716 = vmatprep.subr.mxu0 0.0
        %2717 = vmatpush1.msra.mxu0 %v1994
        %2718 = vmatprep.subr.mxu0 0.0
        %2719 = vmatpush1.msra.mxu0 %v1995
        %2720 = vmatprep.subr.mxu0 0.0
        %2721 = vmatpush1.msra.mxu0 %v1996
        %2722 = vmatprep.subr.mxu0 0.0
        %2723 = vmatpush1.msra.mxu0 %v1997
        %2724 = vmatprep.subr.mxu0 0.0
        %2725 = vmatpush1.msra.mxu0 %v1998
        %2726 = vmatprep.subr.mxu0 0.0
        %2727 = vmatpush1.msra.mxu0 %v1999
        %2728 = vmatprep.subr.mxu0 0.0
        %2729 = vmatpush1.msra.mxu0 %v2000
        %2730 = vmatprep.subr.mxu0 0.0
        %2731 = vmatpush1.msra.mxu0 %v2001
        %2732 = vmatprep.subr.mxu0 0.0
        %2733 = vmatpush1.msra.mxu0 %v2002
        %2734 = vmatprep.subr.mxu0 0.0
        %2735 = vmatpush1.msra.mxu0 %v2003
        %2736 = vmatprep.subr.mxu0 0.0
        %2737 = vmatpush1.msra.mxu0 %v2004
        %2738 = vmatprep.subr.mxu0 0.0
        %2739 = vmatpush1.msra.mxu0 %v2005
        %2740 = vmatprep.subr.mxu0 0.0
        %2741 = vmatpush1.msra.mxu0 %v2006
        %2742 = vmatprep.subr.mxu0 0.0
        %2743 = vmatpush1.msra.mxu0 %v2007
        %2744 = vmatprep.subr.mxu0 0.0
        %2745 = vmatpush1.msra.mxu0 %v2008
        %2746 = vmatprep.subr.mxu0 0.0
        %2747 = vmatpush1.msra.mxu0 %v2009
        %2748 = vmatprep.subr.mxu0 0.0
        %2749 = vmatpush1.msra.mxu0 %v2010
        %2750 = vmatprep.subr.mxu0 0.0
        %2751 = vmatpush1.msra.mxu0 %v2011
        %2752 = vmatprep.subr.mxu0 0.0
        %2753 = vmatpush1.msra.mxu0 %v2012
        %2754 = vmatprep.subr.mxu0 0.0
        %2755 = vmatpush1.msra.mxu0 %v2013
        %2756 = vmatprep.mubr.f32.mxu0 %v2662
        %2757 = vmatmul.mubr.f32.gmra.mrb[0].mxu0 %v2638
        %v2758 = vpop.f32.mrb[0].mxu0
        %v2759 = vadd.f32 %v2674, %v2758
        %v2760 = vpop.f32.mrb[0].mxu0
        %2761 = vmatprep.mubr.f32.mxu0 %v2663
        %2762 = vmatmul.mubr.f32.gmra.mrb[0].mxu0 %v2639
        %v2763 = vpop.f32.mrb[0].mxu0
        %v2764 = vadd.f32 %v2674, %v2763
        %v2765 = vpop.f32.mrb[0].mxu0
        %2766 = vmatprep.mubr.f32.mxu0 %v2664
        %2767 = vmatmul.mubr.f32.gmra.mrb[0].mxu0 %v2640
        %v2768 = vpop.f32.mrb[0].mxu0
        %v2769 = vadd.f32 %v2674, %v2768
        %v2770 = vpop.f32.mrb[0].mxu0
        %2771 = vmatprep.mubr.f32.mxu0 %v2665
        %2772 = vmatmul.mubr.f32.gmra.mrb[0].mxu0 %v2641
        %v2773 = vpop.f32.mrb[0].mxu0
        %v2774 = vadd.f32 %v2674, %v2773
        %v2775 = vpop.f32.mrb[0].mxu0
        %2776 = vmatprep.mubr.f32.mxu0 %v2666
        %2777 = vmatmul.mubr.f32.gmra.mrb[0].mxu0 %v2642
        %v2778 = vpop.f32.mrb[0].mxu0
        %v2779 = vadd.f32 %v2674, %v2778
        %v2780 = vpop.f32.mrb[0].mxu0
        %2781 = vmatprep.mubr.f32.mxu0 %v2667
        %2782 = vmatmul.mubr.f32.gmra.mrb[0].mxu0 %v2643
        %v2783 = vpop.f32.mrb[0].mxu0
        %v2784 = vadd.f32 %v2674, %v2783
        %v2785 = vpop.f32.mrb[0].mxu0
        %2786 = vmatprep.mubr.f32.mxu0 %v2668
        %2787 = vmatmul.mubr.f32.gmra.mrb[0].mxu0 %v2644
        %v2788 = vpop.f32.mrb[0].mxu0
        %v2789 = vadd.f32 %v2674, %v2788
        %v2790 = vpop.f32.mrb[0].mxu0
        %2791 = vmatprep.mubr.f32.mxu0 %v2669
        %2792 = vmatmul.mubr.f32.gmra.mrb[0].mxu0 %v2645
        %v2793 = vpop.f32.mrb[0].mxu0
        %v2794 = vadd.f32 %v2674, %v2793
        %v2795 = vpop.f32.mrb[0].mxu0
        %2796 = vdwg.mxu0
        %2797 = vmatprep.subr.mxu0 0.0
        %2798 = vmatpush1.msra.mxu0 %v2014
        %2799 = vmatprep.subr.mxu0 0.0
        %2800 = vmatpush1.msra.mxu0 %v2015
        %2801 = vmatprep.subr.mxu0 0.0
        %2802 = vmatpush1.msra.mxu0 %v2016
        %2803 = vmatprep.subr.mxu0 0.0
        %2804 = vmatpush1.msra.mxu0 %v2017
        %2805 = vmatprep.subr.mxu0 0.0
        %2806 = vmatpush1.msra.mxu0 0.0
        %2807 = vmatprep.subr.mxu0 0.0
        %2808 = vmatpush1.msra.mxu0 0.0
        %2809 = vmatprep.subr.mxu0 0.0
        %2810 = vmatpush1.msra.mxu0 0.0
        %2811 = vmatprep.subr.mxu0 0.0
        %2812 = vmatpush1.msra.mxu0 0.0
        %2813 = vmatprep.subr.mxu0 0.0
        %2814 = vmatpush1.msra.mxu0 0.0
        %2815 = vmatprep.subr.mxu0 0.0
        %2816 = vmatpush1.msra.mxu0 0.0
        %2817 = vmatprep.subr.mxu0 0.0
        %2818 = vmatpush1.msra.mxu0 0.0
        %2819 = vmatprep.subr.mxu0 0.0
        %2820 = vmatpush1.msra.mxu0 0.0
        %2821 = vmatprep.subr.mxu0 0.0
        %2822 = vmatpush1.msra.mxu0 0.0
        %2823 = vmatprep.subr.mxu0 0.0
        %2824 = vmatpush1.msra.mxu0 0.0
        %2825 = vmatprep.subr.mxu0 0.0
        %2826 = vmatpush1.msra.mxu0 0.0
        %2827 = vmatprep.subr.mxu0 0.0
        %2828 = vmatpush1.msra.mxu0 0.0
        %2829 = vmatprep.subr.mxu0 0.0
        %2830 = vmatpush1.msra.mxu0 0.0
        %2831 = vmatprep.subr.mxu0 0.0
        %2832 = vmatpush1.msra.mxu0 0.0
        %2833 = vmatprep.subr.mxu0 0.0
        %2834 = vmatpush1.msra.mxu0 0.0
        %2835 = vmatprep.subr.mxu0 0.0
        %2836 = vmatpush1.msra.mxu0 0.0
        %2837 = vmatprep.subr.mxu0 0.0
        %2838 = vmatpush1.msra.mxu0 0.0
        %2839 = vmatprep.subr.mxu0 0.0
        %2840 = vmatpush1.msra.mxu0 0.0
        %2841 = vmatprep.subr.mxu0 0.0
        %2842 = vmatpush1.msra.mxu0 0.0
        %2843 = vmatprep.subr.mxu0 0.0
        %2844 = vmatpush1.msra.mxu0 0.0
        %2845 = vmatprep.subr.mxu0 0.0
        %2846 = vmatpush1.msra.mxu0 0.0
        %2847 = vmatprep.subr.mxu0 0.0
        %2848 = vmatpush1.msra.mxu0 0.0
        %2849 = vmatprep.subr.mxu0 0.0
        %2850 = vmatpush1.msra.mxu0 0.0
        %2851 = vmatprep.subr.mxu0 0.0
        %2852 = vmatpush1.msra.mxu0 0.0
        %2853 = vmatprep.subr.mxu0 0.0
        %2854 = vmatpush1.msra.mxu0 0.0
        %2855 = vmatprep.subr.mxu0 0.0
        %2856 = vmatpush1.msra.mxu0 0.0
        %2857 = vmatprep.subr.mxu0 0.0
        %2858 = vmatpush1.msra.mxu0 0.0
        %2859 = vmatprep.subr.mxu0 0.0
        %2860 = vmatpush1.msra.mxu0 0.0
        %2861 = vmatprep.mubr.f32.mxu0 0.0
        %2862 = vmatmul.mubr.f32.gmra.mrb[0].mxu0 %v2676
        %v2863 = vpop.f32.mrb[0].mxu0
        %v2864 = vadd.f32 %v2759, %v2863
        %v2865 = vpop.f32.mrb[0].mxu0
        %2866 = vmatprep.mubr.f32.mxu0 0.0
        %2867 = vmatmul.mubr.f32.gmra.mrb[0].mxu0 %v2678
        %v2868 = vpop.f32.mrb[0].mxu0
        %v2869 = vadd.f32 %v2764, %v2868
        %v2870 = vpop.f32.mrb[0].mxu0
        %2871 = vmatprep.mubr.f32.mxu0 0.0
        %2872 = vmatmul.mubr.f32.gmra.mrb[0].mxu0 %v2680
        %v2873 = vpop.f32.mrb[0].mxu0
        %v2874 = vadd.f32 %v2769, %v2873
        %v2875 = vpop.f32.mrb[0].mxu0
        %2876 = vmatprep.mubr.f32.mxu0 0.0
        %2877 = vmatmul.mubr.f32.gmra.mrb[0].mxu0 %v2682
        %v2878 = vpop.f32.mrb[0].mxu0
        %v2879 = vadd.f32 %v2774, %v2878
        %v2880 = vpop.f32.mrb[0].mxu0
        %2881 = vmatprep.mubr.f32.mxu0 0.0
        %2882 = vmatmul.mubr.f32.gmra.mrb[0].mxu0 %v2684
        %v2883 = vpop.f32.mrb[0].mxu0
        %v2884 = vadd.f32 %v2779, %v2883
        %v2885 = vpop.f32.mrb[0].mxu0
        %2886 = vmatprep.mubr.f32.mxu0 0.0
        %2887 = vmatmul.mubr.f32.gmra.mrb[0].mxu0 %v2686
        %v2888 = vpop.f32.mrb[0].mxu0
        %v2889 = vadd.f32 %v2784, %v2888
        %v2890 = vpop.f32.mrb[0].mxu0
        %2891 = vmatprep.mubr.f32.mxu0 0.0
        %2892 = vmatmul.mubr.f32.gmra.mrb[0].mxu0 %v2688
        %v2893 = vpop.f32.mrb[0].mxu0
        %v2894 = vadd.f32 %v2789, %v2893
        %v2895 = vpop.f32.mrb[0].mxu0
        %2896 = vmatprep.mubr.f32.mxu0 0.0
        %2897 = vmatmul.mubr.f32.gmra.mrb[0].mxu0 %v2690
        %v2898 = vpop.f32.mrb[0].mxu0
        %v2899 = vadd.f32 %v2794, %v2898
        %v2900 = vpop.f32.mrb[0].mxu0
        %2901 = vdwg.mxu0
        %v2902 = vmax.f32 %v2864, 0.0
        %v2903 = vmax.f32 %v2869, 0.0
        %v2904 = vmax.f32 %v2874, 0.0
        %v2905 = vmax.f32 %v2879, 0.0
        %v2906 = vmax.f32 %v2884, 0.0
        %v2907 = vmax.f32 %v2889, 0.0
        %v2908 = vmax.f32 %v2894, 0.0
        %v2909 = vmax.f32 %v2899, 0.0
        %v2910 = vsel %vm2628, %v2902, -inf
        %v2911 = vsel %vm2628, %v2903, -inf
        %v2912 = vmax.f32 %v2910, %v2911
        %v2913 = vsel %vm2628, %v2904, -inf
        %v2914 = vsel %vm2628, %v2905, -inf
        %v2915 = vmax.f32 %v2913, %v2914
        %v2916 = vsel %vm2628, %v2906, -inf
        %v2917 = vsel %vm2628, %v2907, -inf
        %v2918 = vmax.f32 %v2916, %v2917
        %v2919 = vsel %vm2628, %v2908, -inf
        %v2920 = vsel %vm2628, %v2909, -inf
        %v2921 = vmax.f32 %v2919, %v2920
        %v2926 = vcombine.high %v2912, %v2912
        %v2928 = vunpack.c.l.s4 1983009808
        %v2929 = vunpack.c.0.s8 %v2928
        %v2930 = vlaneseq
        %v2931 = vshrl.u32 %v2930, 7
        %v2932 = vsub.s32 %v2929, %v2931
        %v2933 = vrot.slane %v2912, %v2932
        %v2935 = vunpack.c.l.s4 1983009808
        %v2936 = vunpack.c.0.s8 %v2935
        %v2937 = vlaneseq
        %v2938 = vshrl.u32 %v2937, 7
        %v2939 = vsub.s32 %v2936, %v2938
        %v2940 = vrot.slane %v2926, %v2939
        %v2941 = vcombine.high %v2933, %v2933
        %v2942 = vcombine.high %v2940, %v2940
        %v2943 = vcombine.high %v2915, %v2915
        %v2945 = vunpack.c.l.s4 1983009808
        %v2946 = vunpack.c.0.s8 %v2945
        %v2947 = vlaneseq
        %v2948 = vshrl.u32 %v2947, 7
        %v2949 = vsub.s32 %v2946, %v2948
        %v2950 = vrot.slane %v2915, %v2949
        %v2952 = vunpack.c.l.s4 1983009808
        %v2953 = vunpack.c.0.s8 %v2952
        %v2954 = vlaneseq
        %v2955 = vshrl.u32 %v2954, 7
        %v2956 = vsub.s32 %v2953, %v2955
        %v2957 = vrot.slane %v2943, %v2956
        %v2958 = vcombine.high %v2950, %v2950
        %v2959 = vcombine.high %v2957, %v2957
        %v2960 = vcombine.high %v2918, %v2918
        %v2962 = vunpack.c.l.s4 1983009808
        %v2963 = vunpack.c.0.s8 %v2962
        %v2964 = vlaneseq
        %v2965 = vshrl.u32 %v2964, 7
        %v2966 = vsub.s32 %v2963, %v2965
        %v2967 = vrot.slane %v2918, %v2966
        %v2969 = vunpack.c.l.s4 1983009808
        %v2970 = vunpack.c.0.s8 %v2969
        %v2971 = vlaneseq
        %v2972 = vshrl.u32 %v2971, 7
        %v2973 = vsub.s32 %v2970, %v2972
        %v2974 = vrot.slane %v2960, %v2973
        %v2975 = vcombine.high %v2967, %v2967
        %v2976 = vcombine.high %v2974, %v2974
        %v2977 = vcombine.high %v2921, %v2921
        %v2979 = vunpack.c.l.s4 1983009808
        %v2980 = vunpack.c.0.s8 %v2979
        %v2981 = vlaneseq
        %v2982 = vshrl.u32 %v2981, 7
        %v2983 = vsub.s32 %v2980, %v2982
        %v2984 = vrot.slane %v2921, %v2983
        %v2986 = vunpack.c.l.s4 1983009808
        %v2987 = vunpack.c.0.s8 %v2986
        %v2988 = vlaneseq
        %v2989 = vshrl.u32 %v2988, 7
        %v2990 = vsub.s32 %v2987, %v2989
        %v2991 = vrot.slane %v2977, %v2990
        %v2992 = vcombine.high %v2984, %v2984
        %v2993 = vcombine.high %v2991, %v2991
        %vm3010 = vcmask 517120
        %v3011 = vsel %vm3010, %v2933, -inf
        %v3012 = vrot.slane %v3011, 4
        %v3013 = vmax.f32 %v3011, %v3012
        %v3014 = vrot.slane %v3013, 2
        %v3015 = vmax.f32 %v3013, %v3014
        %v3016 = vrot.slane %v3015, 1
        %v3017 = vmax.f32 %v3015, %v3016
        %v3018 = vsel %vm3010, %v2941, -inf
        %v3019 = vrot.slane %v3018, 4
        %v3020 = vmax.f32 %v3018, %v3019
        %v3021 = vrot.slane %v3020, 2
        %v3022 = vmax.f32 %v3020, %v3021
        %v3023 = vrot.slane %v3022, 1
        %v3024 = vmax.f32 %v3022, %v3023
        %v3025 = vsel %vm3010, %v2940, -inf
        %v3026 = vrot.slane %v3025, 4
        %v3027 = vmax.f32 %v3025, %v3026
        %v3028 = vrot.slane %v3027, 2
        %v3029 = vmax.f32 %v3027, %v3028
        %v3030 = vrot.slane %v3029, 1
        %v3031 = vmax.f32 %v3029, %v3030
        %v3032 = vsel %vm3010, %v2942, -inf
        %v3033 = vrot.slane %v3032, 4
        %v3034 = vmax.f32 %v3032, %v3033
        %v3035 = vrot.slane %v3034, 2
        %v3036 = vmax.f32 %v3034, %v3035
        %v3037 = vrot.slane %v3036, 1
        %v3038 = vmax.f32 %v3036, %v3037
        %v3039 = vsel %vm3010, %v2950, -inf
        %v3040 = vrot.slane %v3039, 4
        %v3041 = vmax.f32 %v3039, %v3040
        %v3042 = vrot.slane %v3041, 2
        %v3043 = vmax.f32 %v3041, %v3042
        %v3044 = vrot.slane %v3043, 1
        %v3045 = vmax.f32 %v3043, %v3044
        %v3046 = vsel %vm3010, %v2958, -inf
        %v3047 = vrot.slane %v3046, 4
        %v3048 = vmax.f32 %v3046, %v3047
        %v3049 = vrot.slane %v3048, 2
        %v3050 = vmax.f32 %v3048, %v3049
        %v3051 = vrot.slane %v3050, 1
        %v3052 = vmax.f32 %v3050, %v3051
        %v3053 = vsel %vm3010, %v2957, -inf
        %v3054 = vrot.slane %v3053, 4
        %v3055 = vmax.f32 %v3053, %v3054
        %v3056 = vrot.slane %v3055, 2
        %v3057 = vmax.f32 %v3055, %v3056
        %v3058 = vrot.slane %v3057, 1
        %v3059 = vmax.f32 %v3057, %v3058
        %v3060 = vsel %vm3010, %v2959, -inf
        %v3061 = vrot.slane %v3060, 4
        %v3062 = vmax.f32 %v3060, %v3061
        %v3063 = vrot.slane %v3062, 2
        %v3064 = vmax.f32 %v3062, %v3063
        %v3065 = vrot.slane %v3064, 1
        %v3066 = vmax.f32 %v3064, %v3065
        %v3067 = vsel %vm3010, %v2967, -inf
        %v3068 = vrot.slane %v3067, 4
        %v3069 = vmax.f32 %v3067, %v3068
        %v3070 = vrot.slane %v3069, 2
        %v3071 = vmax.f32 %v3069, %v3070
        %v3072 = vrot.slane %v3071, 1
        %v3073 = vmax.f32 %v3071, %v3072
        %v3074 = vsel %vm3010, %v2975, -inf
        %v3075 = vrot.slane %v3074, 4
        %v3076 = vmax.f32 %v3074, %v3075
        %v3077 = vrot.slane %v3076, 2
        %v3078 = vmax.f32 %v3076, %v3077
        %v3079 = vrot.slane %v3078, 1
        %v3080 = vmax.f32 %v3078, %v3079
        %v3081 = vsel %vm3010, %v2974, -inf
        %v3082 = vrot.slane %v3081, 4
        %v3083 = vmax.f32 %v3081, %v3082
        %v3084 = vrot.slane %v3083, 2
        %v3085 = vmax.f32 %v3083, %v3084
        %v3086 = vrot.slane %v3085, 1
        %v3087 = vmax.f32 %v3085, %v3086
        %v3088 = vsel %vm3010, %v2976, -inf
        %v3089 = vrot.slane %v3088, 4
        %v3090 = vmax.f32 %v3088, %v3089
        %v3091 = vrot.slane %v3090, 2
        %v3092 = vmax.f32 %v3090, %v3091
        %v3093 = vrot.slane %v3092, 1
        %v3094 = vmax.f32 %v3092, %v3093
        %v3095 = vsel %vm3010, %v2984, -inf
        %v3096 = vrot.slane %v3095, 4
        %v3097 = vmax.f32 %v3095, %v3096
        %v3098 = vrot.slane %v3097, 2
        %v3099 = vmax.f32 %v3097, %v3098
        %v3100 = vrot.slane %v3099, 1
        %v3101 = vmax.f32 %v3099, %v3100
        %v3102 = vsel %vm3010, %v2992, -inf
        %v3103 = vrot.slane %v3102, 4
        %v3104 = vmax.f32 %v3102, %v3103
        %v3105 = vrot.slane %v3104, 2
        %v3106 = vmax.f32 %v3104, %v3105
        %v3107 = vrot.slane %v3106, 1
        %v3108 = vmax.f32 %v3106, %v3107
        %v3109 = vsel %vm3010, %v2991, -inf
        %v3110 = vrot.slane %v3109, 4
        %v3111 = vmax.f32 %v3109, %v3110
        %v3112 = vrot.slane %v3111, 2
        %v3113 = vmax.f32 %v3111, %v3112
        %v3114 = vrot.slane %v3113, 1
        %v3115 = vmax.f32 %v3113, %v3114
        %v3116 = vsel %vm3010, %v2993, -inf
        %v3117 = vrot.slane %v3116, 4
        %v3118 = vmax.f32 %v3116, %v3117
        %v3119 = vrot.slane %v3118, 2
        %v3120 = vmax.f32 %v3118, %v3119
        %v3121 = vrot.slane %v3120, 1
        %v3122 = vmax.f32 %v3120, %v3121
        %3124 = vrot.lane.b32.xlu0 %v3024, 64
        %v3125 = vpop.permute.xlu0 %3124
        %3128 = vrot.lane.b32.xlu0 %v3038, 64
        %v3129 = vpop.permute.xlu0 %3128
        %3132 = vrot.lane.b32.xlu0 %v3052, 64
        %v3133 = vpop.permute.xlu0 %3132
        %3136 = vrot.lane.b32.xlu0 %v3066, 64
        %v3137 = vpop.permute.xlu0 %3136
        %3140 = vrot.lane.b32.xlu0 %v3080, 64
        %v3141 = vpop.permute.xlu0 %3140
        %3144 = vrot.lane.b32.xlu0 %v3094, 64
        %v3145 = vpop.permute.xlu0 %3144
        %3148 = vrot.lane.b32.xlu0 %v3108, 64
        %v3149 = vpop.permute.xlu0 %3148
        %3152 = vrot.lane.b32.xlu0 %v3122, 64
        %v3153 = vpop.permute.xlu0 %3152
        %v3155 = vsel %vm2628, %v3017, %v3125
        %v3156 = vsel %vm2628, %v3031, %v3129
        %v3157 = vsel %vm2628, %v3045, %v3133
        %v3158 = vsel %vm2628, %v3059, %v3137
        %v3159 = vsel %vm2628, %v3073, %v3141
        %v3160 = vsel %vm2628, %v3087, %v3145
        %v3161 = vsel %vm2628, %v3101, %v3149
        %v3162 = vsel %vm2628, %v3115, %v3153
        %v3163 = vld [vmem:[%s5] sm:$0xff]
        %v3164 = vld [vmem:[%s5 + $0x8] sm:$0xff]
        %v3165 = vld [vmem:[%s5 + $0x10] sm:$0xff]
        %v3166 = vld [vmem:[%s5 + $0x18] sm:$0xff]
        %v3167 = vld [vmem:[%s5 + $0x20] sm:$0xff]
        %v3168 = vld [vmem:[%s5 + $0x28] sm:$0xff]
        %v3169 = vld [vmem:[%s5 + $0x30] sm:$0xff]
        %v3170 = vld [vmem:[%s5 + $0x38] sm:$0xff]
        %v3171 = vld [vmem:[%s5 + $0x40] sm:$0xff]
        %v3172 = vld [vmem:[%s5 + $0x48] sm:$0xff]
        %v3173 = vld [vmem:[%s5 + $0x50] sm:$0xff]
        %v3174 = vld [vmem:[%s5 + $0x58] sm:$0xff]
        %v3175 = vld [vmem:[%s5 + $0x60] sm:$0xff]
        %v3176 = vld [vmem:[%s5 + $0x68] sm:$0xff]
        %v3177 = vld [vmem:[%s5 + $0x70] sm:$0xff]
        %v3178 = vld [vmem:[%s5 + $0x78] sm:$0xff]
        %v3179 = vld [vmem:[%s5 + $0x80] sm:$0xff]
        %v3180 = vld [vmem:[%s5 + $0x88] sm:$0xff]
        %v3181 = vld [vmem:[%s5 + $0x90] sm:$0xff]
        %v3182 = vld [vmem:[%s5 + $0x98] sm:$0xff]
        %v3183 = vld [vmem:[%s5 + $0xa0] sm:$0xff]
        %v3184 = vld [vmem:[%s5 + $0xa8] sm:$0xff]
        %v3185 = vld [vmem:[%s5 + $0xb0] sm:$0xff]
        %v3186 = vld [vmem:[%s5 + $0xb8] sm:$0xff]
        %v3187 = vld [vmem:[%s5 + $0xc0] sm:$0xff]
        %v3188 = vld [vmem:[%s5 + $0xc8] sm:$0xff]
        %v3189 = vld [vmem:[%s5 + $0xd0] sm:$0xff]
        %v3190 = vld [vmem:[%s5 + $0xd8] sm:$0xff]
        %v3191 = vld [vmem:[%s5 + $0xe0] sm:$0xff]
        %v3192 = vld [vmem:[%s5 + $0xe8] sm:$0xff]
        %v3193 = vld [vmem:[%s5 + $0xf0] sm:$0xff]
        %v3194 = vld [vmem:[%s5 + $0xf8] sm:$0xff]
        %v3195 = vld [vmem:[%s5 + $0x100] sm:$0xff]
        %v3196 = vld [vmem:[%s5 + $0x108] sm:$0xff]
        %v3197 = vld [vmem:[%s5 + $0x110] sm:$0xff]
        %v3198 = vld [vmem:[%s5 + $0x118] sm:$0xff]
        %v3199 = vld [vmem:[%s5 + $0x120] sm:$0xff]
        %v3200 = vld [vmem:[%s5 + $0x128] sm:$0xff]
        %v3201 = vld [vmem:[%s5 + $0x130] sm:$0xff]
        %v3202 = vld [vmem:[%s5 + $0x138] sm:$0xff]
        %v3203 = vld [vmem:[%s5 + $0x140] sm:$0xff]
        %v3204 = vld [vmem:[%s5 + $0x148] sm:$0xff]
        %v3205 = vld [vmem:[%s5 + $0x150] sm:$0xff]
        %v3206 = vld [vmem:[%s5 + $0x158] sm:$0xff]
        %v3207 = vld [vmem:[%s5 + $0x160] sm:$0xff]
        %v3208 = vld [vmem:[%s5 + $0x168] sm:$0xff]
        %v3209 = vld [vmem:[%s5 + $0x170] sm:$0xff]
        %v3210 = vld [vmem:[%s5 + $0x178] sm:$0xff]
        %v3211 = vld [vmem:[%s5 + $0x180] sm:$0xff]
        %v3212 = vld [vmem:[%s5 + $0x188] sm:$0xff]
        %v3213 = vld [vmem:[%s5 + $0x190] sm:$0xff]
        %v3214 = vld [vmem:[%s5 + $0x198] sm:$0xff]
        %v3215 = vld [vmem:[%s5 + $0x1a0] sm:$0xff]
        %v3216 = vld [vmem:[%s5 + $0x1a8] sm:$0xff]
        %v3217 = vld [vmem:[%s5 + $0x1b0] sm:$0xff]
        %v3218 = vld [vmem:[%s5 + $0x1b8] sm:$0xff]
        %v3219 = vld [vmem:[%s5 + $0x1c0] sm:$0xff]
        %v3220 = vld [vmem:[%s5 + $0x1c8] sm:$0xff]
        %v3221 = vld [vmem:[%s5 + $0x1d0] sm:$0xff]
        %v3222 = vld [vmem:[%s5 + $0x1d8] sm:$0xff]
        %v3223 = vld [vmem:[%s5 + $0x1e0] sm:$0xff]
        %v3224 = vld [vmem:[%s5 + $0x1e8] sm:$0xff]
        %v3225 = vld [vmem:[%s5 + $0x1f0] sm:$0xff]
        %v3226 = vld [vmem:[%s5 + $0x1f8] sm:$0xff]
        %v3227 = vld [vmem:[%s5 + $0x200] sm:$0xff]
        %v3228 = vld [vmem:[%s5 + $0x208] sm:$0xff]
        %v3229 = vld [vmem:[%s5 + $0x210] sm:$0xff]
        %v3230 = vld [vmem:[%s5 + $0x218] sm:$0xff]
        %v3231 = vld [vmem:[%s5 + $0x220] sm:$0xff]
        %v3232 = vld [vmem:[%s5 + $0x228] sm:$0xff]
        %v3233 = vld [vmem:[%s5 + $0x230] sm:$0xff]
        %v3234 = vld [vmem:[%s5 + $0x238] sm:$0xff]
        %v3235 = vld [vmem:[%s5 + $0x240] sm:$0xff]
        %v3236 = vld [vmem:[%s5 + $0x248] sm:$0xff]
        %v3237 = vld [vmem:[%s5 + $0x250] sm:$0xff]
        %v3238 = vld [vmem:[%s5 + $0x258] sm:$0xff]
        %v3239 = vld [vmem:[%s5 + $0x260] sm:$0xff]
        %v3240 = vld [vmem:[%s5 + $0x268] sm:$0xff]
        %v3241 = vld [vmem:[%s5 + $0x270] sm:$0xff]
        %v3242 = vld [vmem:[%s5 + $0x278] sm:$0xff]
        %v3243 = vld [vmem:[%s5 + $0x280] sm:$0xff]
        %v3244 = vld [vmem:[%s5 + $0x288] sm:$0xff]
        %v3245 = vld [vmem:[%s5 + $0x290] sm:$0xff]
        %v3246 = vld [vmem:[%s5 + $0x298] sm:$0xff]
        %v3247 = vld [vmem:[%s5 + $0x2a0] sm:$0xff]
        %v3248 = vld [vmem:[%s5 + $0x2a8] sm:$0xff]
        %v3249 = vld [vmem:[%s5 + $0x2b0] sm:$0xff]
        %v3250 = vld [vmem:[%s5 + $0x2b8] sm:$0xff]
        %v3251 = vld [vmem:[%s5 + $0x2c0] sm:$0xff]
        %v3252 = vld [vmem:[%s5 + $0x2c8] sm:$0xff]
        %v3253 = vld [vmem:[%s5 + $0x2d0] sm:$0xff]
        %v3254 = vld [vmem:[%s5 + $0x2d8] sm:$0xff]
        %v3255 = vld [vmem:[%s5 + $0x2e0] sm:$0xff]
        %v3256 = vld [vmem:[%s5 + $0x2e8] sm:$0xff]
        %v3257 = vld [vmem:[%s5 + $0x2f0] sm:$0xff]
        %v3258 = vld [vmem:[%s5 + $0x2f8] sm:$0xff]
        %v3259 = vld [vmem:[%s5 + $0x300] sm:$0xff]
        %v3260 = vld [vmem:[%s5 + $0x308] sm:$0xff]
        %v3261 = vld [vmem:[%s5 + $0x310] sm:$0xff]
        %v3262 = vld [vmem:[%s5 + $0x318] sm:$0xff]
        %v3263 = vld [vmem:[%s5 + $0x320] sm:$0xff]
        %v3264 = vld [vmem:[%s5 + $0x328] sm:$0xff]
        %v3265 = vld [vmem:[%s5 + $0x330] sm:$0xff]
        %v3266 = vld [vmem:[%s5 + $0x338] sm:$0xff]
        %v3267 = vld [vmem:[%s5 + $0x340] sm:$0xff]
        %v3268 = vld [vmem:[%s5 + $0x348] sm:$0xff]
        %v3269 = vld [vmem:[%s5 + $0x350] sm:$0xff]
        %v3270 = vld [vmem:[%s5 + $0x358] sm:$0xff]
        %v3271 = vld [vmem:[%s5 + $0x360] sm:$0xff]
        %v3272 = vld [vmem:[%s5 + $0x368] sm:$0xff]
        %v3273 = vld [vmem:[%s5 + $0x370] sm:$0xff]
        %v3274 = vld [vmem:[%s5 + $0x378] sm:$0xff]
        %v3275 = vld [vmem:[%s5 + $0x380] sm:$0xff]
        %v3276 = vld [vmem:[%s5 + $0x388] sm:$0xff]
        %v3277 = vld [vmem:[%s5 + $0x390] sm:$0xff]
        %v3278 = vld [vmem:[%s5 + $0x398] sm:$0xff]
        %v3279 = vld [vmem:[%s5 + $0x3a0] sm:$0xff]
        %v3280 = vld [vmem:[%s5 + $0x3a8] sm:$0xff]
        %v3281 = vld [vmem:[%s5 + $0x3b0] sm:$0xff]
        %v3282 = vld [vmem:[%s5 + $0x3b8] sm:$0xff]
        %v3283 = vld [vmem:[%s5 + $0x3c0] sm:$0xff]
        %v3284 = vld [vmem:[%s5 + $0x3c8] sm:$0xff]
        %v3285 = vld [vmem:[%s5 + $0x3d0] sm:$0xff]
        %v3286 = vld [vmem:[%s5 + $0x3d8] sm:$0xff]
        %v3287 = vld [vmem:[%s5 + $0x3e0] sm:$0xff]
        %v3288 = vld [vmem:[%s5 + $0x3e8] sm:$0xff]
        %v3289 = vld [vmem:[%s5 + $0x3f0] sm:$0xff]
        %v3290 = vld [vmem:[%s5 + $0x3f8] sm:$0xff]
        %v3291 = vld [vmem:[%s6] sm:$0x1]
        %3292 = vmatprep.subr.mxu0 0.0
        %3293 = vmatpush1.msra.mxu0 %v3163
        %3294 = vmatprep.subr.mxu0 0.0
        %3295 = vmatpush1.msra.mxu0 %v3164
        %3296 = vmatprep.subr.mxu0 0.0
        %3297 = vmatpush1.msra.mxu0 %v3165
        %3298 = vmatprep.subr.mxu0 0.0
        %3299 = vmatpush1.msra.mxu0 %v3166
        %3300 = vmatprep.subr.mxu0 0.0
        %3301 = vmatpush1.msra.mxu0 %v3167
        %3302 = vmatprep.subr.mxu0 0.0
        %3303 = vmatpush1.msra.mxu0 %v3168
        %3304 = vmatprep.subr.mxu0 0.0
        %3305 = vmatpush1.msra.mxu0 %v3169
        %3306 = vmatprep.subr.mxu0 0.0
        %3307 = vmatpush1.msra.mxu0 %v3170
        %3308 = vmatprep.subr.mxu0 0.0
        %3309 = vmatpush1.msra.mxu0 %v3171
        %3310 = vmatprep.subr.mxu0 0.0
        %3311 = vmatpush1.msra.mxu0 %v3172
        %3312 = vmatprep.subr.mxu0 0.0
        %3313 = vmatpush1.msra.mxu0 %v3173
        %3314 = vmatprep.subr.mxu0 0.0
        %3315 = vmatpush1.msra.mxu0 %v3174
        %3316 = vmatprep.subr.mxu0 0.0
        %3317 = vmatpush1.msra.mxu0 %v3175
        %3318 = vmatprep.subr.mxu0 0.0
        %3319 = vmatpush1.msra.mxu0 %v3176
        %3320 = vmatprep.subr.mxu0 0.0
        %3321 = vmatpush1.msra.mxu0 %v3177
        %3322 = vmatprep.subr.mxu0 0.0
        %3323 = vmatpush1.msra.mxu0 %v3178
        %3324 = vmatprep.subr.mxu0 0.0
        %3325 = vmatpush1.msra.mxu0 %v3179
        %3326 = vmatprep.subr.mxu0 0.0
        %3327 = vmatpush1.msra.mxu0 %v3180
        %3328 = vmatprep.subr.mxu0 0.0
        %3329 = vmatpush1.msra.mxu0 %v3181
        %3330 = vmatprep.subr.mxu0 0.0
        %3331 = vmatpush1.msra.mxu0 %v3182
        %3332 = vmatprep.subr.mxu0 0.0
        %3333 = vmatpush1.msra.mxu0 %v3183
        %3334 = vmatprep.subr.mxu0 0.0
        %3335 = vmatpush1.msra.mxu0 %v3184
        %3336 = vmatprep.subr.mxu0 0.0
        %3337 = vmatpush1.msra.mxu0 %v3185
        %3338 = vmatprep.subr.mxu0 0.0
        %3339 = vmatpush1.msra.mxu0 %v3186
        %3340 = vmatprep.subr.mxu0 0.0
        %3341 = vmatpush1.msra.mxu0 %v3187
        %3342 = vmatprep.subr.mxu0 0.0
        %3343 = vmatpush1.msra.mxu0 %v3188
        %3344 = vmatprep.subr.mxu0 0.0
        %3345 = vmatpush1.msra.mxu0 %v3189
        %3346 = vmatprep.subr.mxu0 0.0
        %3347 = vmatpush1.msra.mxu0 %v3190
        %3348 = vmatprep.subr.mxu0 0.0
        %3349 = vmatpush1.msra.mxu0 %v3191
        %3350 = vmatprep.subr.mxu0 0.0
        %3351 = vmatpush1.msra.mxu0 %v3192
        %3352 = vmatprep.subr.mxu0 0.0
        %3353 = vmatpush1.msra.mxu0 %v3193
        %3354 = vmatprep.subr.mxu0 0.0
        %3355 = vmatpush1.msra.mxu0 %v3194
        %3356 = vmatprep.mubr.f32.mxu0 %v3156
        %3357 = vmatmul.mubr.f32.gmra.mrb[0].mxu0 %v3155
        %v3358 = vpop.f32.mrb[0].mxu0
        %v3359 = vadd.f32 %v3291, %v3358
        %v3360 = vpop.f32.mrb[0].mxu0
        %3361 = vdwg.mxu0
        %3362 = vmatprep.subr.mxu0 0.0
        %3363 = vmatpush1.msra.mxu0 %v3195
        %3364 = vmatprep.subr.mxu0 0.0
        %3365 = vmatpush1.msra.mxu0 %v3196
        %3366 = vmatprep.subr.mxu0 0.0
        %3367 = vmatpush1.msra.mxu0 %v3197
        %3368 = vmatprep.subr.mxu0 0.0
        %3369 = vmatpush1.msra.mxu0 %v3198
        %3370 = vmatprep.subr.mxu0 0.0
        %3371 = vmatpush1.msra.mxu0 %v3199
        %3372 = vmatprep.subr.mxu0 0.0
        %3373 = vmatpush1.msra.mxu0 %v3200
        %3374 = vmatprep.subr.mxu0 0.0
        %3375 = vmatpush1.msra.mxu0 %v3201
        %3376 = vmatprep.subr.mxu0 0.0
        %3377 = vmatpush1.msra.mxu0 %v3202
        %3378 = vmatprep.subr.mxu0 0.0
        %3379 = vmatpush1.msra.mxu0 %v3203
        %3380 = vmatprep.subr.mxu0 0.0
        %3381 = vmatpush1.msra.mxu0 %v3204
        %3382 = vmatprep.subr.mxu0 0.0
        %3383 = vmatpush1.msra.mxu0 %v3205
        %3384 = vmatprep.subr.mxu0 0.0
        %3385 = vmatpush1.msra.mxu0 %v3206
        %3386 = vmatprep.subr.mxu0 0.0
        %3387 = vmatpush1.msra.mxu0 %v3207
        %3388 = vmatprep.subr.mxu0 0.0
        %3389 = vmatpush1.msra.mxu0 %v3208
        %3390 = vmatprep.subr.mxu0 0.0
        %3391 = vmatpush1.msra.mxu0 %v3209
        %3392 = vmatprep.subr.mxu0 0.0
        %3393 = vmatpush1.msra.mxu0 %v3210
        %3394 = vmatprep.subr.mxu0 0.0
        %3395 = vmatpush1.msra.mxu0 %v3211
        %3396 = vmatprep.subr.mxu0 0.0
        %3397 = vmatpush1.msra.mxu0 %v3212
        %3398 = vmatprep.subr.mxu0 0.0
        %3399 = vmatpush1.msra.mxu0 %v3213
        %3400 = vmatprep.subr.mxu0 0.0
        %3401 = vmatpush1.msra.mxu0 %v3214
        %3402 = vmatprep.subr.mxu0 0.0
        %3403 = vmatpush1.msra.mxu0 %v3215
        %3404 = vmatprep.subr.mxu0 0.0
        %3405 = vmatpush1.msra.mxu0 %v3216
        %3406 = vmatprep.subr.mxu0 0.0
        %3407 = vmatpush1.msra.mxu0 %v3217
        %3408 = vmatprep.subr.mxu0 0.0
        %3409 = vmatpush1.msra.mxu0 %v3218
        %3410 = vmatprep.subr.mxu0 0.0
        %3411 = vmatpush1.msra.mxu0 %v3219
        %3412 = vmatprep.subr.mxu0 0.0
        %3413 = vmatpush1.msra.mxu0 %v3220
        %3414 = vmatprep.subr.mxu0 0.0
        %3415 = vmatpush1.msra.mxu0 %v3221
        %3416 = vmatprep.subr.mxu0 0.0
        %3417 = vmatpush1.msra.mxu0 %v3222
        %3418 = vmatprep.subr.mxu0 0.0
        %3419 = vmatpush1.msra.mxu0 %v3223
        %3420 = vmatprep.subr.mxu0 0.0
        %3421 = vmatpush1.msra.mxu0 %v3224
        %3422 = vmatprep.subr.mxu0 0.0
        %3423 = vmatpush1.msra.mxu0 %v3225
        %3424 = vmatprep.subr.mxu0 0.0
        %3425 = vmatpush1.msra.mxu0 %v3226
        %3426 = vmatprep.mubr.f32.mxu0 %v3158
        %3427 = vmatmul.mubr.f32.gmra.mrb[0].mxu0 %v3157
        %v3428 = vpop.f32.mrb[0].mxu0
        %v3429 = vadd.f32 %v3359, %v3428
        %v3430 = vpop.f32.mrb[0].mxu0
        %3431 = vdwg.mxu0
        %3432 = vmatprep.subr.mxu0 0.0
        %3433 = vmatpush1.msra.mxu0 %v3227
        %3434 = vmatprep.subr.mxu0 0.0
        %3435 = vmatpush1.msra.mxu0 %v3228
        %3436 = vmatprep.subr.mxu0 0.0
        %3437 = vmatpush1.msra.mxu0 %v3229
        %3438 = vmatprep.subr.mxu0 0.0
        %3439 = vmatpush1.msra.mxu0 %v3230
        %3440 = vmatprep.subr.mxu0 0.0
        %3441 = vmatpush1.msra.mxu0 %v3231
        %3442 = vmatprep.subr.mxu0 0.0
        %3443 = vmatpush1.msra.mxu0 %v3232
        %3444 = vmatprep.subr.mxu0 0.0
        %3445 = vmatpush1.msra.mxu0 %v3233
        %3446 = vmatprep.subr.mxu0 0.0
        %3447 = vmatpush1.msra.mxu0 %v3234
        %3448 = vmatprep.subr.mxu0 0.0
        %3449 = vmatpush1.msra.mxu0 %v3235
        %3450 = vmatprep.subr.mxu0 0.0
        %3451 = vmatpush1.msra.mxu0 %v3236
        %3452 = vmatprep.subr.mxu0 0.0
        %3453 = vmatpush1.msra.mxu0 %v3237
        %3454 = vmatprep.subr.mxu0 0.0
        %3455 = vmatpush1.msra.mxu0 %v3238
        %3456 = vmatprep.subr.mxu0 0.0
        %3457 = vmatpush1.msra.mxu0 %v3239
        %3458 = vmatprep.subr.mxu0 0.0
        %3459 = vmatpush1.msra.mxu0 %v3240
        %3460 = vmatprep.subr.mxu0 0.0
        %3461 = vmatpush1.msra.mxu0 %v3241
        %3462 = vmatprep.subr.mxu0 0.0
        %3463 = vmatpush1.msra.mxu0 %v3242
        %3464 = vmatprep.subr.mxu0 0.0
        %3465 = vmatpush1.msra.mxu0 %v3243
        %3466 = vmatprep.subr.mxu0 0.0
        %3467 = vmatpush1.msra.mxu0 %v3244
        %3468 = vmatprep.subr.mxu0 0.0
        %3469 = vmatpush1.msra.mxu0 %v3245
        %3470 = vmatprep.subr.mxu0 0.0
        %3471 = vmatpush1.msra.mxu0 %v3246
        %3472 = vmatprep.subr.mxu0 0.0
        %3473 = vmatpush1.msra.mxu0 %v3247
        %3474 = vmatprep.subr.mxu0 0.0
        %3475 = vmatpush1.msra.mxu0 %v3248
        %3476 = vmatprep.subr.mxu0 0.0
        %3477 = vmatpush1.msra.mxu0 %v3249
        %3478 = vmatprep.subr.mxu0 0.0
        %3479 = vmatpush1.msra.mxu0 %v3250
        %3480 = vmatprep.subr.mxu0 0.0
        %3481 = vmatpush1.msra.mxu0 %v3251
        %3482 = vmatprep.subr.mxu0 0.0
        %3483 = vmatpush1.msra.mxu0 %v3252
        %3484 = vmatprep.subr.mxu0 0.0
        %3485 = vmatpush1.msra.mxu0 %v3253
        %3486 = vmatprep.subr.mxu0 0.0
        %3487 = vmatpush1.msra.mxu0 %v3254
        %3488 = vmatprep.subr.mxu0 0.0
        %3489 = vmatpush1.msra.mxu0 %v3255
        %3490 = vmatprep.subr.mxu0 0.0
        %3491 = vmatpush1.msra.mxu0 %v3256
        %3492 = vmatprep.subr.mxu0 0.0
        %3493 = vmatpush1.msra.mxu0 %v3257
        %3494 = vmatprep.subr.mxu0 0.0
        %3495 = vmatpush1.msra.mxu0 %v3258
        %3496 = vmatprep.mubr.f32.mxu0 %v3160
        %3497 = vmatmul.mubr.f32.gmra.mrb[0].mxu0 %v3159
        %v3498 = vpop.f32.mrb[0].mxu0
        %v3499 = vadd.f32 %v3429, %v3498
        %v3500 = vpop.f32.mrb[0].mxu0
        %3501 = vdwg.mxu0
        %3502 = vmatprep.subr.mxu0 0.0
        %3503 = vmatpush1.msra.mxu0 %v3259
        %3504 = vmatprep.subr.mxu0 0.0
        %3505 = vmatpush1.msra.mxu0 %v3260
        %3506 = vmatprep.subr.mxu0 0.0
        %3507 = vmatpush1.msra.mxu0 %v3261
        %3508 = vmatprep.subr.mxu0 0.0
        %3509 = vmatpush1.msra.mxu0 %v3262
        %3510 = vmatprep.subr.mxu0 0.0
        %3511 = vmatpush1.msra.mxu0 %v3263
        %3512 = vmatprep.subr.mxu0 0.0
        %3513 = vmatpush1.msra.mxu0 %v3264
        %3514 = vmatprep.subr.mxu0 0.0
        %3515 = vmatpush1.msra.mxu0 %v3265
        %3516 = vmatprep.subr.mxu0 0.0
        %3517 = vmatpush1.msra.mxu0 %v3266
        %3518 = vmatprep.subr.mxu0 0.0
        %3519 = vmatpush1.msra.mxu0 %v3267
        %3520 = vmatprep.subr.mxu0 0.0
        %3521 = vmatpush1.msra.mxu0 %v3268
        %3522 = vmatprep.subr.mxu0 0.0
        %3523 = vmatpush1.msra.mxu0 %v3269
        %3524 = vmatprep.subr.mxu0 0.0
        %3525 = vmatpush1.msra.mxu0 %v3270
        %3526 = vmatprep.subr.mxu0 0.0
        %3527 = vmatpush1.msra.mxu0 %v3271
        %3528 = vmatprep.subr.mxu0 0.0
        %3529 = vmatpush1.msra.mxu0 %v3272
        %3530 = vmatprep.subr.mxu0 0.0
        %3531 = vmatpush1.msra.mxu0 %v3273
        %3532 = vmatprep.subr.mxu0 0.0
        %3533 = vmatpush1.msra.mxu0 %v3274
        %3534 = vmatprep.subr.mxu0 0.0
        %3535 = vmatpush1.msra.mxu0 %v3275
        %3536 = vmatprep.subr.mxu0 0.0
        %3537 = vmatpush1.msra.mxu0 %v3276
        %3538 = vmatprep.subr.mxu0 0.0
        %3539 = vmatpush1.msra.mxu0 %v3277
        %3540 = vmatprep.subr.mxu0 0.0
        %3541 = vmatpush1.msra.mxu0 %v3278
        %3542 = vmatprep.subr.mxu0 0.0
        %3543 = vmatpush1.msra.mxu0 %v3279
        %3544 = vmatprep.subr.mxu0 0.0
        %3545 = vmatpush1.msra.mxu0 %v3280
        %3546 = vmatprep.subr.mxu0 0.0
        %3547 = vmatpush1.msra.mxu0 %v3281
        %3548 = vmatprep.subr.mxu0 0.0
        %3549 = vmatpush1.msra.mxu0 %v3282
        %3550 = vmatprep.subr.mxu0 0.0
        %3551 = vmatpush1.msra.mxu0 %v3283
        %3552 = vmatprep.subr.mxu0 0.0
        %3553 = vmatpush1.msra.mxu0 %v3284
        %3554 = vmatprep.subr.mxu0 0.0
        %3555 = vmatpush1.msra.mxu0 %v3285
        %3556 = vmatprep.subr.mxu0 0.0
        %3557 = vmatpush1.msra.mxu0 %v3286
        %3558 = vmatprep.subr.mxu0 0.0
        %3559 = vmatpush1.msra.mxu0 %v3287
        %3560 = vmatprep.subr.mxu0 0.0
        %3561 = vmatpush1.msra.mxu0 %v3288
        %3562 = vmatprep.subr.mxu0 0.0
        %3563 = vmatpush1.msra.mxu0 %v3289
        %3564 = vmatprep.subr.mxu0 0.0
        %3565 = vmatpush1.msra.mxu0 %v3290
        %3566 = vmatprep.mubr.f32.mxu0 %v3162
        %3567 = vmatmul.mubr.f32.gmra.mrb[0].mxu0 %v3161
        %v3568 = vpop.f32.mrb[0].mxu0
        %v3569 = vadd.f32 %v3499, %v3568
        %v3570 = vpop.f32.mrb[0].mxu0
        %3571 = vdwg.mxu0
        %v3572 = vmax.f32 %v3569, 0.0
        %v3573 = vld [vmem:[%s7] sm:$0xff]
        %v3574 = vld [vmem:[%s7 + $0x8] sm:$0xff]
        %v3575 = vld [vmem:[%s7 + $0x10] sm:$0xff]
        %v3576 = vld [vmem:[%s7 + $0x18] sm:$0xff]
        %v3577 = vld [vmem:[%s7 + $0x20] sm:$0xff]
        %v3578 = vld [vmem:[%s7 + $0x28] sm:$0xff]
        %v3579 = vld [vmem:[%s7 + $0x30] sm:$0xff]
        %v3580 = vld [vmem:[%s7 + $0x38] sm:$0xff]
        %v3581 = vld [vmem:[%s7 + $0x40] sm:$0xff]
        %v3582 = vld [vmem:[%s7 + $0x48] sm:$0xff]
        %v3583 = vld [vmem:[%s7 + $0x50] sm:$0xff]
        %v3584 = vld [vmem:[%s7 + $0x58] sm:$0xff]
        %v3585 = vld [vmem:[%s7 + $0x60] sm:$0xff]
        %v3586 = vld [vmem:[%s7 + $0x68] sm:$0xff]
        %v3587 = vld [vmem:[%s7 + $0x70] sm:$0xff]
        %v3588 = vld [vmem:[%s7 + $0x78] sm:$0xff]
        %v3589 = vld [vmem:[%s8] sm:$0x1]
        %3590 = vmatprep.subr.mxu0 0.0
        %3591 = vmatpush1.msra.mxu0 %v3573
        %3592 = vmatprep.subr.mxu0 0.0
        %3593 = vmatpush1.msra.mxu0 %v3574
        %3594 = vmatprep.subr.mxu0 0.0
        %3595 = vmatpush1.msra.mxu0 %v3575
        %3596 = vmatprep.subr.mxu0 0.0
        %3597 = vmatpush1.msra.mxu0 %v3576
        %3598 = vmatprep.subr.mxu0 0.0
        %3599 = vmatpush1.msra.mxu0 %v3577
        %3600 = vmatprep.subr.mxu0 0.0
        %3601 = vmatpush1.msra.mxu0 %v3578
        %3602 = vmatprep.subr.mxu0 0.0
        %3603 = vmatpush1.msra.mxu0 %v3579
        %3604 = vmatprep.subr.mxu0 0.0
        %3605 = vmatpush1.msra.mxu0 %v3580
        %3606 = vmatprep.subr.mxu0 0.0
        %3607 = vmatpush1.msra.mxu0 %v3581
        %3608 = vmatprep.subr.mxu0 0.0
        %3609 = vmatpush1.msra.mxu0 %v3582
        %3610 = vmatprep.subr.mxu0 0.0
        %3611 = vmatpush1.msra.mxu0 %v3583
        %3612 = vmatprep.subr.mxu0 0.0
        %3613 = vmatpush1.msra.mxu0 %v3584
        %3614 = vmatprep.subr.mxu0 0.0
        %3615 = vmatpush1.msra.mxu0 %v3585
        %3616 = vmatprep.subr.mxu0 0.0
        %3617 = vmatpush1.msra.mxu0 %v3586
        %3618 = vmatprep.subr.mxu0 0.0
        %3619 = vmatpush1.msra.mxu0 %v3587
        %3620 = vmatprep.subr.mxu0 0.0
        %3621 = vmatpush1.msra.mxu0 %v3588
        %3622 = vmatprep.subr.mxu0 0.0
        %3623 = vmatpush1.msra.mxu0 0.0
        %3624 = vmatprep.subr.mxu0 0.0
        %3625 = vmatpush1.msra.mxu0 0.0
        %3626 = vmatprep.subr.mxu0 0.0
        %3627 = vmatpush1.msra.mxu0 0.0
        %3628 = vmatprep.subr.mxu0 0.0
        %3629 = vmatpush1.msra.mxu0 0.0
        %3630 = vmatprep.subr.mxu0 0.0
        %3631 = vmatpush1.msra.mxu0 0.0
        %3632 = vmatprep.subr.mxu0 0.0
        %3633 = vmatpush1.msra.mxu0 0.0
        %3634 = vmatprep.subr.mxu0 0.0
        %3635 = vmatpush1.msra.mxu0 0.0
        %3636 = vmatprep.subr.mxu0 0.0
        %3637 = vmatpush1.msra.mxu0 0.0
        %3638 = vmatprep.subr.mxu0 0.0
        %3639 = vmatpush1.msra.mxu0 0.0
        %3640 = vmatprep.subr.mxu0 0.0
        %3641 = vmatpush1.msra.mxu0 0.0
        %3642 = vmatprep.subr.mxu0 0.0
        %3643 = vmatpush1.msra.mxu0 0.0
        %3644 = vmatprep.subr.mxu0 0.0
        %3645 = vmatpush1.msra.mxu0 0.0
        %3646 = vmatprep.subr.mxu0 0.0
        %3647 = vmatpush1.msra.mxu0 0.0
        %3648 = vmatprep.subr.mxu0 0.0
        %3649 = vmatpush1.msra.mxu0 0.0
        %3650 = vmatprep.subr.mxu0 0.0
        %3651 = vmatpush1.msra.mxu0 0.0
        %3652 = vmatprep.subr.mxu0 0.0
        %3653 = vmatpush1.msra.mxu0 0.0
        %3654 = vmatprep.mubr.f32.mxu0 0.0
        %3655 = vmatmul.mubr.f32.gmra.mrb[0].mxu0 %v3572
        %v3656 = vpop.f32.mrb[0].mxu0
        %v3657 = vadd.f32 %v3589, %v3656
        %v3658 = vpop.f32.mrb[0].mxu0
        %3659 = vdwg.mxu0
        %vm3660 = vcmask 73728
        %v3661 = vsel %vm3660, %v3657, -inf
        %3662 = vmax.xlane.f32.xlu0 %v3661
        %v3663 = vpop.xlane.xlu0 %3662
        %v3664 = vsub.f32 %v3657, %v3663
        %v3665 = vmul.f32 %v3664, 1.442695
        %v3666 = vpow.pop %v3665
        %v3667 = vsel %vm3660, %v3666, 0.0
        %3668 = vadd.xlane.f32.xlu0 %v3667
        %v3669 = vpop.xlane.xlu0 %3668
        %v3670 = vlog2.pop %v3669
        %v3671 = vmul.f32 %v3670, 0.6931472
        %v3672 = vadd.f32 %v3663, %v3671
        %v3673 = vsub.f32 %v3657, %v3672
        %3674 = vst.msk [vmem:[%s324] sm:$0x1] %vm3660, %v3673
        %s3675 = sand.u32 %s225, 1
        %s3676 = scalar_lea.sflag [#allocation3], %s3675
        %s3677 = sand.u32 %s225, 1
        %s3678 = scalar_lea.vmem [#allocation2], %s3677
        // Predicated region
        $region57: #{nn_classifier_forward.1} parent=55 // pred_check
          %p3679 = pneg %p235
        $region58: #{nn_classifier_forward.1} parent=55 // pred_check_branch
          %3681 = sbr.rel (%p3679) target = $region60
        $region59: #{nn_classifier_forward.1} parent=55 // pred_region
          %s3683 = ssub.s32 16, 16
          %3684 = vsyncadd %s3676, %s3683
          %s3685 = smul.addr %s23, 16
          %s3686 = scalar_lea.hbm %s9, %s3685
          %s3688 = sshll.u32 %s3678, 4
          %s3689 = int_to_ptr.vmem [resolvable:$true] %s3688
          %3691 = dma.vmem_to_hbm [thread:$0]  %s3689, 16, %s3686, %s3676
        $region60: #{nn_classifier_forward.1} parent=55 // pred_fallthru
          _
      $region56: #{nn_classifier_forward.1} parent=5 // pred_fallthru
        _
      %p3692 = scmp.le.s32.totalorder 2, %s18
      // Predicated region
      $region61: #{nn_classifier_forward.1} parent=5 // pred_check
        %p3693 = pneg %p3692
      $region62: #{nn_classifier_forward.1} parent=5 // pred_check_branch
        %3695 = sbr.rel (%p3693) target = $region64
      $region63: #{nn_classifier_forward.1} parent=5 // pred_region
        %s3696 = ssub.s32 %s18, 2
        // Predicated region
        $region65: #{nn_classifier_forward.1} parent=63 // pred_check
          %p3697 = pneg %p241
        $region66: #{nn_classifier_forward.1} parent=63 // pred_check_branch
          %3699 = sbr.rel (%p3697) target = $region68
        $region67: #{nn_classifier_forward.1} parent=63 // pred_region
          %s3700 = sand.u32 %s226, 1
          %s3701 = scalar_lea.sflag [#allocation3], %s3700
          %s3702 = sand.u32 %s226, 1
          %s3703 = scalar_lea.vmem [#allocation2], %s3702
          %3704 = dma.done %s3701, 16
        $region68: #{nn_classifier_forward.1} parent=63 // pred_fallthru
          _
      $region64: #{nn_classifier_forward.1} parent=5 // pred_fallthru
        _
    $region6: #{nn_classifier_forward.1} parent=1 // loop_footer
      %s22 = sadd.s32 1, %s18
    $region7: #{nn_classifier_forward.1} parent=1 // loop_footer_branch
      %17 = sbr.rel target = $region3
    $region8: #{nn_classifier_forward.1} parent=1 // loop_exit
      _
    %3705 = vsyncpa [#allocation3], 1
    %s3706 = scalar_lea.sflag [#allocation3], 1
    %3707 = vsyncpa %s3706, 1

</llo_original>
